<compile_context>
chip_gen: v7x
topology: tpu7x:2x2x1
jax: 0.10.0
libtpu: 0.0.40
codegen_flags: <defaults>
</compile_context>

<pallas_src>
import jax
import jax.numpy as jnp
from jax.experimental import pallas as pl
from jax.experimental.pallas import tpu as pltpu

# ----------------------------- model config ---------------------------------
HIDDEN = 128          # config.hidden_size
HEADS = 4             # config.num_attention_heads
HEAD_DIM = HIDDEN // HEADS
INTER = 256           # config.intermediate_size
PRD_LAYERS = 4        # config.num_hidden_layers (predecessor, unused at eval)
SCC_LAYERS = 2        # successor_layers (prd % scc == 0 -> compress_ratio 2)
VOCAB = 100
MAX_POS = 64
TYPE_VOCAB = 2
NUM_CLS = 8           # len(label2idx)
CLS_PAD = 128         # lane-dense classifier output width
LN_EPS = 1e-12        # BERT LayerNorm eps
MASK_BIAS = -1e9

BATCH = 2
SEQ = 16
BS = BATCH * SEQ      # batch folded into sublanes -> 32 rows
# NOTE: the single [128,128] block mask below relies on HEAD_DIM == BATCH*SEQ == 32.

# ------------- packed small-vector slab row layout (one DMA) ----------------
VEC_EMB_G = 0
VEC_EMB_B = 1
VEC_PER_LAYER = 6     # bo, ln1_g, ln1_b, bo2, ln2_g, ln2_b
VEC_CLS_B = 2 + SCC_LAYERS * VEC_PER_LAYER
VEC_ROWS = 16         # padded to a multiple of 8 sublanes


# ------------------------------ kernel helpers -------------------------------
def _layernorm(x, gamma, beta):
    mu = jnp.mean(x, axis=-1, keepdims=True)
    var = jnp.mean((x - mu) ** 2, axis=-1, keepdims=True)
    return (x - mu) * jax.lax.rsqrt(var + LN_EPS) * gamma + beta


def _gelu(x):
    # TODO(synk): HF BERT default act is erf-based gelu; tanh approximation used here.
    c = 0.7978845608028654  # sqrt(2/pi)
    return 0.5 * x * (1.0 + jnp.tanh(c * (x + 0.044715 * x * x * x)))


# ------------------------------- fused kernel --------------------------------
def theseus_fused_kernel(emb_ref, bias_ref, blk_ref, vecs_ref, bqkv_ref, bi_ref,
                         wqkv_ref, wo_ref, wi_ref, wo2_ref, cw_ref, o_ref):
    """Embeddings-LN -> SCC_LAYERS BertLayers -> classifier (batch folded into sublanes)."""
    x = emb_ref[...].astype(jnp.float32)          # [BS, H]
    bias = bias_ref[...]                          # [BS, HEADS*BS] per-head additive bias
    blk = blk_ref[...]                            # [128, 128] block-diagonal 0/1 mask
    vecs = vecs_ref[...]                          # [VEC_ROWS, 128] packed small params

    h = _layernorm(x, vecs[VEC_EMB_G:VEC_EMB_G + 1, :], vecs[VEC_EMB_B:VEC_EMB_B + 1, :])

    scale = 1.0 / (HEAD_DIM ** 0.5)
    for l in range(SCC_LAYERS):                   # static loop, weights VMEM-resident
        base = 2 + l * VEC_PER_LAYER
        bo    = vecs[base + 0: base + 1, :]
        ln1_g = vecs[base + 1: base + 2, :]
        ln1_b = vecs[base + 2: base + 3, :]
        bo2   = vecs[base + 3: base + 4, :]
        ln2_g = vecs[base + 4: base + 5, :]
        ln2_b = vecs[base + 5: base + 6, :]

        # Fused QKV projection: one [BS,H]@[H,3H] matmul + one bias add.
        qkv = jnp.dot(h.astype(jnp.bfloat16), wqkv_ref[l],
                      preferred_element_type=jnp.float32) + bqkv_ref[l]       # [BS, 3H]
        q = qkv[:, 0:HIDDEN] * scale               # scale folded in once per layer
        k = qkv[:, HIDDEN:2 * HIDDEN]
        v = qkv[:, 2 * HIDDEN:3 * HIDDEN]

        # Block-diagonal packed K / V: row = (head, key) packed index, col = hidden dim.
        kblk = jnp.concatenate([k] * HEADS, axis=0) * blk     # [HEADS*BS, H]
        vblk = jnp.concatenate([v] * HEADS, axis=0) * blk     # [HEADS*BS, H]

        # Lane-dense packed scores: s[i, head*BS + key] = q_head[i] . k_head[key]
        s = jax.lax.dot_general(q, kblk, (((1,), (1,)), ((), ())),
                                preferred_element_type=jnp.float32) + bias    # [BS, HEADS*BS]
        # Full-row max = per-head constant shift -> softmax unchanged, one XLU reduce.
        s = s - jnp.max(s, axis=-1, keepdims=True)
        p = jnp.exp(s)
        # Per-head denominators broadcast across each head's 32 lanes via the block mask.
        denom = jnp.dot(p, blk, preferred_element_type=jnp.float32)
        p = p * pl.reciprocal(denom, approx=True)
        # Packed context == standard multi-head context concatenated along lanes.
        ctx = jnp.dot(p, vblk, preferred_element_type=jnp.float32)            # [BS, H]

        attn = jnp.dot(ctx.astype(jnp.bfloat16), wo_ref[l],
                       preferred_element_type=jnp.float32) + bo
        h1 = _layernorm(attn + h, ln1_g, ln1_b)

        inter = _gelu(jnp.dot(h1.astype(jnp.bfloat16), wi_ref[l],
                              preferred_element_type=jnp.float32) + bi_ref[l])
        ffn = jnp.dot(inter.astype(jnp.bfloat16), wo2_ref[l],
                      preferred_element_type=jnp.float32) + bo2
        h = _layernorm(ffn + h1, ln2_g, ln2_b)

    # Dropout = identity at eval; classifier into a lane-dense [BS, CLS_PAD] slab.
    cls_b = vecs[VEC_CLS_B:VEC_CLS_B + 1, :]
    o_ref[...] = (jnp.dot(h.astype(jnp.bfloat16), cw_ref[...],
                          preferred_element_type=jnp.float32) + cls_b).astype(o_ref.dtype)


# ------------------------------ pallas wrapper --------------------------------
def _full_spec(shape):
    n = len(shape)
    return pl.BlockSpec(shape, lambda i, _n=n: (0,) * _n)


def theseus_fused(inputs):
    return pl.pallas_call(
        theseus_fused_kernel,
        out_shape=jax.ShapeDtypeStruct((BS, CLS_PAD), jnp.float32),
        grid=(1,),
        in_specs=[_full_spec(a.shape) for a in inputs],
        out_specs=_full_spec((BS, CLS_PAD)),
        compiler_params=pltpu.CompilerParams(dimension_semantics=("arbitrary",)),
    )(*inputs)


# ------------------------------ parameter init --------------------------------
def init_params(key):
    def nrm(k, shape, std=0.02):
        return jax.random.normal(k, shape, jnp.float32) * std

    keys = iter(jax.random.split(key, 32))
    L = SCC_LAYERS
    return {
        "word_emb": nrm(next(keys), (VOCAB, HIDDEN)),
        "pos_emb": nrm(next(keys), (MAX_POS, HIDDEN)),
        "type_emb": nrm(next(keys), (TYPE_VOCAB, HIDDEN)),
        "emb_ln_g": jnp.ones((1, HIDDEN), jnp.float32),
        "emb_ln_b": jnp.zeros((1, HIDDEN), jnp.float32),
        # successor (scc) layers, stacked along a leading layer axis
        "wq": nrm(next(keys), (L, HIDDEN, HIDDEN)), "bq": jnp.zeros((L, 1, HIDDEN), jnp.float32),
        "wk": nrm(next(keys), (L, HIDDEN, HIDDEN)), "bk": jnp.zeros((L, 1, HIDDEN), jnp.float32),
        "wv": nrm(next(keys), (L, HIDDEN, HIDDEN)), "bv": jnp.zeros((L, 1, HIDDEN), jnp.float32),
        "wo": nrm(next(keys), (L, HIDDEN, HIDDEN)), "bo": jnp.zeros((L, 1, HIDDEN), jnp.float32),
        "ln1_g": jnp.ones((L, 1, HIDDEN), jnp.float32), "ln1_b": jnp.zeros((L, 1, HIDDEN), jnp.float32),
        "wi": nrm(next(keys), (L, HIDDEN, INTER)), "bi": jnp.zeros((L, 1, INTER), jnp.float32),
        "wo2": nrm(next(keys), (L, INTER, HIDDEN)), "bo2": jnp.zeros((L, 1, HIDDEN), jnp.float32),
        "ln2_g": jnp.ones((L, 1, HIDDEN), jnp.float32), "ln2_b": jnp.zeros((L, 1, HIDDEN), jnp.float32),
        "cls_w": nrm(next(keys), (HIDDEN, NUM_CLS)),
        "cls_b": jnp.zeros((NUM_CLS,), jnp.float32),
    }


# ------------------------------ full forward ----------------------------------
def _attn_bias(attention_mask):
    """[B*S, B*S] additive bias: -1e9 for cross-batch pairs or masked-out keys, else 0."""
    B, S = attention_mask.shape
    batch_ids = jnp.arange(B * S, dtype=jnp.int32) // S
    same_batch = batch_ids[:, None] == batch_ids[None, :]
    key_valid = (attention_mask.reshape(B * S) != 0)[None, :]
    ok = jnp.logical_and(same_batch, key_valid)
    return jnp.where(ok, 0.0, MASK_BIAS).astype(jnp.float32)


@jax.jit
def theseus_forward(params, input_ids, token_type_ids, attention_mask):
    B, S = input_ids.shape
    # Embedding lookups (gathers) are glue in plain JAX; everything else is one fused kernel.
    emb = (jnp.take(params["word_emb"], input_ids, axis=0)
           + params["pos_emb"][None, :S, :]
           + jnp.take(params["type_emb"], token_type_ids, axis=0))
    emb = emb.reshape(B * S, HIDDEN)

    bias = _attn_bias(attention_mask)                        # [BS, BS]
    bias_packed = jnp.tile(bias, (1, HEADS))                 # [BS, HEADS*BS] heads along lanes

    # Block-diagonal 0/1 mask with 32x32 blocks (HEAD_DIM == BATCH*SEQ == 32).
    r = jnp.arange(HIDDEN, dtype=jnp.int32) // HEAD_DIM
    blk = (r[:, None] == r[None, :]).astype(jnp.float32)     # [128, 128]

    # Fused QKV weights/biases; large weights cast to bf16 (halves prologue DMA bytes).
    wqkv = jnp.concatenate([params["wq"], params["wk"], params["wv"]], axis=2).astype(jnp.bfloat16)
    bqkv = jnp.concatenate([params["bq"], params["bk"], params["bv"]], axis=2)   # [L,1,3H] f32

    # Lane-dense classifier weights (pad NUM_CLS=8 -> 128 columns with zeros).
    cls_w_pad = (jnp.zeros((HIDDEN, CLS_PAD), jnp.float32)
                 .at[:, :NUM_CLS].set(params["cls_w"]).astype(jnp.bfloat16))
    cls_b_pad = jnp.zeros((1, CLS_PAD), jnp.float32).at[0, :NUM_CLS].set(params["cls_b"])

    # Pack all (1,128)-wide vectors into a single slab -> one prologue DMA.
    rows = [params["emb_ln_g"], params["emb_ln_b"]]
    for l in range(SCC_LAYERS):
        rows += [params[k][l] for k in ("bo", "ln1_g", "ln1_b", "bo2", "ln2_g", "ln2_b")]
    rows.append(cls_b_pad)
    vecs = jnp.concatenate(rows, axis=0)                     # [15, 128]
    vecs = jnp.pad(vecs, ((0, VEC_ROWS - vecs.shape[0]), (0, 0)))

    inputs = [emb, bias_packed, blk, vecs, bqkv, params["bi"],
              wqkv,
              params["wo"].astype(jnp.bfloat16),
              params["wi"].astype(jnp.bfloat16),
              params["wo2"].astype(jnp.bfloat16),
              cls_w_pad]

    logits_pad = theseus_fused(inputs)                       # [B*S, CLS_PAD]
    return logits_pad[:, :NUM_CLS].reshape(B, S, NUM_CLS)


# ----------------------------------- main --------------------------------------
if __name__ == "__main__":
    key = jax.random.PRNGKey(0)
    pkey, ikey = jax.random.split(key)

    params = init_params(pkey)

    input_ids = jax.random.randint(ikey, (BATCH, SEQ), 0, VOCAB, dtype=jnp.int32)
    token_type_ids = jnp.concatenate(
        [jnp.zeros((BATCH, SEQ // 2), jnp.int32), jnp.ones((BATCH, SEQ // 2), jnp.int32)],
        axis=1)
    attention_mask = jnp.ones((BATCH, SEQ), jnp.int32)
    attention_mask = attention_mask.at[1, SEQ - 4:].set(0)   # pad out last 4 tokens of row 1

    logits = theseus_forward(params, input_ids, token_type_ids, attention_mask)
    logits = jax.block_until_ready(logits)
    assert logits.shape == (BATCH, SEQ, NUM_CLS) and logits.dtype == jnp.float32
    assert bool(jnp.all(jnp.isfinite(logits)))
    print("KERNEL_OK")
</pallas_src>

<mosaic_0001>
module attributes {stable_mosaic.version = 11 : i64} {
  func.func @theseus_fused_kernel(%arg0: i32, %arg1: memref<32x128xf32, #tpu.memory_space<vmem>>, %arg2: memref<32x128xf32, #tpu.memory_space<vmem>>, %arg3: memref<128x128xf32, #tpu.memory_space<vmem>>, %arg4: memref<16x128xf32, #tpu.memory_space<vmem>>, %arg5: memref<2x1x384xf32, #tpu.memory_space<vmem>>, %arg6: memref<2x1x256xf32, #tpu.memory_space<vmem>>, %arg7: memref<2x128x384xbf16, #tpu.memory_space<vmem>>, %arg8: memref<2x128x128xbf16, #tpu.memory_space<vmem>>, %arg9: memref<2x128x256xbf16, #tpu.memory_space<vmem>>, %arg10: memref<2x256x128xbf16, #tpu.memory_space<vmem>>, %arg11: memref<128x128xbf16, #tpu.memory_space<vmem>>, %arg12: memref<32x128xf32, #tpu.memory_space<vmem>>) attributes {dimension_semantics = [#tpu.dimension_semantics<arbitrary>], iteration_bounds = array<i64: 1>, scalar_prefetch = 0 : i64, scratch_operands = 0 : i64, tpu.core_type = #tpu.core_type<tc>, window_params = [{pipeline_mode = #tpu.pipeline_mode<synchronous>, transform_indices = @transform_0, window_bounds = array<i64: 32, 128>}, {pipeline_mode = #tpu.pipeline_mode<synchronous>, transform_indices = @transform_1, window_bounds = array<i64: 32, 128>}, {pipeline_mode = #tpu.pipeline_mode<synchronous>, transform_indices = @transform_2, window_bounds = array<i64: 128, 128>}, {pipeline_mode = #tpu.pipeline_mode<synchronous>, transform_indices = @transform_3, window_bounds = array<i64: 16, 128>}, {pipeline_mode = #tpu.pipeline_mode<synchronous>, transform_indices = @transform_4, window_bounds = array<i64: 2, 1, 384>}, {pipeline_mode = #tpu.pipeline_mode<synchronous>, transform_indices = @transform_5, window_bounds = array<i64: 2, 1, 256>}, {pipeline_mode = #tpu.pipeline_mode<synchronous>, transform_indices = @transform_6, window_bounds = array<i64: 2, 128, 384>}, {pipeline_mode = #tpu.pipeline_mode<synchronous>, transform_indices = @transform_7, window_bounds = array<i64: 2, 128, 128>}, {pipeline_mode = #tpu.pipeline_mode<synchronous>, transform_indices = @transform_8, window_bounds = array<i64: 2, 128, 256>}, {pipeline_mode = #tpu.pipeline_mode<synchronous>, transform_indices = @transform_9, window_bounds = array<i64: 2, 256, 128>}, {pipeline_mode = #tpu.pipeline_mode<synchronous>, transform_indices = @transform_10, window_bounds = array<i64: 128, 128>}, {pipeline_mode = #tpu.pipeline_mode<synchronous>, transform_indices = @transform_11, window_bounds = array<i64: 32, 128>}]} {
    %c0 = arith.constant 0 : index
    %c0_0 = arith.constant 0 : index
    %0 = vector.load %arg1[%c0, %c0_0] : memref<32x128xf32, #tpu.memory_space<vmem>>, vector<32x128xf32>
    %c0_1 = arith.constant 0 : index
    %c0_2 = arith.constant 0 : index
    %1 = vector.load %arg2[%c0_1, %c0_2] : memref<32x128xf32, #tpu.memory_space<vmem>>, vector<32x128xf32>
    %c0_3 = arith.constant 0 : index
    %c0_4 = arith.constant 0 : index
    %2 = vector.load %arg3[%c0_3, %c0_4] : memref<128x128xf32, #tpu.memory_space<vmem>>, vector<128x128xf32>
    %c0_5 = arith.constant 0 : index
    %c0_6 = arith.constant 0 : index
    %3 = vector.load %arg4[%c0_5, %c0_6] : memref<16x128xf32, #tpu.memory_space<vmem>>, vector<16x128xf32>
    %4 = vector.extract_strided_slice %3 {offsets = [0, 0], sizes = [1, 128], strides = [1, 1]} : vector<16x128xf32> to vector<1x128xf32>
    %5 = vector.extract_strided_slice %3 {offsets = [1, 0], sizes = [1, 128], strides = [1, 1]} : vector<16x128xf32> to vector<1x128xf32>
    %cst = arith.constant dense<0.000000e+00> : vector<32xf32>
    %6 = vector.multi_reduction <add>, %0, %cst [1] : vector<32x128xf32> to vector<32xf32>
    %7 = vector.shape_cast %6 : vector<32xf32> to vector<32x1xf32>
    %cst_7 = arith.constant 1.280000e+02 : f32
    %8 = vector.broadcast %cst_7 : f32 to vector<32x1xf32>
    %9 = arith.divf %7, %8 : vector<32x1xf32>
    %10 = vector.broadcast %9 : vector<32x1xf32> to vector<32x128xf32>
    %11 = arith.subf %0, %10 : vector<32x128xf32>
    %12 = arith.mulf %11, %11 : vector<32x128xf32>
    %cst_8 = arith.constant dense<0.000000e+00> : vector<32xf32>
    %13 = vector.multi_reduction <add>, %12, %cst_8 [1] : vector<32x128xf32> to vector<32xf32>
    %14 = vector.shape_cast %13 : vector<32xf32> to vector<32x1xf32>
    %cst_9 = arith.constant 1.280000e+02 : f32
    %15 = vector.broadcast %cst_9 : f32 to vector<32x1xf32>
    %16 = arith.divf %14, %15 : vector<32x1xf32>
    %17 = vector.broadcast %9 : vector<32x1xf32> to vector<32x128xf32>
    %18 = arith.subf %0, %17 : vector<32x128xf32>
    %cst_10 = arith.constant 9.99999996E-13 : f32
    %19 = vector.broadcast %cst_10 : f32 to vector<32x1xf32>
    %20 = arith.addf %16, %19 : vector<32x1xf32>
    %21 = math.rsqrt %20 : vector<32x1xf32>
    %22 = vector.broadcast %21 : vector<32x1xf32> to vector<32x128xf32>
    %23 = arith.mulf %18, %22 : vector<32x128xf32>
    %24 = vector.broadcast %4 : vector<1x128xf32> to vector<32x128xf32>
    %25 = arith.mulf %23, %24 : vector<32x128xf32>
    %26 = vector.broadcast %5 : vector<1x128xf32> to vector<32x128xf32>
    %27 = arith.addf %25, %26 : vector<32x128xf32>
    %28 = vector.extract_strided_slice %3 {offsets = [2, 0], sizes = [1, 128], strides = [1, 1]} : vector<16x128xf32> to vector<1x128xf32>
    %29 = vector.extract_strided_slice %3 {offsets = [3, 0], sizes = [1, 128], strides = [1, 1]} : vector<16x128xf32> to vector<1x128xf32>
    %30 = vector.extract_strided_slice %3 {offsets = [4, 0], sizes = [1, 128], strides = [1, 1]} : vector<16x128xf32> to vector<1x128xf32>
    %31 = vector.extract_strided_slice %3 {offsets = [5, 0], sizes = [1, 128], strides = [1, 1]} : vector<16x128xf32> to vector<1x128xf32>
    %32 = vector.extract_strided_slice %3 {offsets = [6, 0], sizes = [1, 128], strides = [1, 1]} : vector<16x128xf32> to vector<1x128xf32>
    %33 = vector.extract_strided_slice %3 {offsets = [7, 0], sizes = [1, 128], strides = [1, 1]} : vector<16x128xf32> to vector<1x128xf32>
    %34 = arith.truncf %27 : vector<32x128xf32> to vector<32x128xbf16>
    %c0_11 = arith.constant 0 : index
    %c0_12 = arith.constant 0 : index
    %c0_13 = arith.constant 0 : index
    %35 = vector.load %arg7[%c0_11, %c0_12, %c0_13] : memref<2x128x384xbf16, #tpu.memory_space<vmem>>, vector<1x128x384xbf16>
    %36 = vector.shape_cast %35 : vector<1x128x384xbf16> to vector<128x384xbf16>
    %cst_14 = arith.constant dense<0.000000e+00> : vector<32x384xf32>
    %37 = tpu.matmul %34, %36, %cst_14 {dimension_numbers = #tpu.dot_dimension_numbers<[1], [0], [0], [1], [0, 0, 1, 1], [], []>} : vector<32x128xbf16>, vector<128x384xbf16>, vector<32x384xf32> -> vector<32x384xf32>
    %c0_15 = arith.constant 0 : index
    %c0_16 = arith.constant 0 : index
    %c0_17 = arith.constant 0 : index
    %38 = vector.load %arg5[%c0_15, %c0_16, %c0_17] : memref<2x1x384xf32, #tpu.memory_space<vmem>>, vector<1x1x384xf32>
    %39 = vector.shape_cast %38 : vector<1x1x384xf32> to vector<1x384xf32>
    %40 = vector.broadcast %39 : vector<1x384xf32> to vector<32x384xf32>
    %41 = arith.addf %37, %40 : vector<32x384xf32>
    %42 = vector.extract_strided_slice %41 {offsets = [0, 0], sizes = [32, 128], strides = [1, 1]} : vector<32x384xf32> to vector<32x128xf32>
    %cst_18 = arith.constant 0.176776692 : f32
    %43 = vector.broadcast %cst_18 : f32 to vector<32x128xf32>
    %44 = arith.mulf %42, %43 : vector<32x128xf32>
    %45 = vector.extract_strided_slice %41 {offsets = [0, 128], sizes = [32, 128], strides = [1, 1]} : vector<32x384xf32> to vector<32x128xf32>
    %46 = vector.extract_strided_slice %41 {offsets = [0, 256], sizes = [32, 128], strides = [1, 1]} : vector<32x384xf32> to vector<32x128xf32>
    %47 = tpu.concatenate %45, %45, %45, %45 in 0 : vector<32x128xf32>, vector<32x128xf32>, vector<32x128xf32>, vector<32x128xf32> -> vector<128x128xf32>
    %48 = arith.mulf %47, %2 : vector<128x128xf32>
    %49 = tpu.concatenate %46, %46, %46, %46 in 0 : vector<32x128xf32>, vector<32x128xf32>, vector<32x128xf32>, vector<32x128xf32> -> vector<128x128xf32>
    %50 = arith.mulf %49, %2 : vector<128x128xf32>
    %cst_19 = arith.constant dense<0.000000e+00> : vector<32x128xf32>
    %51 = tpu.matmul %44, %48, %cst_19 {dimension_numbers = #tpu.dot_dimension_numbers<[1], [1], [0], [0], [0, 0, 1, 0], [], []>} : vector<32x128xf32>, vector<128x128xf32>, vector<32x128xf32> -> vector<32x128xf32>
    %52 = arith.addf %51, %1 : vector<32x128xf32>
    %cst_20 = arith.constant dense<0xFF800000> : vector<32xf32>
    %53 = vector.multi_reduction <maximumf>, %52, %cst_20 [1] : vector<32x128xf32> to vector<32xf32>
    %54 = vector.shape_cast %53 : vector<32xf32> to vector<32x1xf32>
    %55 = vector.broadcast %54 : vector<32x1xf32> to vector<32x128xf32>
    %56 = arith.subf %52, %55 : vector<32x128xf32>
    %57 = math.exp %56 : vector<32x128xf32>
    %cst_21 = arith.constant dense<0.000000e+00> : vector<32x128xf32>
    %58 = tpu.matmul %57, %2, %cst_21 {dimension_numbers = #tpu.dot_dimension_numbers<[1], [0], [0], [1], [0, 0, 1, 1], [], []>} : vector<32x128xf32>, vector<128x128xf32>, vector<32x128xf32> -> vector<32x128xf32>
    %59 = tpu.reciprocal %58 {approx = true} : vector<32x128xf32> -> vector<32x128xf32>
    %60 = arith.mulf %57, %59 : vector<32x128xf32>
    %cst_22 = arith.constant dense<0.000000e+00> : vector<32x128xf32>
    %61 = tpu.matmul %60, %50, %cst_22 {dimension_numbers = #tpu.dot_dimension_numbers<[1], [0], [0], [1], [0, 0, 1, 1], [], []>} : vector<32x128xf32>, vector<128x128xf32>, vector<32x128xf32> -> vector<32x128xf32>
    %62 = arith.truncf %61 : vector<32x128xf32> to vector<32x128xbf16>
    %c0_23 = arith.constant 0 : index
    %c0_24 = arith.constant 0 : index
    %c0_25 = arith.constant 0 : index
    %63 = vector.load %arg8[%c0_23, %c0_24, %c0_25] : memref<2x128x128xbf16, #tpu.memory_space<vmem>>, vector<1x128x128xbf16>
    %64 = vector.shape_cast %63 : vector<1x128x128xbf16> to vector<128x128xbf16>
    %cst_26 = arith.constant dense<0.000000e+00> : vector<32x128xf32>
    %65 = tpu.matmul %62, %64, %cst_26 {dimension_numbers = #tpu.dot_dimension_numbers<[1], [0], [0], [1], [0, 0, 1, 1], [], []>} : vector<32x128xbf16>, vector<128x128xbf16>, vector<32x128xf32> -> vector<32x128xf32>
    %66 = vector.broadcast %28 : vector<1x128xf32> to vector<32x128xf32>
    %67 = arith.addf %65, %66 : vector<32x128xf32>
    %68 = arith.addf %67, %27 : vector<32x128xf32>
    %cst_27 = arith.constant dense<0.000000e+00> : vector<32xf32>
    %69 = vector.multi_reduction <add>, %68, %cst_27 [1] : vector<32x128xf32> to vector<32xf32>
    %70 = vector.shape_cast %69 : vector<32xf32> to vector<32x1xf32>
    %cst_28 = arith.constant 1.280000e+02 : f32
    %71 = vector.broadcast %cst_28 : f32 to vector<32x1xf32>
    %72 = arith.divf %70, %71 : vector<32x1xf32>
    %73 = vector.broadcast %72 : vector<32x1xf32> to vector<32x128xf32>
    %74 = arith.subf %68, %73 : vector<32x128xf32>
    %75 = arith.mulf %74, %74 : vector<32x128xf32>
    %cst_29 = arith.constant dense<0.000000e+00> : vector<32xf32>
    %76 = vector.multi_reduction <add>, %75, %cst_29 [1] : vector<32x128xf32> to vector<32xf32>
    %77 = vector.shape_cast %76 : vector<32xf32> to vector<32x1xf32>
    %cst_30 = arith.constant 1.280000e+02 : f32
    %78 = vector.broadcast %cst_30 : f32 to vector<32x1xf32>
    %79 = arith.divf %77, %78 : vector<32x1xf32>
    %80 = vector.broadcast %72 : vector<32x1xf32> to vector<32x128xf32>
    %81 = arith.subf %68, %80 : vector<32x128xf32>
    %cst_31 = arith.constant 9.99999996E-13 : f32
    %82 = vector.broadcast %cst_31 : f32 to vector<32x1xf32>
    %83 = arith.addf %79, %82 : vector<32x1xf32>
    %84 = math.rsqrt %83 : vector<32x1xf32>
    %85 = vector.broadcast %84 : vector<32x1xf32> to vector<32x128xf32>
    %86 = arith.mulf %81, %85 : vector<32x128xf32>
    %87 = vector.broadcast %29 : vector<1x128xf32> to vector<32x128xf32>
    %88 = arith.mulf %86, %87 : vector<32x128xf32>
    %89 = vector.broadcast %30 : vector<1x128xf32> to vector<32x128xf32>
    %90 = arith.addf %88, %89 : vector<32x128xf32>
    %91 = arith.truncf %90 : vector<32x128xf32> to vector<32x128xbf16>
    %c0_32 = arith.constant 0 : index
    %c0_33 = arith.constant 0 : index
    %c0_34 = arith.constant 0 : index
    %92 = vector.load %arg9[%c0_32, %c0_33, %c0_34] : memref<2x128x256xbf16, #tpu.memory_space<vmem>>, vector<1x128x256xbf16>
    %93 = vector.shape_cast %92 : vector<1x128x256xbf16> to vector<128x256xbf16>
    %cst_35 = arith.constant dense<0.000000e+00> : vector<32x256xf32>
    %94 = tpu.matmul %91, %93, %cst_35 {dimension_numbers = #tpu.dot_dimension_numbers<[1], [0], [0], [1], [0, 0, 1, 1], [], []>} : vector<32x128xbf16>, vector<128x256xbf16>, vector<32x256xf32> -> vector<32x256xf32>
    %c0_36 = arith.constant 0 : index
    %c0_37 = arith.constant 0 : index
    %c0_38 = arith.constant 0 : index
    %95 = vector.load %arg6[%c0_36, %c0_37, %c0_38] : memref<2x1x256xf32, #tpu.memory_space<vmem>>, vector<1x1x256xf32>
    %96 = vector.shape_cast %95 : vector<1x1x256xf32> to vector<1x256xf32>
    %97 = vector.broadcast %96 : vector<1x256xf32> to vector<32x256xf32>
    %98 = arith.addf %94, %97 : vector<32x256xf32>
    %cst_39 = arith.constant 5.000000e-01 : f32
    %99 = vector.broadcast %cst_39 : f32 to vector<32x256xf32>
    %100 = arith.mulf %99, %98 : vector<32x256xf32>
    %cst_40 = arith.constant 4.471500e-02 : f32
    %101 = vector.broadcast %cst_40 : f32 to vector<32x256xf32>
    %102 = arith.mulf %101, %98 : vector<32x256xf32>
    %103 = arith.mulf %102, %98 : vector<32x256xf32>
    %104 = arith.mulf %103, %98 : vector<32x256xf32>
    %105 = arith.addf %98, %104 : vector<32x256xf32>
    %cst_41 = arith.constant 0.797884583 : f32
    %106 = vector.broadcast %cst_41 : f32 to vector<32x256xf32>
    %107 = arith.mulf %106, %105 : vector<32x256xf32>
    %108 = math.tanh %107 : vector<32x256xf32>
    %cst_42 = arith.constant 1.000000e+00 : f32
    %109 = vector.broadcast %cst_42 : f32 to vector<32x256xf32>
    %110 = arith.addf %109, %108 : vector<32x256xf32>
    %111 = arith.mulf %100, %110 : vector<32x256xf32>
    %112 = arith.truncf %111 : vector<32x256xf32> to vector<32x256xbf16>
    %c0_43 = arith.constant 0 : index
    %c0_44 = arith.constant 0 : index
    %c0_45 = arith.constant 0 : index
    %113 = vector.load %arg10[%c0_43, %c0_44, %c0_45] : memref<2x256x128xbf16, #tpu.memory_space<vmem>>, vector<1x256x128xbf16>
    %114 = vector.shape_cast %113 : vector<1x256x128xbf16> to vector<256x128xbf16>
    %cst_46 = arith.constant dense<0.000000e+00> : vector<32x128xf32>
    %115 = tpu.matmul %112, %114, %cst_46 {dimension_numbers = #tpu.dot_dimension_numbers<[1], [0], [0], [1], [0, 0, 1, 1], [], []>} : vector<32x256xbf16>, vector<256x128xbf16>, vector<32x128xf32> -> vector<32x128xf32>
    %116 = vector.broadcast %31 : vector<1x128xf32> to vector<32x128xf32>
    %117 = arith.addf %115, %116 : vector<32x128xf32>
    %118 = arith.addf %117, %90 : vector<32x128xf32>
    %cst_47 = arith.constant dense<0.000000e+00> : vector<32xf32>
    %119 = vector.multi_reduction <add>, %118, %cst_47 [1] : vector<32x128xf32> to vector<32xf32>
    %120 = vector.shape_cast %119 : vector<32xf32> to vector<32x1xf32>
    %cst_48 = arith.constant 1.280000e+02 : f32
    %121 = vector.broadcast %cst_48 : f32 to vector<32x1xf32>
    %122 = arith.divf %120, %121 : vector<32x1xf32>
    %123 = vector.broadcast %122 : vector<32x1xf32> to vector<32x128xf32>
    %124 = arith.subf %118, %123 : vector<32x128xf32>
    %125 = arith.mulf %124, %124 : vector<32x128xf32>
    %cst_49 = arith.constant dense<0.000000e+00> : vector<32xf32>
    %126 = vector.multi_reduction <add>, %125, %cst_49 [1] : vector<32x128xf32> to vector<32xf32>
    %127 = vector.shape_cast %126 : vector<32xf32> to vector<32x1xf32>
    %cst_50 = arith.constant 1.280000e+02 : f32
    %128 = vector.broadcast %cst_50 : f32 to vector<32x1xf32>
    %129 = arith.divf %127, %128 : vector<32x1xf32>
    %130 = vector.broadcast %122 : vector<32x1xf32> to vector<32x128xf32>
    %131 = arith.subf %118, %130 : vector<32x128xf32>
    %cst_51 = arith.constant 9.99999996E-13 : f32
    %132 = vector.broadcast %cst_51 : f32 to vector<32x1xf32>
    %133 = arith.addf %129, %132 : vector<32x1xf32>
    %134 = math.rsqrt %133 : vector<32x1xf32>
    %135 = vector.broadcast %134 : vector<32x1xf32> to vector<32x128xf32>
    %136 = arith.mulf %131, %135 : vector<32x128xf32>
    %137 = vector.broadcast %32 : vector<1x128xf32> to vector<32x128xf32>
    %138 = arith.mulf %136, %137 : vector<32x128xf32>
    %139 = vector.broadcast %33 : vector<1x128xf32> to vector<32x128xf32>
    %140 = arith.addf %138, %139 : vector<32x128xf32>
    %141 = vector.extract_strided_slice %3 {offsets = [8, 0], sizes = [1, 128], strides = [1, 1]} : vector<16x128xf32> to vector<1x128xf32>
    %142 = vector.extract_strided_slice %3 {offsets = [9, 0], sizes = [1, 128], strides = [1, 1]} : vector<16x128xf32> to vector<1x128xf32>
    %143 = vector.extract_strided_slice %3 {offsets = [10, 0], sizes = [1, 128], strides = [1, 1]} : vector<16x128xf32> to vector<1x128xf32>
    %144 = vector.extract_strided_slice %3 {offsets = [11, 0], sizes = [1, 128], strides = [1, 1]} : vector<16x128xf32> to vector<1x128xf32>
    %145 = vector.extract_strided_slice %3 {offsets = [12, 0], sizes = [1, 128], strides = [1, 1]} : vector<16x128xf32> to vector<1x128xf32>
    %146 = vector.extract_strided_slice %3 {offsets = [13, 0], sizes = [1, 128], strides = [1, 1]} : vector<16x128xf32> to vector<1x128xf32>
    %147 = arith.truncf %140 : vector<32x128xf32> to vector<32x128xbf16>
    %c1 = arith.constant 1 : index
    %c0_52 = arith.constant 0 : index
    %c0_53 = arith.constant 0 : index
    %148 = vector.load %arg7[%c1, %c0_52, %c0_53] : memref<2x128x384xbf16, #tpu.memory_space<vmem>>, vector<1x128x384xbf16>
    %149 = vector.shape_cast %148 : vector<1x128x384xbf16> to vector<128x384xbf16>
    %cst_54 = arith.constant dense<0.000000e+00> : vector<32x384xf32>
    %150 = tpu.matmul %147, %149, %cst_54 {dimension_numbers = #tpu.dot_dimension_numbers<[1], [0], [0], [1], [0, 0, 1, 1], [], []>} : vector<32x128xbf16>, vector<128x384xbf16>, vector<32x384xf32> -> vector<32x384xf32>
    %c1_55 = arith.constant 1 : index
    %c0_56 = arith.constant 0 : index
    %c0_57 = arith.constant 0 : index
    %151 = vector.load %arg5[%c1_55, %c0_56, %c0_57] : memref<2x1x384xf32, #tpu.memory_space<vmem>>, vector<1x1x384xf32>
    %152 = vector.shape_cast %151 : vector<1x1x384xf32> to vector<1x384xf32>
    %153 = vector.broadcast %152 : vector<1x384xf32> to vector<32x384xf32>
    %154 = arith.addf %150, %153 : vector<32x384xf32>
    %155 = vector.extract_strided_slice %154 {offsets = [0, 0], sizes = [32, 128], strides = [1, 1]} : vector<32x384xf32> to vector<32x128xf32>
    %cst_58 = arith.constant 0.176776692 : f32
    %156 = vector.broadcast %cst_58 : f32 to vector<32x128xf32>
    %157 = arith.mulf %155, %156 : vector<32x128xf32>
    %158 = vector.extract_strided_slice %154 {offsets = [0, 128], sizes = [32, 128], strides = [1, 1]} : vector<32x384xf32> to vector<32x128xf32>
    %159 = vector.extract_strided_slice %154 {offsets = [0, 256], sizes = [32, 128], strides = [1, 1]} : vector<32x384xf32> to vector<32x128xf32>
    %160 = tpu.concatenate %158, %158, %158, %158 in 0 : vector<32x128xf32>, vector<32x128xf32>, vector<32x128xf32>, vector<32x128xf32> -> vector<128x128xf32>
    %161 = arith.mulf %160, %2 : vector<128x128xf32>
    %162 = tpu.concatenate %159, %159, %159, %159 in 0 : vector<32x128xf32>, vector<32x128xf32>, vector<32x128xf32>, vector<32x128xf32> -> vector<128x128xf32>
    %163 = arith.mulf %162, %2 : vector<128x128xf32>
    %cst_59 = arith.constant dense<0.000000e+00> : vector<32x128xf32>
    %164 = tpu.matmul %157, %161, %cst_59 {dimension_numbers = #tpu.dot_dimension_numbers<[1], [1], [0], [0], [0, 0, 1, 0], [], []>} : vector<32x128xf32>, vector<128x128xf32>, vector<32x128xf32> -> vector<32x128xf32>
    %165 = arith.addf %164, %1 : vector<32x128xf32>
    %cst_60 = arith.constant dense<0xFF800000> : vector<32xf32>
    %166 = vector.multi_reduction <maximumf>, %165, %cst_60 [1] : vector<32x128xf32> to vector<32xf32>
    %167 = vector.shape_cast %166 : vector<32xf32> to vector<32x1xf32>
    %168 = vector.broadcast %167 : vector<32x1xf32> to vector<32x128xf32>
    %169 = arith.subf %165, %168 : vector<32x128xf32>
    %170 = math.exp %169 : vector<32x128xf32>
    %cst_61 = arith.constant dense<0.000000e+00> : vector<32x128xf32>
    %171 = tpu.matmul %170, %2, %cst_61 {dimension_numbers = #tpu.dot_dimension_numbers<[1], [0], [0], [1], [0, 0, 1, 1], [], []>} : vector<32x128xf32>, vector<128x128xf32>, vector<32x128xf32> -> vector<32x128xf32>
    %172 = tpu.reciprocal %171 {approx = true} : vector<32x128xf32> -> vector<32x128xf32>
    %173 = arith.mulf %170, %172 : vector<32x128xf32>
    %cst_62 = arith.constant dense<0.000000e+00> : vector<32x128xf32>
    %174 = tpu.matmul %173, %163, %cst_62 {dimension_numbers = #tpu.dot_dimension_numbers<[1], [0], [0], [1], [0, 0, 1, 1], [], []>} : vector<32x128xf32>, vector<128x128xf32>, vector<32x128xf32> -> vector<32x128xf32>
    %175 = arith.truncf %174 : vector<32x128xf32> to vector<32x128xbf16>
    %c1_63 = arith.constant 1 : index
    %c0_64 = arith.constant 0 : index
    %c0_65 = arith.constant 0 : index
    %176 = vector.load %arg8[%c1_63, %c0_64, %c0_65] : memref<2x128x128xbf16, #tpu.memory_space<vmem>>, vector<1x128x128xbf16>
    %177 = vector.shape_cast %176 : vector<1x128x128xbf16> to vector<128x128xbf16>
    %cst_66 = arith.constant dense<0.000000e+00> : vector<32x128xf32>
    %178 = tpu.matmul %175, %177, %cst_66 {dimension_numbers = #tpu.dot_dimension_numbers<[1], [0], [0], [1], [0, 0, 1, 1], [], []>} : vector<32x128xbf16>, vector<128x128xbf16>, vector<32x128xf32> -> vector<32x128xf32>
    %179 = vector.broadcast %141 : vector<1x128xf32> to vector<32x128xf32>
    %180 = arith.addf %178, %179 : vector<32x128xf32>
    %181 = arith.addf %180, %140 : vector<32x128xf32>
    %cst_67 = arith.constant dense<0.000000e+00> : vector<32xf32>
    %182 = vector.multi_reduction <add>, %181, %cst_67 [1] : vector<32x128xf32> to vector<32xf32>
    %183 = vector.shape_cast %182 : vector<32xf32> to vector<32x1xf32>
    %cst_68 = arith.constant 1.280000e+02 : f32
    %184 = vector.broadcast %cst_68 : f32 to vector<32x1xf32>
    %185 = arith.divf %183, %184 : vector<32x1xf32>
    %186 = vector.broadcast %185 : vector<32x1xf32> to vector<32x128xf32>
    %187 = arith.subf %181, %186 : vector<32x128xf32>
    %188 = arith.mulf %187, %187 : vector<32x128xf32>
    %cst_69 = arith.constant dense<0.000000e+00> : vector<32xf32>
    %189 = vector.multi_reduction <add>, %188, %cst_69 [1] : vector<32x128xf32> to vector<32xf32>
    %190 = vector.shape_cast %189 : vector<32xf32> to vector<32x1xf32>
    %cst_70 = arith.constant 1.280000e+02 : f32
    %191 = vector.broadcast %cst_70 : f32 to vector<32x1xf32>
    %192 = arith.divf %190, %191 : vector<32x1xf32>
    %193 = vector.broadcast %185 : vector<32x1xf32> to vector<32x128xf32>
    %194 = arith.subf %181, %193 : vector<32x128xf32>
    %cst_71 = arith.constant 9.99999996E-13 : f32
    %195 = vector.broadcast %cst_71 : f32 to vector<32x1xf32>
    %196 = arith.addf %192, %195 : vector<32x1xf32>
    %197 = math.rsqrt %196 : vector<32x1xf32>
    %198 = vector.broadcast %197 : vector<32x1xf32> to vector<32x128xf32>
    %199 = arith.mulf %194, %198 : vector<32x128xf32>
    %200 = vector.broadcast %142 : vector<1x128xf32> to vector<32x128xf32>
    %201 = arith.mulf %199, %200 : vector<32x128xf32>
    %202 = vector.broadcast %143 : vector<1x128xf32> to vector<32x128xf32>
    %203 = arith.addf %201, %202 : vector<32x128xf32>
    %204 = arith.truncf %203 : vector<32x128xf32> to vector<32x128xbf16>
    %c1_72 = arith.constant 1 : index
    %c0_73 = arith.constant 0 : index
    %c0_74 = arith.constant 0 : index
    %205 = vector.load %arg9[%c1_72, %c0_73, %c0_74] : memref<2x128x256xbf16, #tpu.memory_space<vmem>>, vector<1x128x256xbf16>
    %206 = vector.shape_cast %205 : vector<1x128x256xbf16> to vector<128x256xbf16>
    %cst_75 = arith.constant dense<0.000000e+00> : vector<32x256xf32>
    %207 = tpu.matmul %204, %206, %cst_75 {dimension_numbers = #tpu.dot_dimension_numbers<[1], [0], [0], [1], [0, 0, 1, 1], [], []>} : vector<32x128xbf16>, vector<128x256xbf16>, vector<32x256xf32> -> vector<32x256xf32>
    %c1_76 = arith.constant 1 : index
    %c0_77 = arith.constant 0 : index
    %c0_78 = arith.constant 0 : index
    %208 = vector.load %arg6[%c1_76, %c0_77, %c0_78] : memref<2x1x256xf32, #tpu.memory_space<vmem>>, vector<1x1x256xf32>
    %209 = vector.shape_cast %208 : vector<1x1x256xf32> to vector<1x256xf32>
    %210 = vector.broadcast %209 : vector<1x256xf32> to vector<32x256xf32>
    %211 = arith.addf %207, %210 : vector<32x256xf32>
    %cst_79 = arith.constant 5.000000e-01 : f32
    %212 = vector.broadcast %cst_79 : f32 to vector<32x256xf32>
    %213 = arith.mulf %212, %211 : vector<32x256xf32>
    %cst_80 = arith.constant 4.471500e-02 : f32
    %214 = vector.broadcast %cst_80 : f32 to vector<32x256xf32>
    %215 = arith.mulf %214, %211 : vector<32x256xf32>
    %216 = arith.mulf %215, %211 : vector<32x256xf32>
    %217 = arith.mulf %216, %211 : vector<32x256xf32>
    %218 = arith.addf %211, %217 : vector<32x256xf32>
    %cst_81 = arith.constant 0.797884583 : f32
    %219 = vector.broadcast %cst_81 : f32 to vector<32x256xf32>
    %220 = arith.mulf %219, %218 : vector<32x256xf32>
    %221 = math.tanh %220 : vector<32x256xf32>
    %cst_82 = arith.constant 1.000000e+00 : f32
    %222 = vector.broadcast %cst_82 : f32 to vector<32x256xf32>
    %223 = arith.addf %222, %221 : vector<32x256xf32>
    %224 = arith.mulf %213, %223 : vector<32x256xf32>
    %225 = arith.truncf %224 : vector<32x256xf32> to vector<32x256xbf16>
    %c1_83 = arith.constant 1 : index
    %c0_84 = arith.constant 0 : index
    %c0_85 = arith.constant 0 : index
    %226 = vector.load %arg10[%c1_83, %c0_84, %c0_85] : memref<2x256x128xbf16, #tpu.memory_space<vmem>>, vector<1x256x128xbf16>
    %227 = vector.shape_cast %226 : vector<1x256x128xbf16> to vector<256x128xbf16>
    %cst_86 = arith.constant dense<0.000000e+00> : vector<32x128xf32>
    %228 = tpu.matmul %225, %227, %cst_86 {dimension_numbers = #tpu.dot_dimension_numbers<[1], [0], [0], [1], [0, 0, 1, 1], [], []>} : vector<32x256xbf16>, vector<256x128xbf16>, vector<32x128xf32> -> vector<32x128xf32>
    %229 = vector.broadcast %144 : vector<1x128xf32> to vector<32x128xf32>
    %230 = arith.addf %228, %229 : vector<32x128xf32>
    %231 = arith.addf %230, %203 : vector<32x128xf32>
    %cst_87 = arith.constant dense<0.000000e+00> : vector<32xf32>
    %232 = vector.multi_reduction <add>, %231, %cst_87 [1] : vector<32x128xf32> to vector<32xf32>
    %233 = vector.shape_cast %232 : vector<32xf32> to vector<32x1xf32>
    %cst_88 = arith.constant 1.280000e+02 : f32
    %234 = vector.broadcast %cst_88 : f32 to vector<32x1xf32>
    %235 = arith.divf %233, %234 : vector<32x1xf32>
    %236 = vector.broadcast %235 : vector<32x1xf32> to vector<32x128xf32>
    %237 = arith.subf %231, %236 : vector<32x128xf32>
    %238 = arith.mulf %237, %237 : vector<32x128xf32>
    %cst_89 = arith.constant dense<0.000000e+00> : vector<32xf32>
    %239 = vector.multi_reduction <add>, %238, %cst_89 [1] : vector<32x128xf32> to vector<32xf32>
    %240 = vector.shape_cast %239 : vector<32xf32> to vector<32x1xf32>
    %cst_90 = arith.constant 1.280000e+02 : f32
    %241 = vector.broadcast %cst_90 : f32 to vector<32x1xf32>
    %242 = arith.divf %240, %241 : vector<32x1xf32>
    %243 = vector.broadcast %235 : vector<32x1xf32> to vector<32x128xf32>
    %244 = arith.subf %231, %243 : vector<32x128xf32>
    %cst_91 = arith.constant 9.99999996E-13 : f32
    %245 = vector.broadcast %cst_91 : f32 to vector<32x1xf32>
    %246 = arith.addf %242, %245 : vector<32x1xf32>
    %247 = math.rsqrt %246 : vector<32x1xf32>
    %248 = vector.broadcast %247 : vector<32x1xf32> to vector<32x128xf32>
    %249 = arith.mulf %244, %248 : vector<32x128xf32>
    %250 = vector.broadcast %145 : vector<1x128xf32> to vector<32x128xf32>
    %251 = arith.mulf %249, %250 : vector<32x128xf32>
    %252 = vector.broadcast %146 : vector<1x128xf32> to vector<32x128xf32>
    %253 = arith.addf %251, %252 : vector<32x128xf32>
    %254 = vector.extract_strided_slice %3 {offsets = [14, 0], sizes = [1, 128], strides = [1, 1]} : vector<16x128xf32> to vector<1x128xf32>
    %255 = arith.truncf %253 : vector<32x128xf32> to vector<32x128xbf16>
    %c0_92 = arith.constant 0 : index
    %c0_93 = arith.constant 0 : index
    %256 = vector.load %arg11[%c0_92, %c0_93] : memref<128x128xbf16, #tpu.memory_space<vmem>>, vector<128x128xbf16>
    %cst_94 = arith.constant dense<0.000000e+00> : vector<32x128xf32>
    %257 = tpu.matmul %255, %256, %cst_94 {dimension_numbers = #tpu.dot_dimension_numbers<[1], [0], [0], [1], [0, 0, 1, 1], [], []>} : vector<32x128xbf16>, vector<128x128xbf16>, vector<32x128xf32> -> vector<32x128xf32>
    %258 = vector.broadcast %254 : vector<1x128xf32> to vector<32x128xf32>
    %259 = arith.addf %257, %258 : vector<32x128xf32>
    %c0_95 = arith.constant 0 : index
    %c0_96 = arith.constant 0 : index
    %260 = vector.load %arg12[%c0_95, %c0_96] : memref<32x128xf32, #tpu.memory_space<vmem>>, vector<32x128xf32>
    tpu.vector_store %arg12[%c0_95, %c0_96], %259 {strides = array<i32>} : memref<32x128xf32, #tpu.memory_space<vmem>>, vector<32x128xf32>,
    return
  }
  func.func @transform_0(%arg0: i32) -> (i32, i32) {
    %c0_i32 = arith.constant 0 : i32
    %c0_i32_0 = arith.constant 0 : i32
    %c0_i32_1 = arith.constant 0 : i32
    return %c0_i32, %c0_i32_0 : i32, i32
  }
  func.func @transform_1(%arg0: i32) -> (i32, i32) {
    %c0_i32 = arith.constant 0 : i32
    %c0_i32_0 = arith.constant 0 : i32
    %c0_i32_1 = arith.constant 0 : i32
    return %c0_i32, %c0_i32_0 : i32, i32
  }
  func.func @transform_2(%arg0: i32) -> (i32, i32) {
    %c0_i32 = arith.constant 0 : i32
    %c0_i32_0 = arith.constant 0 : i32
    %c0_i32_1 = arith.constant 0 : i32
    return %c0_i32, %c0_i32_0 : i32, i32
  }
  func.func @transform_3(%arg0: i32) -> (i32, i32) {
    %c0_i32 = arith.constant 0 : i32
    %c0_i32_0 = arith.constant 0 : i32
    %c0_i32_1 = arith.constant 0 : i32
    return %c0_i32, %c0_i32_0 : i32, i32
  }
  func.func @transform_4(%arg0: i32) -> (i32, i32, i32) {
    %c0_i32 = arith.constant 0 : i32
    %c0_i32_0 = arith.constant 0 : i32
    %c0_i32_1 = arith.constant 0 : i32
    %c0_i32_2 = arith.constant 0 : i32
    return %c0_i32, %c0_i32_0, %c0_i32_1 : i32, i32, i32
  }
  func.func @transform_5(%arg0: i32) -> (i32, i32, i32) {
    %c0_i32 = arith.constant 0 : i32
    %c0_i32_0 = arith.constant 0 : i32
    %c0_i32_1 = arith.constant 0 : i32
    %c0_i32_2 = arith.constant 0 : i32
    return %c0_i32, %c0_i32_0, %c0_i32_1 : i32, i32, i32
  }
  func.func @transform_6(%arg0: i32) -> (i32, i32, i32) {
    %c0_i32 = arith.constant 0 : i32
    %c0_i32_0 = arith.constant 0 : i32
    %c0_i32_1 = arith.constant 0 : i32
    %c0_i32_2 = arith.constant 0 : i32
    return %c0_i32, %c0_i32_0, %c0_i32_1 : i32, i32, i32
  }
  func.func @transform_7(%arg0: i32) -> (i32, i32, i32) {
    %c0_i32 = arith.constant 0 : i32
    %c0_i32_0 = arith.constant 0 : i32
    %c0_i32_1 = arith.constant 0 : i32
    %c0_i32_2 = arith.constant 0 : i32
    return %c0_i32, %c0_i32_0, %c0_i32_1 : i32, i32, i32
  }
  func.func @transform_8(%arg0: i32) -> (i32, i32, i32) {
    %c0_i32 = arith.constant 0 : i32
    %c0_i32_0 = arith.constant 0 : i32
    %c0_i32_1 = arith.constant 0 : i32
    %c0_i32_2 = arith.constant 0 : i32
    return %c0_i32, %c0_i32_0, %c0_i32_1 : i32, i32, i32
  }
  func.func @transform_9(%arg0: i32) -> (i32, i32, i32) {
    %c0_i32 = arith.constant 0 : i32
    %c0_i32_0 = arith.constant 0 : i32
    %c0_i32_1 = arith.constant 0 : i32
    %c0_i32_2 = arith.constant 0 : i32
    return %c0_i32, %c0_i32_0, %c0_i32_1 : i32, i32, i32
  }
  func.func @transform_10(%arg0: i32) -> (i32, i32) {
    %c0_i32 = arith.constant 0 : i32
    %c0_i32_0 = arith.constant 0 : i32
    %c0_i32_1 = arith.constant 0 : i32
    return %c0_i32, %c0_i32_0 : i32, i32
  }
  func.func @transform_11(%arg0: i32) -> (i32, i32) {
    %c0_i32 = arith.constant 0 : i32
    %c0_i32_0 = arith.constant 0 : i32
    %c0_i32_1 = arith.constant 0 : i32
    return %c0_i32, %c0_i32_0 : i32, i32
  }
}

</mosaic_0001>

<llo_original>
// kernel: tile.9
$region0: #{tile.9}
  %s0 = inlined_call_operand.vmem [shape: f32[32,4,32], index: 0, kind: input, shape index: {}]
  %s1 = inlined_call_operand.vmem [shape: f32[32,128], index: 1, kind: output, shape index: {}]
  $region1: #{tile.9} parent=0
    #allocation0 [shape = 'u8[131072]{0}', space=vmem, size = 0x20000, scoped, tag = 'scoped mem for input reshape']
    %s3 = sshllo.u32 0, 4
    %s4 = smul.addr 4, 31
    %s5 = scalar_lea.vmem %s0, %s4
    %v6 = vld [vmem:[%s5] sm:%s3]
    %s7 = scalar_lea.vmem [#allocation0], 248
    %8 = vst [vmem:[%s7] sm:%s3] %v6
    %s9 = smul.addr 4, 30
    %s10 = scalar_lea.vmem %s0, %s9
    %v11 = vld [vmem:[%s10] sm:%s3]
    %s12 = scalar_lea.vmem [#allocation0], 240
    %13 = vst [vmem:[%s12] sm:%s3] %v11
    %s14 = smul.addr 4, 29
    %s15 = scalar_lea.vmem %s0, %s14
    %v16 = vld [vmem:[%s15] sm:%s3]
    %s17 = scalar_lea.vmem [#allocation0], 232
    %18 = vst [vmem:[%s17] sm:%s3] %v16
    %s19 = smul.addr 4, 28
    %s20 = scalar_lea.vmem %s0, %s19
    %v21 = vld [vmem:[%s20] sm:%s3]
    %s22 = scalar_lea.vmem [#allocation0], 224
    %23 = vst [vmem:[%s22] sm:%s3] %v21
    %s24 = smul.addr 4, 27
    %s25 = scalar_lea.vmem %s0, %s24
    %v26 = vld [vmem:[%s25] sm:%s3]
    %s27 = scalar_lea.vmem [#allocation0], 216
    %28 = vst [vmem:[%s27] sm:%s3] %v26
    %s29 = smul.addr 4, 26
    %s30 = scalar_lea.vmem %s0, %s29
    %v31 = vld [vmem:[%s30] sm:%s3]
    %s32 = scalar_lea.vmem [#allocation0], 208
    %33 = vst [vmem:[%s32] sm:%s3] %v31
    %s34 = smul.addr 4, 25
    %s35 = scalar_lea.vmem %s0, %s34
    %v36 = vld [vmem:[%s35] sm:%s3]
    %s37 = scalar_lea.vmem [#allocation0], 200
    %38 = vst [vmem:[%s37] sm:%s3] %v36
    %s39 = smul.addr 4, 24
    %s40 = scalar_lea.vmem %s0, %s39
    %v41 = vld [vmem:[%s40] sm:%s3]
    %s42 = scalar_lea.vmem [#allocation0], 192
    %43 = vst [vmem:[%s42] sm:%s3] %v41
    %s44 = smul.addr 4, 23
    %s45 = scalar_lea.vmem %s0, %s44
    %v46 = vld [vmem:[%s45] sm:%s3]
    %s47 = scalar_lea.vmem [#allocation0], 184
    %48 = vst [vmem:[%s47] sm:%s3] %v46
    %s49 = smul.addr 4, 22
    %s50 = scalar_lea.vmem %s0, %s49
    %v51 = vld [vmem:[%s50] sm:%s3]
    %s52 = scalar_lea.vmem [#allocation0], 176
    %53 = vst [vmem:[%s52] sm:%s3] %v51
    %s54 = smul.addr 4, 21
    %s55 = scalar_lea.vmem %s0, %s54
    %v56 = vld [vmem:[%s55] sm:%s3]
    %s57 = scalar_lea.vmem [#allocation0], 168
    %58 = vst [vmem:[%s57] sm:%s3] %v56
    %s59 = smul.addr 4, 20
    %s60 = scalar_lea.vmem %s0, %s59
    %v61 = vld [vmem:[%s60] sm:%s3]
    %s62 = scalar_lea.vmem [#allocation0], 160
    %63 = vst [vmem:[%s62] sm:%s3] %v61
    %s64 = smul.addr 4, 19
    %s65 = scalar_lea.vmem %s0, %s64
    %v66 = vld [vmem:[%s65] sm:%s3]
    %s67 = scalar_lea.vmem [#allocation0], 152
    %68 = vst [vmem:[%s67] sm:%s3] %v66
    %s69 = smul.addr 4, 18
    %s70 = scalar_lea.vmem %s0, %s69
    %v71 = vld [vmem:[%s70] sm:%s3]
    %s72 = scalar_lea.vmem [#allocation0], 144
    %73 = vst [vmem:[%s72] sm:%s3] %v71
    %s74 = smul.addr 4, 17
    %s75 = scalar_lea.vmem %s0, %s74
    %v76 = vld [vmem:[%s75] sm:%s3]
    %s77 = scalar_lea.vmem [#allocation0], 136
    %78 = vst [vmem:[%s77] sm:%s3] %v76
    %s79 = smul.addr 4, 16
    %s80 = scalar_lea.vmem %s0, %s79
    %v81 = vld [vmem:[%s80] sm:%s3]
    %s82 = scalar_lea.vmem [#allocation0], 128
    %83 = vst [vmem:[%s82] sm:%s3] %v81
    %s84 = smul.addr 4, 15
    %s85 = scalar_lea.vmem %s0, %s84
    %v86 = vld [vmem:[%s85] sm:%s3]
    %s87 = scalar_lea.vmem [#allocation0], 120
    %88 = vst [vmem:[%s87] sm:%s3] %v86
    %s89 = smul.addr 4, 14
    %s90 = scalar_lea.vmem %s0, %s89
    %v91 = vld [vmem:[%s90] sm:%s3]
    %s92 = scalar_lea.vmem [#allocation0], 112
    %93 = vst [vmem:[%s92] sm:%s3] %v91
    %s94 = smul.addr 4, 13
    %s95 = scalar_lea.vmem %s0, %s94
    %v96 = vld [vmem:[%s95] sm:%s3]
    %s97 = scalar_lea.vmem [#allocation0], 104
    %98 = vst [vmem:[%s97] sm:%s3] %v96
    %s99 = smul.addr 4, 12
    %s100 = scalar_lea.vmem %s0, %s99
    %v101 = vld [vmem:[%s100] sm:%s3]
    %s102 = scalar_lea.vmem [#allocation0], 96
    %103 = vst [vmem:[%s102] sm:%s3] %v101
    %s104 = smul.addr 4, 11
    %s105 = scalar_lea.vmem %s0, %s104
    %v106 = vld [vmem:[%s105] sm:%s3]
    %s107 = scalar_lea.vmem [#allocation0], 88
    %108 = vst [vmem:[%s107] sm:%s3] %v106
    %s109 = smul.addr 4, 10
    %s110 = scalar_lea.vmem %s0, %s109
    %v111 = vld [vmem:[%s110] sm:%s3]
    %s112 = scalar_lea.vmem [#allocation0], 80
    %113 = vst [vmem:[%s112] sm:%s3] %v111
    %s114 = smul.addr 4, 9
    %s115 = scalar_lea.vmem %s0, %s114
    %v116 = vld [vmem:[%s115] sm:%s3]
    %s117 = scalar_lea.vmem [#allocation0], 72
    %118 = vst [vmem:[%s117] sm:%s3] %v116
    %s119 = smul.addr 4, 8
    %s120 = scalar_lea.vmem %s0, %s119
    %v121 = vld [vmem:[%s120] sm:%s3]
    %s122 = scalar_lea.vmem [#allocation0], 64
    %123 = vst [vmem:[%s122] sm:%s3] %v121
    %s124 = smul.addr 4, 7
    %s125 = scalar_lea.vmem %s0, %s124
    %v126 = vld [vmem:[%s125] sm:%s3]
    %s127 = scalar_lea.vmem [#allocation0], 56
    %128 = vst [vmem:[%s127] sm:%s3] %v126
    %s129 = smul.addr 4, 6
    %s130 = scalar_lea.vmem %s0, %s129
    %v131 = vld [vmem:[%s130] sm:%s3]
    %s132 = scalar_lea.vmem [#allocation0], 48
    %133 = vst [vmem:[%s132] sm:%s3] %v131
    %s134 = smul.addr 4, 5
    %s135 = scalar_lea.vmem %s0, %s134
    %v136 = vld [vmem:[%s135] sm:%s3]
    %s137 = scalar_lea.vmem [#allocation0], 40
    %138 = vst [vmem:[%s137] sm:%s3] %v136
    %s139 = smul.addr 4, 4
    %s140 = scalar_lea.vmem %s0, %s139
    %v141 = vld [vmem:[%s140] sm:%s3]
    %s142 = scalar_lea.vmem [#allocation0], 32
    %143 = vst [vmem:[%s142] sm:%s3] %v141
    %s144 = smul.addr 4, 3
    %s145 = scalar_lea.vmem %s0, %s144
    %v146 = vld [vmem:[%s145] sm:%s3]
    %s147 = scalar_lea.vmem [#allocation0], 24
    %148 = vst [vmem:[%s147] sm:%s3] %v146
    %s149 = smul.addr 4, 2
    %s150 = scalar_lea.vmem %s0, %s149
    %v151 = vld [vmem:[%s150] sm:%s3]
    %s152 = scalar_lea.vmem [#allocation0], 16
    %153 = vst [vmem:[%s152] sm:%s3] %v151
    %s154 = scalar_lea.vmem %s0, 4
    %v155 = vld [vmem:[%s154] sm:%s3]
    %s156 = scalar_lea.vmem [#allocation0], 8
    %157 = vst [vmem:[%s156] sm:%s3] %v155
    %v158 = vld [vmem:[%s0] sm:%s3]
    %159 = vst [vmem:[#allocation0] sm:%s3] %v158
    %v160 = vld [vmem:[#allocation0] ss:$8 sm:$0xf]
    %v161 = vld [vmem:[#allocation0] ss:$8 sm:$0xf0]
    %vm162 = vcmask 1047556
    %v163 = vsel %vm162, %v161, %v160
    %vm164 = vcmask 261120
    %165 = vst.msk [vmem:[%s1] sm:$0xff] %vm164, %v163
    %s166 = scalar_lea.vmem [#allocation0], 64
    %v167 = vld [vmem:[%s166] ss:$8 sm:$0xf]
    %s168 = scalar_lea.vmem [#allocation0], 64
    %v169 = vld [vmem:[%s168] ss:$8 sm:$0xf0]
    %vm170 = vcmask 1047556
    %v171 = vsel %vm170, %v169, %v167
    %vm172 = vcmask 261120
    %s173 = scalar_lea.vmem %s1, 8
    %174 = vst.msk [vmem:[%s173] sm:$0xff] %vm172, %v171
    %s175 = scalar_lea.vmem [#allocation0], 128
    %v176 = vld [vmem:[%s175] ss:$8 sm:$0xf]
    %s177 = scalar_lea.vmem [#allocation0], 128
    %v178 = vld [vmem:[%s177] ss:$8 sm:$0xf0]
    %vm179 = vcmask 1047556
    %v180 = vsel %vm179, %v178, %v176
    %vm181 = vcmask 261120
    %s182 = scalar_lea.vmem %s1, 16
    %183 = vst.msk [vmem:[%s182] sm:$0xff] %vm181, %v180
    %s184 = scalar_lea.vmem [#allocation0], 192
    %v185 = vld [vmem:[%s184] ss:$8 sm:$0xf]
    %s186 = scalar_lea.vmem [#allocation0], 192
    %v187 = vld [vmem:[%s186] ss:$8 sm:$0xf0]
    %vm188 = vcmask 1047556
    %v189 = vsel %vm188, %v187, %v185
    %vm190 = vcmask 261120
    %s191 = scalar_lea.vmem %s1, 24
    %192 = vst.msk [vmem:[%s191] sm:$0xff] %vm190, %v189
    %s193 = scalar_lea.vmem [#allocation0], 3
    %v194 = vld [vmem:[%s193] ss:$8 sm:$0xf]
    %s195 = scalar_lea.vmem [#allocation0], 3
    %v196 = vld [vmem:[%s195] ss:$8 sm:$0xf0]
    %vm197 = vcmask 1047556
    %v198 = vsel %vm197, %v196, %v194
    %199 = vrot.lane.b32.xlu0 %v198, 96
    %v200 = vpop.permute.xlu0 %199
    %vm201 = vcmask 1048320
    %202 = vst.msk [vmem:[%s1] sm:$0xff] %vm201, %v200
    %s203 = scalar_lea.vmem [#allocation0], 67
    %v204 = vld [vmem:[%s203] ss:$8 sm:$0xf]
    %s205 = scalar_lea.vmem [#allocation0], 67
    %v206 = vld [vmem:[%s205] ss:$8 sm:$0xf0]
    %vm207 = vcmask 1047556
    %v208 = vsel %vm207, %v206, %v204
    %209 = vrot.lane.b32.xlu0 %v208, 96
    %v210 = vpop.permute.xlu0 %209
    %vm211 = vcmask 1048320
    %s212 = scalar_lea.vmem %s1, 8
    %213 = vst.msk [vmem:[%s212] sm:$0xff] %vm211, %v210
    %s214 = scalar_lea.vmem [#allocation0], 131
    %v215 = vld [vmem:[%s214] ss:$8 sm:$0xf]
    %s216 = scalar_lea.vmem [#allocation0], 131
    %v217 = vld [vmem:[%s216] ss:$8 sm:$0xf0]
    %vm218 = vcmask 1047556
    %v219 = vsel %vm218, %v217, %v215
    %220 = vrot.lane.b32.xlu0 %v219, 96
    %v221 = vpop.permute.xlu0 %220
    %vm222 = vcmask 1048320
    %s223 = scalar_lea.vmem %s1, 16
    %224 = vst.msk [vmem:[%s223] sm:$0xff] %vm222, %v221
    %s225 = scalar_lea.vmem [#allocation0], 195
    %v226 = vld [vmem:[%s225] ss:$8 sm:$0xf]
    %s227 = scalar_lea.vmem [#allocation0], 195
    %v228 = vld [vmem:[%s227] ss:$8 sm:$0xf0]
    %vm229 = vcmask 1047556
    %v230 = vsel %vm229, %v228, %v226
    %231 = vrot.lane.b32.xlu0 %v230, 96
    %v232 = vpop.permute.xlu0 %231
    %vm233 = vcmask 1048320
    %s234 = scalar_lea.vmem %s1, 24
    %235 = vst.msk [vmem:[%s234] sm:$0xff] %vm233, %v232
    %s236 = scalar_lea.vmem [#allocation0], 2
    %v237 = vld [vmem:[%s236] ss:$8 sm:$0xf]
    %s238 = scalar_lea.vmem [#allocation0], 2
    %v239 = vld [vmem:[%s238] ss:$8 sm:$0xf0]
    %vm240 = vcmask 1047556
    %v241 = vsel %vm240, %v239, %v237
    %242 = vrot.lane.b32.xlu0 %v241, 64
    %v243 = vpop.permute.xlu0 %242
    %vm244 = vcmask 785920
    %245 = vst.msk [vmem:[%s1] sm:$0xff] %vm244, %v243
    %s246 = scalar_lea.vmem [#allocation0], 66
    %v247 = vld [vmem:[%s246] ss:$8 sm:$0xf]
    %s248 = scalar_lea.vmem [#allocation0], 66
    %v249 = vld [vmem:[%s248] ss:$8 sm:$0xf0]
    %vm250 = vcmask 1047556
    %v251 = vsel %vm250, %v249, %v247
    %252 = vrot.lane.b32.xlu0 %v251, 64
    %v253 = vpop.permute.xlu0 %252
    %vm254 = vcmask 785920
    %s255 = scalar_lea.vmem %s1, 8
    %256 = vst.msk [vmem:[%s255] sm:$0xff] %vm254, %v253
    %s257 = scalar_lea.vmem [#allocation0], 130
    %v258 = vld [vmem:[%s257] ss:$8 sm:$0xf]
    %s259 = scalar_lea.vmem [#allocation0], 130
    %v260 = vld [vmem:[%s259] ss:$8 sm:$0xf0]
    %vm261 = vcmask 1047556
    %v262 = vsel %vm261, %v260, %v258
    %263 = vrot.lane.b32.xlu0 %v262, 64
    %v264 = vpop.permute.xlu0 %263
    %vm265 = vcmask 785920
    %s266 = scalar_lea.vmem %s1, 16
    %267 = vst.msk [vmem:[%s266] sm:$0xff] %vm265, %v264
    %s268 = scalar_lea.vmem [#allocation0], 194
    %v269 = vld [vmem:[%s268] ss:$8 sm:$0xf]
    %s270 = scalar_lea.vmem [#allocation0], 194
    %v271 = vld [vmem:[%s270] ss:$8 sm:$0xf0]
    %vm272 = vcmask 1047556
    %v273 = vsel %vm272, %v271, %v269
    %274 = vrot.lane.b32.xlu0 %v273, 64
    %v275 = vpop.permute.xlu0 %274
    %vm276 = vcmask 785920
    %s277 = scalar_lea.vmem %s1, 24
    %278 = vst.msk [vmem:[%s277] sm:$0xff] %vm276, %v275
    %s279 = scalar_lea.vmem [#allocation0], 1
    %v280 = vld [vmem:[%s279] ss:$8 sm:$0xf]
    %s281 = scalar_lea.vmem [#allocation0], 1
    %v282 = vld [vmem:[%s281] ss:$8 sm:$0xf0]
    %vm283 = vcmask 1047556
    %v284 = vsel %vm283, %v282, %v280
    %285 = vrot.lane.b32.xlu0 %v284, 32
    %v286 = vpop.permute.xlu0 %285
    %vm287 = vcmask 523520
    %288 = vst.msk [vmem:[%s1] sm:$0xff] %vm287, %v286
    %s289 = scalar_lea.vmem [#allocation0], 65
    %v290 = vld [vmem:[%s289] ss:$8 sm:$0xf]
    %s291 = scalar_lea.vmem [#allocation0], 65
    %v292 = vld [vmem:[%s291] ss:$8 sm:$0xf0]
    %vm293 = vcmask 1047556
    %v294 = vsel %vm293, %v292, %v290
    %295 = vrot.lane.b32.xlu0 %v294, 32
    %v296 = vpop.permute.xlu0 %295
    %vm297 = vcmask 523520
    %s298 = scalar_lea.vmem %s1, 8
    %299 = vst.msk [vmem:[%s298] sm:$0xff] %vm297, %v296
    %s300 = scalar_lea.vmem [#allocation0], 129
    %v301 = vld [vmem:[%s300] ss:$8 sm:$0xf]
    %s302 = scalar_lea.vmem [#allocation0], 129
    %v303 = vld [vmem:[%s302] ss:$8 sm:$0xf0]
    %vm304 = vcmask 1047556
    %v305 = vsel %vm304, %v303, %v301
    %306 = vrot.lane.b32.xlu0 %v305, 32
    %v307 = vpop.permute.xlu0 %306
    %vm308 = vcmask 523520
    %s309 = scalar_lea.vmem %s1, 16
    %310 = vst.msk [vmem:[%s309] sm:$0xff] %vm308, %v307
    %s311 = scalar_lea.vmem [#allocation0], 193
    %v312 = vld [vmem:[%s311] ss:$8 sm:$0xf]
    %s313 = scalar_lea.vmem [#allocation0], 193
    %v314 = vld [vmem:[%s313] ss:$8 sm:$0xf0]
    %vm315 = vcmask 1047556
    %v316 = vsel %vm315, %v314, %v312
    %317 = vrot.lane.b32.xlu0 %v316, 32
    %v318 = vpop.permute.xlu0 %317
    %vm319 = vcmask 523520
    %s320 = scalar_lea.vmem %s1, 24
    %321 = vst.msk [vmem:[%s320] sm:$0xff] %vm319, %v318

// kernel: theseus_forward.1
$region0: #{theseus_forward.1}
  #allocation0 [shape = 'u32[]', space=smem, size = 0x4, offset = 0x4, fixed_abs, tag = 'smem constant byte address 0x4 - core index']
  #allocation1 [shape = 'u32[144,128]{1,0:T(1,128)}', space=vmem, size = 0x12000, scoped, tag = 'internal scratch']
  %s0 = inlined_call_operand.vmem [shape: f32[32,128], index: 0, kind: input, shape index: {}]
  %s1 = inlined_call_operand.vmem [shape: f32[32,128], index: 1, kind: input, shape index: {}]
  %s2 = inlined_call_operand.vmem [shape: f32[128,128], index: 2, kind: input, shape index: {}]
  %s3 = inlined_call_operand.vmem [shape: f32[16,128], index: 3, kind: input, shape index: {}]
  %s4 = inlined_call_operand.vmem [shape: f32[2,1,384], index: 4, kind: input, shape index: {}]
  %s5 = inlined_call_operand.vmem [shape: f32[2,1,256], index: 5, kind: input, shape index: {}]
  %s6 = inlined_call_operand.vmem [shape: bf16[2,128,384], index: 6, kind: input, shape index: {}]
  %s7 = inlined_call_operand.vmem [shape: bf16[2,128,128], index: 7, kind: input, shape index: {}]
  %s8 = inlined_call_operand.vmem [shape: bf16[2,128,256], index: 8, kind: input, shape index: {}]
  %s9 = inlined_call_operand.vmem [shape: bf16[2,256,128], index: 9, kind: input, shape index: {}]
  %s10 = inlined_call_operand.vmem [shape: bf16[128,128], index: 10, kind: input, shape index: {}]
  %s11 = inlined_call_operand.vmem [shape: f32[32,128], index: 11, kind: output, shape index: {}]
  %s12 = sld [smem:[#allocation0]]
  $region54: #{theseus_forward.1} parent=0
    _
  %s14 = ssub.s32 1, %s12
  %s15 = scalar_select 0, %s14, %s12
  // Predicated region
  $region2: #{theseus_forward.1} parent=0 // pred_check
    _
  $region3: #{theseus_forward.1} parent=0 // pred_check_branch
    %17 = sbr.rel (0) target = $region5
  $region4: #{theseus_forward.1} parent=0 // pred_region
    _
  $region5: #{theseus_forward.1} parent=0 // pred_fallthru
    _
  // Predicated region
  $region6: #{theseus_forward.1} parent=0 // pred_check
    _
  $region7: #{theseus_forward.1} parent=0 // pred_check_branch
    %19 = sbr.rel (0) target = $region9
  $region8: #{theseus_forward.1} parent=0 // pred_region
    _
  $region9: #{theseus_forward.1} parent=0 // pred_fallthru
    _
  // Predicated region
  $region10: #{theseus_forward.1} parent=0 // pred_check
    _
  $region11: #{theseus_forward.1} parent=0 // pred_check_branch
    %21 = sbr.rel (0) target = $region13
  $region12: #{theseus_forward.1} parent=0 // pred_region
    _
  $region13: #{theseus_forward.1} parent=0 // pred_fallthru
    _
  // Predicated region
  $region14: #{theseus_forward.1} parent=0 // pred_check
    _
  $region15: #{theseus_forward.1} parent=0 // pred_check_branch
    %23 = sbr.rel (0) target = $region17
  $region16: #{theseus_forward.1} parent=0 // pred_region
    _
  $region17: #{theseus_forward.1} parent=0 // pred_fallthru
    _
  // Predicated region
  $region18: #{theseus_forward.1} parent=0 // pred_check
    _
  $region19: #{theseus_forward.1} parent=0 // pred_check_branch
    %25 = sbr.rel (0) target = $region21
  $region20: #{theseus_forward.1} parent=0 // pred_region
    _
  $region21: #{theseus_forward.1} parent=0 // pred_fallthru
    _
  // Predicated region
  $region22: #{theseus_forward.1} parent=0 // pred_check
    _
  $region23: #{theseus_forward.1} parent=0 // pred_check_branch
    %27 = sbr.rel (0) target = $region25
  $region24: #{theseus_forward.1} parent=0 // pred_region
    _
  $region25: #{theseus_forward.1} parent=0 // pred_fallthru
    _
  // Predicated region
  $region26: #{theseus_forward.1} parent=0 // pred_check
    _
  $region27: #{theseus_forward.1} parent=0 // pred_check_branch
    %29 = sbr.rel (0) target = $region29
  $region28: #{theseus_forward.1} parent=0 // pred_region
    _
  $region29: #{theseus_forward.1} parent=0 // pred_fallthru
    _
  // Predicated region
  $region30: #{theseus_forward.1} parent=0 // pred_check
    _
  $region31: #{theseus_forward.1} parent=0 // pred_check_branch
    %31 = sbr.rel (0) target = $region33
  $region32: #{theseus_forward.1} parent=0 // pred_region
    _
  $region33: #{theseus_forward.1} parent=0 // pred_fallthru
    _
  // Predicated region
  $region34: #{theseus_forward.1} parent=0 // pred_check
    _
  $region35: #{theseus_forward.1} parent=0 // pred_check_branch
    %33 = sbr.rel (0) target = $region37
  $region36: #{theseus_forward.1} parent=0 // pred_region
    _
  $region37: #{theseus_forward.1} parent=0 // pred_fallthru
    _
  // Predicated region
  $region38: #{theseus_forward.1} parent=0 // pred_check
    _
  $region39: #{theseus_forward.1} parent=0 // pred_check_branch
    %35 = sbr.rel (0) target = $region41
  $region40: #{theseus_forward.1} parent=0 // pred_region
    _
  $region41: #{theseus_forward.1} parent=0 // pred_fallthru
    _
  // Predicated region
  $region42: #{theseus_forward.1} parent=0 // pred_check
    _
  $region43: #{theseus_forward.1} parent=0 // pred_check_branch
    %37 = sbr.rel (0) target = $region45
  $region44: #{theseus_forward.1} parent=0 // pred_region
    _
  $region45: #{theseus_forward.1} parent=0 // pred_fallthru
    _
  %v39 = vld [vmem:[%s0] sm:$0xff]
  %v40 = vld [vmem:[%s0 + $0x8] sm:$0xff]
  %v41 = vld [vmem:[%s0 + $0x10] sm:$0xff]
  %v42 = vld [vmem:[%s0 + $0x18] sm:$0xff]
  %v43 = vld [vmem:[%s1] sm:$0xff]
  %v44 = vld [vmem:[%s1 + $0x8] sm:$0xff]
  %v45 = vld [vmem:[%s1 + $0x10] sm:$0xff]
  %v46 = vld [vmem:[%s1 + $0x18] sm:$0xff]
  %v47 = vld [vmem:[%s2] sm:$0xff]
  %v48 = vld [vmem:[%s2 + $0x8] sm:$0xff]
  %v49 = vld [vmem:[%s2 + $0x10] sm:$0xff]
  %v50 = vld [vmem:[%s2 + $0x18] sm:$0xff]
  %v51 = vld [vmem:[%s2 + $0x20] sm:$0xff]
  %v52 = vld [vmem:[%s2 + $0x28] sm:$0xff]
  %v53 = vld [vmem:[%s2 + $0x30] sm:$0xff]
  %v54 = vld [vmem:[%s2 + $0x38] sm:$0xff]
  %v55 = vld [vmem:[%s2 + $0x40] sm:$0xff]
  %v56 = vld [vmem:[%s2 + $0x48] sm:$0xff]
  %v57 = vld [vmem:[%s2 + $0x50] sm:$0xff]
  %v58 = vld [vmem:[%s2 + $0x58] sm:$0xff]
  %v59 = vld [vmem:[%s2 + $0x60] sm:$0xff]
  %v60 = vld [vmem:[%s2 + $0x68] sm:$0xff]
  %v61 = vld [vmem:[%s2 + $0x70] sm:$0xff]
  %v62 = vld [vmem:[%s2 + $0x78] sm:$0xff]
  %v63 = vld [vmem:[%s3] sm:$0xff]
  %v64 = vld [vmem:[%s3 + $0x8] sm:$0xff]
  %65 = vadd.xlane.f32.xlu0 %v39
  %v66 = vpop.xlane.xlu0 %65
  %67 = vadd.xlane.f32.xlu0 %v40
  %v68 = vpop.xlane.xlu0 %67
  %69 = vadd.xlane.f32.xlu0 %v41
  %v70 = vpop.xlane.xlu0 %69
  %71 = vadd.xlane.f32.xlu0 %v42
  %v72 = vpop.xlane.xlu0 %71
  %v73 = vrcp.pop 128.0
  %v74 = vmul.f32 %v66, %v73
  %v75 = vmul.f32 %v68, %v73
  %v76 = vmul.f32 %v70, %v73
  %v77 = vmul.f32 %v72, %v73
  %v78 = vsub.f32 %v39, %v74
  %v79 = vsub.f32 %v40, %v75
  %v80 = vsub.f32 %v41, %v76
  %v81 = vsub.f32 %v42, %v77
  %v82 = vmul.f32 %v78, %v78
  %v83 = vmul.f32 %v79, %v79
  %v84 = vmul.f32 %v80, %v80
  %v85 = vmul.f32 %v81, %v81
  %86 = vadd.xlane.f32.xlu0 %v82
  %v87 = vpop.xlane.xlu0 %86
  %88 = vadd.xlane.f32.xlu0 %v83
  %v89 = vpop.xlane.xlu0 %88
  %90 = vadd.xlane.f32.xlu0 %v84
  %v91 = vpop.xlane.xlu0 %90
  %92 = vadd.xlane.f32.xlu0 %v85
  %v93 = vpop.xlane.xlu0 %92
  %v94 = vmul.f32 %v87, %v73
  %v95 = vmul.f32 %v89, %v73
  %v96 = vmul.f32 %v91, %v73
  %v97 = vmul.f32 %v93, %v73
  %v98 = vadd.f32 %v94, 1e-12
  %v99 = vadd.f32 %v95, 1e-12
  %v100 = vadd.f32 %v96, 1e-12
  %v101 = vadd.f32 %v97, 1e-12
  %v102 = vrsqrt.pop %v98
  %v103 = vrsqrt.pop %v99
  %v104 = vrsqrt.pop %v100
  %v105 = vrsqrt.pop %v101
  %v106 = vmul.f32 %v78, %v102
  %v107 = vmul.f32 %v79, %v103
  %v108 = vmul.f32 %v80, %v104
  %v109 = vmul.f32 %v81, %v105
  %v110 = vlaneseq
  %v111 = vshrl.u32 %v110, 7
  %v112 = vsub.s32 0, %v111
  %v113 = vrot.slane %v63, %v112
  %v114 = vmul.f32 %v106, %v113
  %v115 = vmul.f32 %v107, %v113
  %v116 = vmul.f32 %v108, %v113
  %v117 = vmul.f32 %v109, %v113
  %v118 = vlaneseq
  %v119 = vshrl.u32 %v118, 7
  %v120 = vsub.s32 1, %v119
  %v121 = vrot.slane %v63, %v120
  %v122 = vadd.f32 %v114, %v121
  %v123 = vadd.f32 %v115, %v121
  %v124 = vadd.f32 %v116, %v121
  %v125 = vadd.f32 %v117, %v121
  %v126 = vpack.c.bf16 %v123, %v122
  %v127 = vpack.c.bf16 %v125, %v124
  %v128 = vld [vmem:[%s6] sm:$0xff]
  %v129 = vld [vmem:[%s6 + $0x8] sm:$0xf]
  %v130 = vld [vmem:[%s6 + $0xc] sm:$0xff]
  %v131 = vld [vmem:[%s6 + $0x14] sm:$0xf]
  %v132 = vld [vmem:[%s6 + $0x18] sm:$0xff]
  %v133 = vld [vmem:[%s6 + $0x20] sm:$0xf]
  %v134 = vld [vmem:[%s6 + $0x24] sm:$0xff]
  %v135 = vld [vmem:[%s6 + $0x2c] sm:$0xf]
  %v136 = vld [vmem:[%s6 + $0x30] sm:$0xff]
  %v137 = vld [vmem:[%s6 + $0x38] sm:$0xf]
  %v138 = vld [vmem:[%s6 + $0x3c] sm:$0xff]
  %v139 = vld [vmem:[%s6 + $0x44] sm:$0xf]
  %v140 = vld [vmem:[%s6 + $0x48] sm:$0xff]
  %v141 = vld [vmem:[%s6 + $0x50] sm:$0xf]
  %v142 = vld [vmem:[%s6 + $0x54] sm:$0xff]
  %v143 = vld [vmem:[%s6 + $0x5c] sm:$0xf]
  %v144 = vld [vmem:[%s6 + $0x60] sm:$0xff]
  %v145 = vld [vmem:[%s6 + $0x68] sm:$0xf]
  %v146 = vld [vmem:[%s6 + $0x6c] sm:$0xff]
  %v147 = vld [vmem:[%s6 + $0x74] sm:$0xf]
  %v148 = vld [vmem:[%s6 + $0x78] sm:$0xff]
  %v149 = vld [vmem:[%s6 + $0x80] sm:$0xf]
  %v150 = vld [vmem:[%s6 + $0x84] sm:$0xff]
  %v151 = vld [vmem:[%s6 + $0x8c] sm:$0xf]
  %v152 = vld [vmem:[%s6 + $0x90] sm:$0xff]
  %v153 = vld [vmem:[%s6 + $0x98] sm:$0xf]
  %v154 = vld [vmem:[%s6 + $0x9c] sm:$0xff]
  %v155 = vld [vmem:[%s6 + $0xa4] sm:$0xf]
  %v156 = vld [vmem:[%s6 + $0xa8] sm:$0xff]
  %v157 = vld [vmem:[%s6 + $0xb0] sm:$0xf]
  %v158 = vld [vmem:[%s6 + $0xb4] sm:$0xff]
  %v159 = vld [vmem:[%s6 + $0xbc] sm:$0xf]
  %v160 = vld [vmem:[%s4] sm:$0x7]
  %v162 = vlaneseq
  %v163 = vshrl.u32 %v162, 7
  %v164 = vsub.s32 0, %v163
  %v165 = vrot.slane %v160, %v164
  %v166 = vlaneseq
  %v167 = vshrl.u32 %v166, 7
  %v168 = vsub.s32 1, %v167
  %v169 = vrot.slane %v160, %v168
  %v170 = vlaneseq
  %v171 = vshrl.u32 %v170, 7
  %v172 = vsub.s32 2, %v171
  %v173 = vrot.slane %v160, %v172
  %v209 = vunpack.c.l.b16 %v128
  %v210 = vunpack.c.h.b16 %v128
  %v211 = vunpack.c.l.b16 %v129
  %v212 = vunpack.c.l.b16 %v130
  %v213 = vunpack.c.h.b16 %v130
  %v214 = vunpack.c.l.b16 %v131
  %v215 = vunpack.c.l.b16 %v132
  %v216 = vunpack.c.h.b16 %v132
  %v217 = vunpack.c.l.b16 %v133
  %v218 = vunpack.c.l.b16 %v134
  %v219 = vunpack.c.h.b16 %v134
  %v220 = vunpack.c.l.b16 %v135
  %v221 = vunpack.c.l.b16 %v136
  %v222 = vunpack.c.h.b16 %v136
  %v223 = vunpack.c.l.b16 %v137
  %v224 = vunpack.c.l.b16 %v138
  %v225 = vunpack.c.h.b16 %v138
  %v226 = vunpack.c.l.b16 %v139
  %v227 = vunpack.c.l.b16 %v140
  %v228 = vunpack.c.h.b16 %v140
  %v229 = vunpack.c.l.b16 %v141
  %v230 = vunpack.c.l.b16 %v142
  %v231 = vunpack.c.h.b16 %v142
  %v232 = vunpack.c.l.b16 %v143
  %v233 = vunpack.c.l.b16 %v144
  %v234 = vunpack.c.h.b16 %v144
  %v235 = vunpack.c.l.b16 %v145
  %v236 = vunpack.c.l.b16 %v146
  %v237 = vunpack.c.h.b16 %v146
  %v238 = vunpack.c.l.b16 %v147
  %v239 = vunpack.c.l.b16 %v148
  %v240 = vunpack.c.h.b16 %v148
  %v241 = vunpack.c.l.b16 %v149
  %v242 = vunpack.c.l.b16 %v150
  %v243 = vunpack.c.h.b16 %v150
  %v244 = vunpack.c.l.b16 %v151
  %v245 = vunpack.c.l.b16 %v152
  %v246 = vunpack.c.h.b16 %v152
  %v247 = vunpack.c.l.b16 %v153
  %v248 = vunpack.c.l.b16 %v154
  %v249 = vunpack.c.h.b16 %v154
  %v250 = vunpack.c.l.b16 %v155
  %v251 = vunpack.c.l.b16 %v156
  %v252 = vunpack.c.h.b16 %v156
  %v253 = vunpack.c.l.b16 %v157
  %v254 = vunpack.c.l.b16 %v158
  %v255 = vunpack.c.h.b16 %v158
  %v256 = vunpack.c.l.b16 %v159
  %v257 = vpack.c.b16 %v212, %v209
  %v258 = vpack.c.b16 %v213, %v210
  %v259 = vpack.c.b16 %v214, %v211
  %v260 = vpack.c.b16 %v218, %v215
  %v261 = vpack.c.b16 %v219, %v216
  %v262 = vpack.c.b16 %v220, %v217
  %v263 = vpack.c.b16 %v224, %v221
  %v264 = vpack.c.b16 %v225, %v222
  %v265 = vpack.c.b16 %v226, %v223
  %v266 = vpack.c.b16 %v230, %v227
  %v267 = vpack.c.b16 %v231, %v228
  %v268 = vpack.c.b16 %v232, %v229
  %v269 = vpack.c.b16 %v236, %v233
  %v270 = vpack.c.b16 %v237, %v234
  %v271 = vpack.c.b16 %v238, %v235
  %v272 = vpack.c.b16 %v242, %v239
  %v273 = vpack.c.b16 %v243, %v240
  %v274 = vpack.c.b16 %v244, %v241
  %v275 = vpack.c.b16 %v248, %v245
  %v276 = vpack.c.b16 %v249, %v246
  %v277 = vpack.c.b16 %v250, %v247
  %v278 = vpack.c.b16 %v254, %v251
  %v279 = vpack.c.b16 %v255, %v252
  %v280 = vpack.c.b16 %v256, %v253
  %305 = vmatprep.subr.bf16.mxu0 %v258
  %306 = vmatpush1.bf16.msra.mxu0 %v257
  %307 = vmatprep.subr.bf16.mxu0 %v261
  %308 = vmatpush1.bf16.msra.mxu0 %v260
  %309 = vmatprep.subr.bf16.mxu0 %v264
  %310 = vmatpush1.bf16.msra.mxu0 %v263
  %311 = vmatprep.subr.bf16.mxu0 %v267
  %312 = vmatpush1.bf16.msra.mxu0 %v266
  %313 = vmatprep.subr.bf16.mxu0 %v270
  %314 = vmatpush1.bf16.msra.mxu0 %v269
  %315 = vmatprep.subr.bf16.mxu0 %v273
  %316 = vmatpush1.bf16.msra.mxu0 %v272
  %317 = vmatprep.subr.bf16.mxu0 %v276
  %318 = vmatpush1.bf16.msra.mxu0 %v275
  %319 = vmatprep.subr.bf16.mxu0 %v279
  %320 = vmatpush1.bf16.msra.mxu0 %v278
  %321 = vmatprep.subr.bf16.mxu0 0
  %322 = vmatpush1.bf16.msra.mxu0 0
  %323 = vmatprep.subr.bf16.mxu0 0
  %324 = vmatpush1.bf16.msra.mxu0 0
  %325 = vmatprep.subr.bf16.mxu0 0
  %326 = vmatpush1.bf16.msra.mxu0 0
  %327 = vmatprep.subr.bf16.mxu0 0
  %328 = vmatpush1.bf16.msra.mxu0 0
  %329 = vmatprep.subr.bf16.mxu0 0
  %330 = vmatpush1.bf16.msra.mxu0 0
  %331 = vmatprep.subr.bf16.mxu0 0
  %332 = vmatpush1.bf16.msra.mxu0 0
  %333 = vmatprep.subr.bf16.mxu0 0
  %334 = vmatpush1.bf16.msra.mxu0 0
  %335 = vmatprep.subr.bf16.mxu0 0
  %336 = vmatpush1.bf16.msra.mxu0 0
  %337 = vmatprep.mubr.bf16.mxu0 0
  %338 = vmatmul.mubr.bf16.gmra.mrb[0].mxu0 %v126
  %v339 = vpop.f32.mrb[0].mxu0
  %v340 = vadd.f32 %v165, %v339
  %v341 = vpop.f32.mrb[0].mxu0
  %v342 = vadd.f32 %v169, %v341
  %v343 = vpop.f32.mrb[0].mxu0
  %v344 = vadd.f32 %v165, %v343
  %v345 = vpop.f32.mrb[0].mxu0
  %v346 = vadd.f32 %v169, %v345
  %347 = vmatprep.mubr.bf16.mxu0 0
  %348 = vmatmul.mubr.bf16.gmra.mrb[0].mxu0 %v127
  %v349 = vpop.f32.mrb[0].mxu0
  %v350 = vadd.f32 %v165, %v349
  %v351 = vpop.f32.mrb[0].mxu0
  %v352 = vadd.f32 %v169, %v351
  %v353 = vpop.f32.mrb[0].mxu0
  %v354 = vadd.f32 %v165, %v353
  %v355 = vpop.f32.mrb[0].mxu0
  %v356 = vadd.f32 %v169, %v355
  %357 = vdwg.mxu0
  %358 = vmatprep.subr.bf16.mxu0 0
  %359 = vmatpush1.bf16.msra.mxu0 %v259
  %360 = vmatprep.subr.bf16.mxu0 0
  %361 = vmatpush1.bf16.msra.mxu0 %v262
  %362 = vmatprep.subr.bf16.mxu0 0
  %363 = vmatpush1.bf16.msra.mxu0 %v265
  %364 = vmatprep.subr.bf16.mxu0 0
  %365 = vmatpush1.bf16.msra.mxu0 %v268
  %366 = vmatprep.subr.bf16.mxu0 0
  %367 = vmatpush1.bf16.msra.mxu0 %v271
  %368 = vmatprep.subr.bf16.mxu0 0
  %369 = vmatpush1.bf16.msra.mxu0 %v274
  %370 = vmatprep.subr.bf16.mxu0 0
  %371 = vmatpush1.bf16.msra.mxu0 %v277
  %372 = vmatprep.subr.bf16.mxu0 0
  %373 = vmatpush1.bf16.msra.mxu0 %v280
  %374 = vmatprep.subr.bf16.mxu0 0
  %375 = vmatpush1.bf16.msra.mxu0 0
  %376 = vmatprep.subr.bf16.mxu0 0
  %377 = vmatpush1.bf16.msra.mxu0 0
  %378 = vmatprep.subr.bf16.mxu0 0
  %379 = vmatpush1.bf16.msra.mxu0 0
  %380 = vmatprep.subr.bf16.mxu0 0
  %381 = vmatpush1.bf16.msra.mxu0 0
  %382 = vmatprep.subr.bf16.mxu0 0
  %383 = vmatpush1.bf16.msra.mxu0 0
  %384 = vmatprep.subr.bf16.mxu0 0
  %385 = vmatpush1.bf16.msra.mxu0 0
  %386 = vmatprep.subr.bf16.mxu0 0
  %387 = vmatpush1.bf16.msra.mxu0 0
  %388 = vmatprep.subr.bf16.mxu0 0
  %389 = vmatpush1.bf16.msra.mxu0 0
  %390 = vmatprep.mubr.bf16.mxu0 0
  %391 = vmatmul.mubr.bf16.gmra.mrb[0].mxu0 %v126
  %v392 = vpop.f32.mrb[0].mxu0
  %v393 = vadd.f32 %v173, %v392
  %v394 = vpop.f32.mrb[0].mxu0
  %v395 = vpop.f32.mrb[0].mxu0
  %v396 = vadd.f32 %v173, %v395
  %v397 = vpop.f32.mrb[0].mxu0
  %398 = vmatprep.mubr.bf16.mxu0 0
  %399 = vmatmul.mubr.bf16.gmra.mrb[0].mxu0 %v127
  %v400 = vpop.f32.mrb[0].mxu0
  %v401 = vadd.f32 %v173, %v400
  %v402 = vpop.f32.mrb[0].mxu0
  %v403 = vpop.f32.mrb[0].mxu0
  %v404 = vadd.f32 %v173, %v403
  %v405 = vpop.f32.mrb[0].mxu0
  %406 = vdwg.mxu0
  %v407 = vmul.f32 %v340, 0.17677669
  %v408 = vmul.f32 %v344, 0.17677669
  %v409 = vmul.f32 %v350, 0.17677669
  %v410 = vmul.f32 %v354, 0.17677669
  %v411 = vmul.f32 %v342, %v47
  %v412 = vmul.f32 %v346, %v48
  %v413 = vmul.f32 %v352, %v49
  %v414 = vmul.f32 %v356, %v50
  %v415 = vmul.f32 %v342, %v51
  %v416 = vmul.f32 %v346, %v52
  %v417 = vmul.f32 %v352, %v53
  %v418 = vmul.f32 %v356, %v54
  %v419 = vmul.f32 %v342, %v55
  %v420 = vmul.f32 %v346, %v56
  %v421 = vmul.f32 %v352, %v57
  %v422 = vmul.f32 %v356, %v58
  %v423 = vmul.f32 %v342, %v59
  %v424 = vmul.f32 %v346, %v60
  %v425 = vmul.f32 %v352, %v61
  %v426 = vmul.f32 %v356, %v62
  %v427 = vmul.f32 %v393, %v47
  %v428 = vmul.f32 %v396, %v48
  %v429 = vmul.f32 %v401, %v49
  %v430 = vmul.f32 %v404, %v50
  %v431 = vmul.f32 %v393, %v51
  %v432 = vmul.f32 %v396, %v52
  %v433 = vmul.f32 %v401, %v53
  %v434 = vmul.f32 %v404, %v54
  %v435 = vmul.f32 %v393, %v55
  %v436 = vmul.f32 %v396, %v56
  %v437 = vmul.f32 %v401, %v57
  %v438 = vmul.f32 %v404, %v58
  %v439 = vmul.f32 %v393, %v59
  %v440 = vmul.f32 %v396, %v60
  %v441 = vmul.f32 %v401, %v61
  %v442 = vmul.f32 %v404, %v62
  %443 = vmatprep.subr.mxu0 0.0
  %444 = vmatpush1.xpose.msra.mxu0 %v411
  %445 = vmatprep.subr.mxu0 0.0
  %446 = vmatpush1.xpose.msra.mxu0 %v412
  %447 = vmatprep.subr.mxu0 0.0
  %448 = vmatpush1.xpose.msra.mxu0 %v413
  %449 = vmatprep.subr.mxu0 0.0
  %450 = vmatpush1.xpose.msra.mxu0 %v414
  %451 = vmatprep.subr.mxu0 0.0
  %452 = vmatpush1.xpose.msra.mxu0 %v415
  %453 = vmatprep.subr.mxu0 0.0
  %454 = vmatpush1.xpose.msra.mxu0 %v416
  %455 = vmatprep.subr.mxu0 0.0
  %456 = vmatpush1.xpose.msra.mxu0 %v417
  %457 = vmatprep.subr.mxu0 0.0
  %458 = vmatpush1.xpose.msra.mxu0 %v418
  %459 = vmatprep.subr.mxu0 0.0
  %460 = vmatpush1.xpose.msra.mxu0 %v419
  %461 = vmatprep.subr.mxu0 0.0
  %462 = vmatpush1.xpose.msra.mxu0 %v420
  %463 = vmatprep.subr.mxu0 0.0
  %464 = vmatpush1.xpose.msra.mxu0 %v421
  %465 = vmatprep.subr.mxu0 0.0
  %466 = vmatpush1.xpose.msra.mxu0 %v422
  %467 = vmatprep.subr.mxu0 0.0
  %468 = vmatpush1.xpose.msra.mxu0 %v423
  %469 = vmatprep.subr.mxu0 0.0
  %470 = vmatpush1.xpose.msra.mxu0 %v424
  %471 = vmatprep.subr.mxu0 0.0
  %472 = vmatpush1.xpose.msra.mxu0 %v425
  %473 = vmatprep.subr.mxu0 0.0
  %474 = vmatpush1.xpose.msra.mxu0 %v426
  %475 = vmatprep.subr.mxu0 0.0
  %476 = vmatpush1.xpose.msra.mxu0 0.0
  %477 = vmatprep.subr.mxu0 0.0
  %478 = vmatpush1.xpose.msra.mxu0 0.0
  %479 = vmatprep.subr.mxu0 0.0
  %480 = vmatpush1.xpose.msra.mxu0 0.0
  %481 = vmatprep.subr.mxu0 0.0
  %482 = vmatpush1.xpose.msra.mxu0 0.0
  %483 = vmatprep.subr.mxu0 0.0
  %484 = vmatpush1.xpose.msra.mxu0 0.0
  %485 = vmatprep.subr.mxu0 0.0
  %486 = vmatpush1.xpose.msra.mxu0 0.0
  %487 = vmatprep.subr.mxu0 0.0
  %488 = vmatpush1.xpose.msra.mxu0 0.0
  %489 = vmatprep.subr.mxu0 0.0
  %490 = vmatpush1.xpose.msra.mxu0 0.0
  %491 = vmatprep.subr.mxu0 0.0
  %492 = vmatpush1.xpose.msra.mxu0 0.0
  %493 = vmatprep.subr.mxu0 0.0
  %494 = vmatpush1.xpose.msra.mxu0 0.0
  %495 = vmatprep.subr.mxu0 0.0
  %496 = vmatpush1.xpose.msra.mxu0 0.0
  %497 = vmatprep.subr.mxu0 0.0
  %498 = vmatpush1.xpose.msra.mxu0 0.0
  %499 = vmatprep.subr.mxu0 0.0
  %500 = vmatpush1.xpose.msra.mxu0 0.0
  %501 = vmatprep.subr.mxu0 0.0
  %502 = vmatpush1.xpose.msra.mxu0 0.0
  %503 = vmatprep.subr.mxu0 0.0
  %504 = vmatpush1.xpose.msra.mxu0 0.0
  %505 = vmatprep.subr.mxu0 0.0
  %506 = vmatpush1.xpose.msra.mxu0 0.0
  %507 = vmatprep.mubr.f32.mxu0 0.0
  %508 = vmatmul.mubr.f32.gmra.mrb[0].mxu0 %v407
  %v509 = vpop.f32.mrb[0].mxu0
  %v510 = vadd.f32 %v43, %v509
  %v511 = vpop.f32.mrb[0].mxu0
  %512 = vmatprep.mubr.f32.mxu0 0.0
  %513 = vmatmul.mubr.f32.gmra.mrb[0].mxu0 %v408
  %v514 = vpop.f32.mrb[0].mxu0
  %v515 = vadd.f32 %v44, %v514
  %v516 = vpop.f32.mrb[0].mxu0
  %517 = vmatprep.mubr.f32.mxu0 0.0
  %518 = vmatmul.mubr.f32.gmra.mrb[0].mxu0 %v409
  %v519 = vpop.f32.mrb[0].mxu0
  %v520 = vadd.f32 %v45, %v519
  %v521 = vpop.f32.mrb[0].mxu0
  %522 = vmatprep.mubr.f32.mxu0 0.0
  %523 = vmatmul.mubr.f32.gmra.mrb[0].mxu0 %v410
  %v524 = vpop.f32.mrb[0].mxu0
  %v525 = vadd.f32 %v46, %v524
  %v526 = vpop.f32.mrb[0].mxu0
  %527 = vdwg.mxu0
  %528 = vmax.xlane.f32.xlu0 %v510
  %v529 = vpop.xlane.xlu0 %528
  %530 = vmax.xlane.f32.xlu0 %v515
  %v531 = vpop.xlane.xlu0 %530
  %532 = vmax.xlane.f32.xlu0 %v520
  %v533 = vpop.xlane.xlu0 %532
  %534 = vmax.xlane.f32.xlu0 %v525
  %v535 = vpop.xlane.xlu0 %534
  %v536 = vsub.f32 %v510, %v529
  %v537 = vsub.f32 %v515, %v531
  %v538 = vsub.f32 %v520, %v533
  %v539 = vsub.f32 %v525, %v535
  %v540 = vmul.f32 %v536, 1.442695
  %v541 = vpow.pop %v540
  %v542 = vmul.f32 %v537, 1.442695
  %v543 = vpow.pop %v542
  %v544 = vmul.f32 %v538, 1.442695
  %v545 = vpow.pop %v544
  %v546 = vmul.f32 %v539, 1.442695
  %v547 = vpow.pop %v546
  %548 = vmatprep.subr.mxu0 0.0
  %549 = vmatpush1.msra.mxu0 %v47
  %550 = vmatprep.subr.mxu0 0.0
  %551 = vmatpush1.msra.mxu0 %v48
  %552 = vmatprep.subr.mxu0 0.0
  %553 = vmatpush1.msra.mxu0 %v49
  %554 = vmatprep.subr.mxu0 0.0
  %555 = vmatpush1.msra.mxu0 %v50
  %556 = vmatprep.subr.mxu0 0.0
  %557 = vmatpush1.msra.mxu0 %v51
  %558 = vmatprep.subr.mxu0 0.0
  %559 = vmatpush1.msra.mxu0 %v52
  %560 = vmatprep.subr.mxu0 0.0
  %561 = vmatpush1.msra.mxu0 %v53
  %562 = vmatprep.subr.mxu0 0.0
  %563 = vmatpush1.msra.mxu0 %v54
  %564 = vmatprep.subr.mxu0 0.0
  %565 = vmatpush1.msra.mxu0 %v55
  %566 = vmatprep.subr.mxu0 0.0
  %567 = vmatpush1.msra.mxu0 %v56
  %568 = vmatprep.subr.mxu0 0.0
  %569 = vmatpush1.msra.mxu0 %v57
  %570 = vmatprep.subr.mxu0 0.0
  %571 = vmatpush1.msra.mxu0 %v58
  %572 = vmatprep.subr.mxu0 0.0
  %573 = vmatpush1.msra.mxu0 %v59
  %574 = vmatprep.subr.mxu0 0.0
  %575 = vmatpush1.msra.mxu0 %v60
  %576 = vmatprep.subr.mxu0 0.0
  %577 = vmatpush1.msra.mxu0 %v61
  %578 = vmatprep.subr.mxu0 0.0
  %579 = vmatpush1.msra.mxu0 %v62
  %580 = vmatprep.subr.mxu0 0.0
  %581 = vmatpush1.msra.mxu0 0.0
  %582 = vmatprep.subr.mxu0 0.0
  %583 = vmatpush1.msra.mxu0 0.0
  %584 = vmatprep.subr.mxu0 0.0
  %585 = vmatpush1.msra.mxu0 0.0
  %586 = vmatprep.subr.mxu0 0.0
  %587 = vmatpush1.msra.mxu0 0.0
  %588 = vmatprep.subr.mxu0 0.0
  %589 = vmatpush1.msra.mxu0 0.0
  %590 = vmatprep.subr.mxu0 0.0
  %591 = vmatpush1.msra.mxu0 0.0
  %592 = vmatprep.subr.mxu0 0.0
  %593 = vmatpush1.msra.mxu0 0.0
  %594 = vmatprep.subr.mxu0 0.0
  %595 = vmatpush1.msra.mxu0 0.0
  %596 = vmatprep.subr.mxu0 0.0
  %597 = vmatpush1.msra.mxu0 0.0
  %598 = vmatprep.subr.mxu0 0.0
  %599 = vmatpush1.msra.mxu0 0.0
  %600 = vmatprep.subr.mxu0 0.0
  %601 = vmatpush1.msra.mxu0 0.0
  %602 = vmatprep.subr.mxu0 0.0
  %603 = vmatpush1.msra.mxu0 0.0
  %604 = vmatprep.subr.mxu0 0.0
  %605 = vmatpush1.msra.mxu0 0.0
  %606 = vmatprep.subr.mxu0 0.0
  %607 = vmatpush1.msra.mxu0 0.0
  %608 = vmatprep.subr.mxu0 0.0
  %609 = vmatpush1.msra.mxu0 0.0
  %610 = vmatprep.subr.mxu0 0.0
  %611 = vmatpush1.msra.mxu0 0.0
  %612 = vmatprep.mubr.f32.mxu0 0.0
  %613 = vmatmul.mubr.f32.gmra.mrb[0].mxu0 %v541
  %v614 = vpop.f32.mrb[0].mxu0
  %v615 = vadd.f32 0.0, %v614
  %v616 = vpop.f32.mrb[0].mxu0
  %617 = vmatprep.mubr.f32.mxu0 0.0
  %618 = vmatmul.mubr.f32.gmra.mrb[0].mxu0 %v543
  %v619 = vpop.f32.mrb[0].mxu0
  %v620 = vadd.f32 0.0, %v619
  %v621 = vpop.f32.mrb[0].mxu0
  %622 = vmatprep.mubr.f32.mxu0 0.0
  %623 = vmatmul.mubr.f32.gmra.mrb[0].mxu0 %v545
  %v624 = vpop.f32.mrb[0].mxu0
  %v625 = vadd.f32 0.0, %v624
  %v626 = vpop.f32.mrb[0].mxu0
  %627 = vmatprep.mubr.f32.mxu0 0.0
  %628 = vmatmul.mubr.f32.gmra.mrb[0].mxu0 %v547
  %v629 = vpop.f32.mrb[0].mxu0
  %v630 = vadd.f32 0.0, %v629
  %v631 = vpop.f32.mrb[0].mxu0
  %632 = vdwg.mxu0
  %v633 = vrcp.pop %v615
  %v634 = vrcp.pop %v620
  %v635 = vrcp.pop %v625
  %v636 = vrcp.pop %v630
  %v637 = vmul.f32 %v541, %v633
  %v638 = vmul.f32 %v543, %v634
  %v639 = vmul.f32 %v545, %v635
  %v640 = vmul.f32 %v547, %v636
  %641 = vmatprep.subr.mxu0 0.0
  %642 = vmatpush1.msra.mxu0 %v427
  %643 = vmatprep.subr.mxu0 0.0
  %644 = vmatpush1.msra.mxu0 %v428
  %645 = vmatprep.subr.mxu0 0.0
  %646 = vmatpush1.msra.mxu0 %v429
  %647 = vmatprep.subr.mxu0 0.0
  %648 = vmatpush1.msra.mxu0 %v430
  %649 = vmatprep.subr.mxu0 0.0
  %650 = vmatpush1.msra.mxu0 %v431
  %651 = vmatprep.subr.mxu0 0.0
  %652 = vmatpush1.msra.mxu0 %v432
  %653 = vmatprep.subr.mxu0 0.0
  %654 = vmatpush1.msra.mxu0 %v433
  %655 = vmatprep.subr.mxu0 0.0
  %656 = vmatpush1.msra.mxu0 %v434
  %657 = vmatprep.subr.mxu0 0.0
  %658 = vmatpush1.msra.mxu0 %v435
  %659 = vmatprep.subr.mxu0 0.0
  %660 = vmatpush1.msra.mxu0 %v436
  %661 = vmatprep.subr.mxu0 0.0
  %662 = vmatpush1.msra.mxu0 %v437
  %663 = vmatprep.subr.mxu0 0.0
  %664 = vmatpush1.msra.mxu0 %v438
  %665 = vmatprep.subr.mxu0 0.0
  %666 = vmatpush1.msra.mxu0 %v439
  %667 = vmatprep.subr.mxu0 0.0
  %668 = vmatpush1.msra.mxu0 %v440
  %669 = vmatprep.subr.mxu0 0.0
  %670 = vmatpush1.msra.mxu0 %v441
  %671 = vmatprep.subr.mxu0 0.0
  %672 = vmatpush1.msra.mxu0 %v442
  %673 = vmatprep.subr.mxu0 0.0
  %674 = vmatpush1.msra.mxu0 0.0
  %675 = vmatprep.subr.mxu0 0.0
  %676 = vmatpush1.msra.mxu0 0.0
  %677 = vmatprep.subr.mxu0 0.0
  %678 = vmatpush1.msra.mxu0 0.0
  %679 = vmatprep.subr.mxu0 0.0
  %680 = vmatpush1.msra.mxu0 0.0
  %681 = vmatprep.subr.mxu0 0.0
  %682 = vmatpush1.msra.mxu0 0.0
  %683 = vmatprep.subr.mxu0 0.0
  %684 = vmatpush1.msra.mxu0 0.0
  %685 = vmatprep.subr.mxu0 0.0
  %686 = vmatpush1.msra.mxu0 0.0
  %687 = vmatprep.subr.mxu0 0.0
  %688 = vmatpush1.msra.mxu0 0.0
  %689 = vmatprep.subr.mxu0 0.0
  %690 = vmatpush1.msra.mxu0 0.0
  %691 = vmatprep.subr.mxu0 0.0
  %692 = vmatpush1.msra.mxu0 0.0
  %693 = vmatprep.subr.mxu0 0.0
  %694 = vmatpush1.msra.mxu0 0.0
  %695 = vmatprep.subr.mxu0 0.0
  %696 = vmatpush1.msra.mxu0 0.0
  %697 = vmatprep.subr.mxu0 0.0
  %698 = vmatpush1.msra.mxu0 0.0
  %699 = vmatprep.subr.mxu0 0.0
  %700 = vmatpush1.msra.mxu0 0.0
  %701 = vmatprep.subr.mxu0 0.0
  %702 = vmatpush1.msra.mxu0 0.0
  %703 = vmatprep.subr.mxu0 0.0
  %704 = vmatpush1.msra.mxu0 0.0
  %705 = vmatprep.mubr.f32.mxu0 0.0
  %706 = vmatmul.mubr.f32.gmra.mrb[0].mxu0 %v637
  %v707 = vpop.f32.mrb[0].mxu0
  %v708 = vadd.f32 0.0, %v707
  %v709 = vpop.f32.mrb[0].mxu0
  %710 = vmatprep.mubr.f32.mxu0 0.0
  %711 = vmatmul.mubr.f32.gmra.mrb[0].mxu0 %v638
  %v712 = vpop.f32.mrb[0].mxu0
  %v713 = vadd.f32 0.0, %v712
  %v714 = vpop.f32.mrb[0].mxu0
  %715 = vmatprep.mubr.f32.mxu0 0.0
  %716 = vmatmul.mubr.f32.gmra.mrb[0].mxu0 %v639
  %v717 = vpop.f32.mrb[0].mxu0
  %v718 = vadd.f32 0.0, %v717
  %v719 = vpop.f32.mrb[0].mxu0
  %720 = vmatprep.mubr.f32.mxu0 0.0
  %721 = vmatmul.mubr.f32.gmra.mrb[0].mxu0 %v640
  %v722 = vpop.f32.mrb[0].mxu0
  %v723 = vadd.f32 0.0, %v722
  %v724 = vpop.f32.mrb[0].mxu0
  %725 = vdwg.mxu0
  %v726 = vpack.c.bf16 %v713, %v708
  %v727 = vpack.c.bf16 %v723, %v718
  %v728 = vld [vmem:[%s7] sm:$0xf]
  %v729 = vld [vmem:[%s7 + $0x4] sm:$0xf]
  %v730 = vld [vmem:[%s7 + $0x8] sm:$0xf]
  %v731 = vld [vmem:[%s7 + $0xc] sm:$0xf]
  %v732 = vld [vmem:[%s7 + $0x10] sm:$0xf]
  %v733 = vld [vmem:[%s7 + $0x14] sm:$0xf]
  %v734 = vld [vmem:[%s7 + $0x18] sm:$0xf]
  %v735 = vld [vmem:[%s7 + $0x1c] sm:$0xf]
  %v736 = vld [vmem:[%s7 + $0x20] sm:$0xf]
  %v737 = vld [vmem:[%s7 + $0x24] sm:$0xf]
  %v738 = vld [vmem:[%s7 + $0x28] sm:$0xf]
  %v739 = vld [vmem:[%s7 + $0x2c] sm:$0xf]
  %v740 = vld [vmem:[%s7 + $0x30] sm:$0xf]
  %v741 = vld [vmem:[%s7 + $0x34] sm:$0xf]
  %v742 = vld [vmem:[%s7 + $0x38] sm:$0xf]
  %v743 = vld [vmem:[%s7 + $0x3c] sm:$0xf]
  %v744 = vlaneseq
  %v745 = vshrl.u32 %v744, 7
  %v746 = vsub.s32 2, %v745
  %v747 = vrot.slane %v63, %v746
  %v764 = vunpack.c.l.b16 %v728
  %v765 = vunpack.c.l.b16 %v729
  %v766 = vunpack.c.l.b16 %v730
  %v767 = vunpack.c.l.b16 %v731
  %v768 = vunpack.c.l.b16 %v732
  %v769 = vunpack.c.l.b16 %v733
  %v770 = vunpack.c.l.b16 %v734
  %v771 = vunpack.c.l.b16 %v735
  %v772 = vunpack.c.l.b16 %v736
  %v773 = vunpack.c.l.b16 %v737
  %v774 = vunpack.c.l.b16 %v738
  %v775 = vunpack.c.l.b16 %v739
  %v776 = vunpack.c.l.b16 %v740
  %v777 = vunpack.c.l.b16 %v741
  %v778 = vunpack.c.l.b16 %v742
  %v779 = vunpack.c.l.b16 %v743
  %v780 = vpack.c.b16 %v765, %v764
  %v781 = vpack.c.b16 %v767, %v766
  %v782 = vpack.c.b16 %v769, %v768
  %v783 = vpack.c.b16 %v771, %v770
  %v784 = vpack.c.b16 %v773, %v772
  %v785 = vpack.c.b16 %v775, %v774
  %v786 = vpack.c.b16 %v777, %v776
  %v787 = vpack.c.b16 %v779, %v778
  %796 = vmatprep.subr.bf16.mxu0 0
  %797 = vmatpush1.bf16.msra.mxu0 %v780
  %798 = vmatprep.subr.bf16.mxu0 0
  %799 = vmatpush1.bf16.msra.mxu0 %v781
  %800 = vmatprep.subr.bf16.mxu0 0
  %801 = vmatpush1.bf16.msra.mxu0 %v782
  %802 = vmatprep.subr.bf16.mxu0 0
  %803 = vmatpush1.bf16.msra.mxu0 %v783
  %804 = vmatprep.subr.bf16.mxu0 0
  %805 = vmatpush1.bf16.msra.mxu0 %v784
  %806 = vmatprep.subr.bf16.mxu0 0
  %807 = vmatpush1.bf16.msra.mxu0 %v785
  %808 = vmatprep.subr.bf16.mxu0 0
  %809 = vmatpush1.bf16.msra.mxu0 %v786
  %810 = vmatprep.subr.bf16.mxu0 0
  %811 = vmatpush1.bf16.msra.mxu0 %v787
  %812 = vmatprep.subr.bf16.mxu0 0
  %813 = vmatpush1.bf16.msra.mxu0 0
  %814 = vmatprep.subr.bf16.mxu0 0
  %815 = vmatpush1.bf16.msra.mxu0 0
  %816 = vmatprep.subr.bf16.mxu0 0
  %817 = vmatpush1.bf16.msra.mxu0 0
  %818 = vmatprep.subr.bf16.mxu0 0
  %819 = vmatpush1.bf16.msra.mxu0 0
  %820 = vmatprep.subr.bf16.mxu0 0
  %821 = vmatpush1.bf16.msra.mxu0 0
  %822 = vmatprep.subr.bf16.mxu0 0
  %823 = vmatpush1.bf16.msra.mxu0 0
  %824 = vmatprep.subr.bf16.mxu0 0
  %825 = vmatpush1.bf16.msra.mxu0 0
  %826 = vmatprep.subr.bf16.mxu0 0
  %827 = vmatpush1.bf16.msra.mxu0 0
  %828 = vmatprep.mubr.bf16.mxu0 0
  %829 = vmatmul.mubr.bf16.gmra.mrb[0].mxu0 %v726
  %v830 = vpop.f32.mrb[0].mxu0
  %v831 = vadd.f32 %v747, %v830
  %v832 = vpop.f32.mrb[0].mxu0
  %v833 = vpop.f32.mrb[0].mxu0
  %v834 = vadd.f32 %v747, %v833
  %v835 = vpop.f32.mrb[0].mxu0
  %836 = vmatprep.mubr.bf16.mxu0 0
  %837 = vmatmul.mubr.bf16.gmra.mrb[0].mxu0 %v727
  %v838 = vpop.f32.mrb[0].mxu0
  %v839 = vadd.f32 %v747, %v838
  %v840 = vpop.f32.mrb[0].mxu0
  %v841 = vpop.f32.mrb[0].mxu0
  %v842 = vadd.f32 %v747, %v841
  %v843 = vpop.f32.mrb[0].mxu0
  %844 = vdwg.mxu0
  %v845 = vadd.f32 %v831, %v122
  %v846 = vadd.f32 %v834, %v123
  %v847 = vadd.f32 %v839, %v124
  %v848 = vadd.f32 %v842, %v125
  %849 = vadd.xlane.f32.xlu0 %v845
  %v850 = vpop.xlane.xlu0 %849
  %851 = vadd.xlane.f32.xlu0 %v846
  %v852 = vpop.xlane.xlu0 %851
  %853 = vadd.xlane.f32.xlu0 %v847
  %v854 = vpop.xlane.xlu0 %853
  %855 = vadd.xlane.f32.xlu0 %v848
  %v856 = vpop.xlane.xlu0 %855
  %v857 = vmul.f32 %v850, %v73
  %v858 = vmul.f32 %v852, %v73
  %v859 = vmul.f32 %v854, %v73
  %v860 = vmul.f32 %v856, %v73
  %v861 = vsub.f32 %v845, %v857
  %v862 = vsub.f32 %v846, %v858
  %v863 = vsub.f32 %v847, %v859
  %v864 = vsub.f32 %v848, %v860
  %v865 = vmul.f32 %v861, %v861
  %v866 = vmul.f32 %v862, %v862
  %v867 = vmul.f32 %v863, %v863
  %v868 = vmul.f32 %v864, %v864
  %869 = vadd.xlane.f32.xlu0 %v865
  %v870 = vpop.xlane.xlu0 %869
  %871 = vadd.xlane.f32.xlu0 %v866
  %v872 = vpop.xlane.xlu0 %871
  %873 = vadd.xlane.f32.xlu0 %v867
  %v874 = vpop.xlane.xlu0 %873
  %875 = vadd.xlane.f32.xlu0 %v868
  %v876 = vpop.xlane.xlu0 %875
  %v877 = vmul.f32 %v870, %v73
  %v878 = vmul.f32 %v872, %v73
  %v879 = vmul.f32 %v874, %v73
  %v880 = vmul.f32 %v876, %v73
  %v881 = vadd.f32 %v877, 1e-12
  %v882 = vadd.f32 %v878, 1e-12
  %v883 = vadd.f32 %v879, 1e-12
  %v884 = vadd.f32 %v880, 1e-12
  %v885 = vrsqrt.pop %v881
  %v886 = vrsqrt.pop %v882
  %v887 = vrsqrt.pop %v883
  %v888 = vrsqrt.pop %v884
  %v889 = vmul.f32 %v861, %v885
  %v890 = vmul.f32 %v862, %v886
  %v891 = vmul.f32 %v863, %v887
  %v892 = vmul.f32 %v864, %v888
  %v893 = vlaneseq
  %v894 = vshrl.u32 %v893, 7
  %v895 = vsub.s32 3, %v894
  %v896 = vrot.slane %v63, %v895
  %v897 = vmul.f32 %v889, %v896
  %v898 = vmul.f32 %v890, %v896
  %v899 = vmul.f32 %v891, %v896
  %v900 = vmul.f32 %v892, %v896
  %v901 = vlaneseq
  %v902 = vshrl.u32 %v901, 7
  %v903 = vsub.s32 4, %v902
  %v904 = vrot.slane %v63, %v903
  %v905 = vadd.f32 %v897, %v904
  %v906 = vadd.f32 %v898, %v904
  %v907 = vadd.f32 %v899, %v904
  %v908 = vadd.f32 %v900, %v904
  %v909 = vpack.c.bf16 %v906, %v905
  %v910 = vpack.c.bf16 %v908, %v907
  %v911 = vld [vmem:[%s8] sm:$0xff]
  %v912 = vld [vmem:[%s8 + $0x8] sm:$0xff]
  %v913 = vld [vmem:[%s8 + $0x10] sm:$0xff]
  %v914 = vld [vmem:[%s8 + $0x18] sm:$0xff]
  %v915 = vld [vmem:[%s8 + $0x20] sm:$0xff]
  %v916 = vld [vmem:[%s8 + $0x28] sm:$0xff]
  %v917 = vld [vmem:[%s8 + $0x30] sm:$0xff]
  %v918 = vld [vmem:[%s8 + $0x38] sm:$0xff]
  %v919 = vld [vmem:[%s8 + $0x40] sm:$0xff]
  %v920 = vld [vmem:[%s8 + $0x48] sm:$0xff]
  %v921 = vld [vmem:[%s8 + $0x50] sm:$0xff]
  %v922 = vld [vmem:[%s8 + $0x58] sm:$0xff]
  %v923 = vld [vmem:[%s8 + $0x60] sm:$0xff]
  %v924 = vld [vmem:[%s8 + $0x68] sm:$0xff]
  %v925 = vld [vmem:[%s8 + $0x70] sm:$0xff]
  %v926 = vld [vmem:[%s8 + $0x78] sm:$0xff]
  %v927 = vld [vmem:[%s5] sm:$0x3]
  %v929 = vlaneseq
  %v930 = vshrl.u32 %v929, 7
  %v931 = vsub.s32 0, %v930
  %v932 = vrot.slane %v927, %v931
  %v933 = vlaneseq
  %v934 = vshrl.u32 %v933, 7
  %v935 = vsub.s32 1, %v934
  %v936 = vrot.slane %v927, %v935
  %v955 = vunpack.c.l.b16 %v911
  %v956 = vunpack.c.h.b16 %v911
  %v957 = vunpack.c.l.b16 %v912
  %v958 = vunpack.c.h.b16 %v912
  %v959 = vunpack.c.l.b16 %v913
  %v960 = vunpack.c.h.b16 %v913
  %v961 = vunpack.c.l.b16 %v914
  %v962 = vunpack.c.h.b16 %v914
  %v963 = vunpack.c.l.b16 %v915
  %v964 = vunpack.c.h.b16 %v915
  %v965 = vunpack.c.l.b16 %v916
  %v966 = vunpack.c.h.b16 %v916
  %v967 = vunpack.c.l.b16 %v917
  %v968 = vunpack.c.h.b16 %v917
  %v969 = vunpack.c.l.b16 %v918
  %v970 = vunpack.c.h.b16 %v918
  %v971 = vunpack.c.l.b16 %v919
  %v972 = vunpack.c.h.b16 %v919
  %v973 = vunpack.c.l.b16 %v920
  %v974 = vunpack.c.h.b16 %v920
  %v975 = vunpack.c.l.b16 %v921
  %v976 = vunpack.c.h.b16 %v921
  %v977 = vunpack.c.l.b16 %v922
  %v978 = vunpack.c.h.b16 %v922
  %v979 = vunpack.c.l.b16 %v923
  %v980 = vunpack.c.h.b16 %v923
  %v981 = vunpack.c.l.b16 %v924
  %v982 = vunpack.c.h.b16 %v924
  %v983 = vunpack.c.l.b16 %v925
  %v984 = vunpack.c.h.b16 %v925
  %v985 = vunpack.c.l.b16 %v926
  %v986 = vunpack.c.h.b16 %v926
  %v987 = vpack.c.b16 %v957, %v955
  %v988 = vpack.c.b16 %v958, %v956
  %v989 = vpack.c.b16 %v961, %v959
  %v990 = vpack.c.b16 %v962, %v960
  %v991 = vpack.c.b16 %v965, %v963
  %v992 = vpack.c.b16 %v966, %v964
  %v993 = vpack.c.b16 %v969, %v967
  %v994 = vpack.c.b16 %v970, %v968
  %v995 = vpack.c.b16 %v973, %v971
  %v996 = vpack.c.b16 %v974, %v972
  %v997 = vpack.c.b16 %v977, %v975
  %v998 = vpack.c.b16 %v978, %v976
  %v999 = vpack.c.b16 %v981, %v979
  %v1000 = vpack.c.b16 %v982, %v980
  %v1001 = vpack.c.b16 %v985, %v983
  %v1002 = vpack.c.b16 %v986, %v984
  %1019 = vmatprep.subr.bf16.mxu0 %v988
  %1020 = vmatpush1.bf16.msra.mxu0 %v987
  %1021 = vmatprep.subr.bf16.mxu0 %v990
  %1022 = vmatpush1.bf16.msra.mxu0 %v989
  %1023 = vmatprep.subr.bf16.mxu0 %v992
  %1024 = vmatpush1.bf16.msra.mxu0 %v991
  %1025 = vmatprep.subr.bf16.mxu0 %v994
  %1026 = vmatpush1.bf16.msra.mxu0 %v993
  %1027 = vmatprep.subr.bf16.mxu0 %v996
  %1028 = vmatpush1.bf16.msra.mxu0 %v995
  %1029 = vmatprep.subr.bf16.mxu0 %v998
  %1030 = vmatpush1.bf16.msra.mxu0 %v997
  %1031 = vmatprep.subr.bf16.mxu0 %v1000
  %1032 = vmatpush1.bf16.msra.mxu0 %v999
  %1033 = vmatprep.subr.bf16.mxu0 %v1002
  %1034 = vmatpush1.bf16.msra.mxu0 %v1001
  %1035 = vmatprep.subr.bf16.mxu0 0
  %1036 = vmatpush1.bf16.msra.mxu0 0
  %1037 = vmatprep.subr.bf16.mxu0 0
  %1038 = vmatpush1.bf16.msra.mxu0 0
  %1039 = vmatprep.subr.bf16.mxu0 0
  %1040 = vmatpush1.bf16.msra.mxu0 0
  %1041 = vmatprep.subr.bf16.mxu0 0
  %1042 = vmatpush1.bf16.msra.mxu0 0
  %1043 = vmatprep.subr.bf16.mxu0 0
  %1044 = vmatpush1.bf16.msra.mxu0 0
  %1045 = vmatprep.subr.bf16.mxu0 0
  %1046 = vmatpush1.bf16.msra.mxu0 0
  %1047 = vmatprep.subr.bf16.mxu0 0
  %1048 = vmatpush1.bf16.msra.mxu0 0
  %1049 = vmatprep.subr.bf16.mxu0 0
  %1050 = vmatpush1.bf16.msra.mxu0 0
  %1051 = vmatprep.mubr.bf16.mxu0 0
  %1052 = vmatmul.mubr.bf16.gmra.mrb[0].mxu0 %v909
  %v1053 = vpop.f32.mrb[0].mxu0
  %v1054 = vadd.f32 %v932, %v1053
  %v1055 = vpop.f32.mrb[0].mxu0
  %v1056 = vadd.f32 %v936, %v1055
  %v1057 = vpop.f32.mrb[0].mxu0
  %v1058 = vadd.f32 %v932, %v1057
  %v1059 = vpop.f32.mrb[0].mxu0
  %v1060 = vadd.f32 %v936, %v1059
  %1061 = vmatprep.mubr.bf16.mxu0 0
  %1062 = vmatmul.mubr.bf16.gmra.mrb[0].mxu0 %v910
  %v1063 = vpop.f32.mrb[0].mxu0
  %v1064 = vadd.f32 %v932, %v1063
  %v1065 = vpop.f32.mrb[0].mxu0
  %v1066 = vadd.f32 %v936, %v1065
  %v1067 = vpop.f32.mrb[0].mxu0
  %v1068 = vadd.f32 %v932, %v1067
  %v1069 = vpop.f32.mrb[0].mxu0
  %v1070 = vadd.f32 %v936, %v1069
  %1071 = vdwg.mxu0
  %v1072 = vmul.f32 %v1054, 0.5
  %v1073 = vmul.f32 %v1056, 0.5
  %v1074 = vmul.f32 %v1058, 0.5
  %v1075 = vmul.f32 %v1060, 0.5
  %v1076 = vmul.f32 %v1064, 0.5
  %v1077 = vmul.f32 %v1066, 0.5
  %v1078 = vmul.f32 %v1068, 0.5
  %v1079 = vmul.f32 %v1070, 0.5
  %v1080 = vmul.f32 %v1054, 0.044715
  %v1081 = vmul.f32 %v1056, 0.044715
  %v1082 = vmul.f32 %v1058, 0.044715
  %v1083 = vmul.f32 %v1060, 0.044715
  %v1084 = vmul.f32 %v1064, 0.044715
  %v1085 = vmul.f32 %v1066, 0.044715
  %v1086 = vmul.f32 %v1068, 0.044715
  %v1087 = vmul.f32 %v1070, 0.044715
  %v1088 = vmul.f32 %v1080, %v1054
  %v1089 = vmul.f32 %v1081, %v1056
  %v1090 = vmul.f32 %v1082, %v1058
  %v1091 = vmul.f32 %v1083, %v1060
  %v1092 = vmul.f32 %v1084, %v1064
  %v1093 = vmul.f32 %v1085, %v1066
  %v1094 = vmul.f32 %v1086, %v1068
  %v1095 = vmul.f32 %v1087, %v1070
  %v1096 = vmul.f32 %v1088, %v1054
  %v1097 = vmul.f32 %v1089, %v1056
  %v1098 = vmul.f32 %v1090, %v1058
  %v1099 = vmul.f32 %v1091, %v1060
  %v1100 = vmul.f32 %v1092, %v1064
  %v1101 = vmul.f32 %v1093, %v1066
  %v1102 = vmul.f32 %v1094, %v1068
  %v1103 = vmul.f32 %v1095, %v1070
  %v1104 = vadd.f32 %v1054, %v1096
  %v1105 = vadd.f32 %v1056, %v1097
  %v1106 = vadd.f32 %v1058, %v1098
  %v1107 = vadd.f32 %v1060, %v1099
  %v1108 = vadd.f32 %v1064, %v1100
  %v1109 = vadd.f32 %v1066, %v1101
  %v1110 = vadd.f32 %v1068, %v1102
  %v1111 = vadd.f32 %v1070, %v1103
  %v1112 = vmul.f32 %v1104, 0.7978846
  %v1113 = vmul.f32 %v1105, 0.7978846
  %v1114 = vmul.f32 %v1106, 0.7978846
  %v1115 = vmul.f32 %v1107, 0.7978846
  %v1116 = vmul.f32 %v1108, 0.7978846
  %v1117 = vmul.f32 %v1109, 0.7978846
  %v1118 = vmul.f32 %v1110, 0.7978846
  %v1119 = vmul.f32 %v1111, 0.7978846
  %v1120 = vtanh.pop %v1112
  %v1121 = vtanh.pop %v1113
  %v1122 = vtanh.pop %v1114
  %v1123 = vtanh.pop %v1115
  %v1124 = vtanh.pop %v1116
  %v1125 = vtanh.pop %v1117
  %v1126 = vtanh.pop %v1118
  %v1127 = vtanh.pop %v1119
  %v1128 = vadd.f32 %v1120, 1.0
  %v1129 = vadd.f32 %v1121, 1.0
  %v1130 = vadd.f32 %v1122, 1.0
  %v1131 = vadd.f32 %v1123, 1.0
  %v1132 = vadd.f32 %v1124, 1.0
  %v1133 = vadd.f32 %v1125, 1.0
  %v1134 = vadd.f32 %v1126, 1.0
  %v1135 = vadd.f32 %v1127, 1.0
  %v1136 = vmul.f32 %v1072, %v1128
  %v1137 = vmul.f32 %v1073, %v1129
  %v1138 = vmul.f32 %v1074, %v1130
  %v1139 = vmul.f32 %v1075, %v1131
  %v1140 = vmul.f32 %v1076, %v1132
  %v1141 = vmul.f32 %v1077, %v1133
  %v1142 = vmul.f32 %v1078, %v1134
  %v1143 = vmul.f32 %v1079, %v1135
  %v1144 = vpack.c.bf16 %v1138, %v1136
  %v1145 = vpack.c.bf16 %v1139, %v1137
  %v1146 = vpack.c.bf16 %v1142, %v1140
  %v1147 = vpack.c.bf16 %v1143, %v1141
  %v1148 = vld [vmem:[%s9] sm:$0xf]
  %v1149 = vld [vmem:[%s9 + $0x4] sm:$0xf]
  %v1150 = vld [vmem:[%s9 + $0x8] sm:$0xf]
  %v1151 = vld [vmem:[%s9 + $0xc] sm:$0xf]
  %v1152 = vld [vmem:[%s9 + $0x10] sm:$0xf]
  %v1153 = vld [vmem:[%s9 + $0x14] sm:$0xf]
  %v1154 = vld [vmem:[%s9 + $0x18] sm:$0xf]
  %v1155 = vld [vmem:[%s9 + $0x1c] sm:$0xf]
  %v1156 = vld [vmem:[%s9 + $0x20] sm:$0xf]
  %v1157 = vld [vmem:[%s9 + $0x24] sm:$0xf]
  %v1158 = vld [vmem:[%s9 + $0x28] sm:$0xf]
  %v1159 = vld [vmem:[%s9 + $0x2c] sm:$0xf]
  %v1160 = vld [vmem:[%s9 + $0x30] sm:$0xf]
  %v1161 = vld [vmem:[%s9 + $0x34] sm:$0xf]
  %v1162 = vld [vmem:[%s9 + $0x38] sm:$0xf]
  %v1163 = vld [vmem:[%s9 + $0x3c] sm:$0xf]
  %v1164 = vld [vmem:[%s9 + $0x40] sm:$0xf]
  %v1165 = vld [vmem:[%s9 + $0x44] sm:$0xf]
  %v1166 = vld [vmem:[%s9 + $0x48] sm:$0xf]
  %v1167 = vld [vmem:[%s9 + $0x4c] sm:$0xf]
  %v1168 = vld [vmem:[%s9 + $0x50] sm:$0xf]
  %v1169 = vld [vmem:[%s9 + $0x54] sm:$0xf]
  %v1170 = vld [vmem:[%s9 + $0x58] sm:$0xf]
  %v1171 = vld [vmem:[%s9 + $0x5c] sm:$0xf]
  %v1172 = vld [vmem:[%s9 + $0x60] sm:$0xf]
  %v1173 = vld [vmem:[%s9 + $0x64] sm:$0xf]
  %v1174 = vld [vmem:[%s9 + $0x68] sm:$0xf]
  %v1175 = vld [vmem:[%s9 + $0x6c] sm:$0xf]
  %v1176 = vld [vmem:[%s9 + $0x70] sm:$0xf]
  %v1177 = vld [vmem:[%s9 + $0x74] sm:$0xf]
  %v1178 = vld [vmem:[%s9 + $0x78] sm:$0xf]
  %v1179 = vld [vmem:[%s9 + $0x7c] sm:$0xf]
  %v1180 = vlaneseq
  %v1181 = vshrl.u32 %v1180, 7
  %v1182 = vsub.s32 5, %v1181
  %v1183 = vrot.slane %v63, %v1182
  %v1216 = vunpack.c.l.b16 %v1148
  %v1217 = vunpack.c.l.b16 %v1149
  %v1218 = vunpack.c.l.b16 %v1150
  %v1219 = vunpack.c.l.b16 %v1151
  %v1220 = vunpack.c.l.b16 %v1152
  %v1221 = vunpack.c.l.b16 %v1153
  %v1222 = vunpack.c.l.b16 %v1154
  %v1223 = vunpack.c.l.b16 %v1155
  %v1224 = vunpack.c.l.b16 %v1156
  %v1225 = vunpack.c.l.b16 %v1157
  %v1226 = vunpack.c.l.b16 %v1158
  %v1227 = vunpack.c.l.b16 %v1159
  %v1228 = vunpack.c.l.b16 %v1160
  %v1229 = vunpack.c.l.b16 %v1161
  %v1230 = vunpack.c.l.b16 %v1162
  %v1231 = vunpack.c.l.b16 %v1163
  %v1232 = vunpack.c.l.b16 %v1164
  %v1233 = vunpack.c.l.b16 %v1165
  %v1234 = vunpack.c.l.b16 %v1166
  %v1235 = vunpack.c.l.b16 %v1167
  %v1236 = vunpack.c.l.b16 %v1168
  %v1237 = vunpack.c.l.b16 %v1169
  %v1238 = vunpack.c.l.b16 %v1170
  %v1239 = vunpack.c.l.b16 %v1171
  %v1240 = vunpack.c.l.b16 %v1172
  %v1241 = vunpack.c.l.b16 %v1173
  %v1242 = vunpack.c.l.b16 %v1174
  %v1243 = vunpack.c.l.b16 %v1175
  %v1244 = vunpack.c.l.b16 %v1176
  %v1245 = vunpack.c.l.b16 %v1177
  %v1246 = vunpack.c.l.b16 %v1178
  %v1247 = vunpack.c.l.b16 %v1179
  %v1248 = vpack.c.b16 %v1217, %v1216
  %v1249 = vpack.c.b16 %v1219, %v1218
  %v1250 = vpack.c.b16 %v1221, %v1220
  %v1251 = vpack.c.b16 %v1223, %v1222
  %v1252 = vpack.c.b16 %v1225, %v1224
  %v1253 = vpack.c.b16 %v1227, %v1226
  %v1254 = vpack.c.b16 %v1229, %v1228
  %v1255 = vpack.c.b16 %v1231, %v1230
  %v1256 = vpack.c.b16 %v1233, %v1232
  %v1257 = vpack.c.b16 %v1235, %v1234
  %v1258 = vpack.c.b16 %v1237, %v1236
  %v1259 = vpack.c.b16 %v1239, %v1238
  %v1260 = vpack.c.b16 %v1241, %v1240
  %v1261 = vpack.c.b16 %v1243, %v1242
  %v1262 = vpack.c.b16 %v1245, %v1244
  %v1263 = vpack.c.b16 %v1247, %v1246
  %1280 = vmatprep.subr.bf16.mxu0 0
  %1281 = vmatpush1.bf16.msra.mxu0 %v1248
  %1282 = vmatprep.subr.bf16.mxu0 0
  %1283 = vmatpush1.bf16.msra.mxu0 %v1249
  %1284 = vmatprep.subr.bf16.mxu0 0
  %1285 = vmatpush1.bf16.msra.mxu0 %v1250
  %1286 = vmatprep.subr.bf16.mxu0 0
  %1287 = vmatpush1.bf16.msra.mxu0 %v1251
  %1288 = vmatprep.subr.bf16.mxu0 0
  %1289 = vmatpush1.bf16.msra.mxu0 %v1252
  %1290 = vmatprep.subr.bf16.mxu0 0
  %1291 = vmatpush1.bf16.msra.mxu0 %v1253
  %1292 = vmatprep.subr.bf16.mxu0 0
  %1293 = vmatpush1.bf16.msra.mxu0 %v1254
  %1294 = vmatprep.subr.bf16.mxu0 0
  %1295 = vmatpush1.bf16.msra.mxu0 %v1255
  %1296 = vmatprep.subr.bf16.mxu0 0
  %1297 = vmatpush1.bf16.msra.mxu0 %v1256
  %1298 = vmatprep.subr.bf16.mxu0 0
  %1299 = vmatpush1.bf16.msra.mxu0 %v1257
  %1300 = vmatprep.subr.bf16.mxu0 0
  %1301 = vmatpush1.bf16.msra.mxu0 %v1258
  %1302 = vmatprep.subr.bf16.mxu0 0
  %1303 = vmatpush1.bf16.msra.mxu0 %v1259
  %1304 = vmatprep.subr.bf16.mxu0 0
  %1305 = vmatpush1.bf16.msra.mxu0 %v1260
  %1306 = vmatprep.subr.bf16.mxu0 0
  %1307 = vmatpush1.bf16.msra.mxu0 %v1261
  %1308 = vmatprep.subr.bf16.mxu0 0
  %1309 = vmatpush1.bf16.msra.mxu0 %v1262
  %1310 = vmatprep.subr.bf16.mxu0 0
  %1311 = vmatpush1.bf16.msra.mxu0 %v1263
  %1312 = vmatprep.mubr.bf16.mxu0 %v1145
  %1313 = vmatmul.mubr.bf16.gmra.mrb[0].mxu0 %v1144
  %v1314 = vpop.f32.mrb[0].mxu0
  %v1315 = vadd.f32 %v1183, %v1314
  %v1316 = vpop.f32.mrb[0].mxu0
  %v1317 = vpop.f32.mrb[0].mxu0
  %v1318 = vadd.f32 %v1183, %v1317
  %v1319 = vpop.f32.mrb[0].mxu0
  %1320 = vmatprep.mubr.bf16.mxu0 %v1147
  %1321 = vmatmul.mubr.bf16.gmra.mrb[0].mxu0 %v1146
  %v1322 = vpop.f32.mrb[0].mxu0
  %v1323 = vadd.f32 %v1183, %v1322
  %v1324 = vpop.f32.mrb[0].mxu0
  %v1325 = vpop.f32.mrb[0].mxu0
  %v1326 = vadd.f32 %v1183, %v1325
  %v1327 = vpop.f32.mrb[0].mxu0
  %1328 = vdwg.mxu0
  %v1329 = vadd.f32 %v1315, %v905
  %v1330 = vadd.f32 %v1318, %v906
  %v1331 = vadd.f32 %v1323, %v907
  %v1332 = vadd.f32 %v1326, %v908
  %1333 = vadd.xlane.f32.xlu0 %v1329
  %v1334 = vpop.xlane.xlu0 %1333
  %1335 = vadd.xlane.f32.xlu0 %v1330
  %v1336 = vpop.xlane.xlu0 %1335
  %1337 = vadd.xlane.f32.xlu0 %v1331
  %v1338 = vpop.xlane.xlu0 %1337
  %1339 = vadd.xlane.f32.xlu0 %v1332
  %v1340 = vpop.xlane.xlu0 %1339
  %v1341 = vmul.f32 %v1334, %v73
  %v1342 = vmul.f32 %v1336, %v73
  %v1343 = vmul.f32 %v1338, %v73
  %v1344 = vmul.f32 %v1340, %v73
  %v1345 = vsub.f32 %v1329, %v1341
  %v1346 = vsub.f32 %v1330, %v1342
  %v1347 = vsub.f32 %v1331, %v1343
  %v1348 = vsub.f32 %v1332, %v1344
  %v1349 = vmul.f32 %v1345, %v1345
  %v1350 = vmul.f32 %v1346, %v1346
  %v1351 = vmul.f32 %v1347, %v1347
  %v1352 = vmul.f32 %v1348, %v1348
  %1353 = vadd.xlane.f32.xlu0 %v1349
  %v1354 = vpop.xlane.xlu0 %1353
  %1355 = vadd.xlane.f32.xlu0 %v1350
  %v1356 = vpop.xlane.xlu0 %1355
  %1357 = vadd.xlane.f32.xlu0 %v1351
  %v1358 = vpop.xlane.xlu0 %1357
  %1359 = vadd.xlane.f32.xlu0 %v1352
  %v1360 = vpop.xlane.xlu0 %1359
  %v1361 = vmul.f32 %v1354, %v73
  %v1362 = vmul.f32 %v1356, %v73
  %v1363 = vmul.f32 %v1358, %v73
  %v1364 = vmul.f32 %v1360, %v73
  %v1365 = vadd.f32 %v1361, 1e-12
  %v1366 = vadd.f32 %v1362, 1e-12
  %v1367 = vadd.f32 %v1363, 1e-12
  %v1368 = vadd.f32 %v1364, 1e-12
  %v1369 = vrsqrt.pop %v1365
  %v1370 = vrsqrt.pop %v1366
  %v1371 = vrsqrt.pop %v1367
  %v1372 = vrsqrt.pop %v1368
  %v1373 = vmul.f32 %v1345, %v1369
  %v1374 = vmul.f32 %v1346, %v1370
  %v1375 = vmul.f32 %v1347, %v1371
  %v1376 = vmul.f32 %v1348, %v1372
  %v1377 = vlaneseq
  %v1378 = vshrl.u32 %v1377, 7
  %v1379 = vsub.s32 6, %v1378
  %v1380 = vrot.slane %v63, %v1379
  %v1381 = vmul.f32 %v1373, %v1380
  %v1382 = vmul.f32 %v1374, %v1380
  %v1383 = vmul.f32 %v1375, %v1380
  %v1384 = vmul.f32 %v1376, %v1380
  %v1385 = vlaneseq
  %v1386 = vshrl.u32 %v1385, 7
  %v1387 = vsub.s32 7, %v1386
  %v1388 = vrot.slane %v63, %v1387
  %v1389 = vadd.f32 %v1381, %v1388
  %v1390 = vadd.f32 %v1382, %v1388
  %v1391 = vadd.f32 %v1383, %v1388
  %v1392 = vadd.f32 %v1384, %v1388
  %v1393 = vpack.c.bf16 %v1390, %v1389
  %v1394 = vpack.c.bf16 %v1392, %v1391
  %s1395 = scalar_lea.vmem %s6, 192
  %v1396 = vld [vmem:[%s1395] sm:$0xff]
  %v1397 = vld [vmem:[%s1395 + $0x8] sm:$0xf]
  %v1398 = vld [vmem:[%s1395 + $0xc] sm:$0xff]
  %v1399 = vld [vmem:[%s1395 + $0x14] sm:$0xf]
  %v1400 = vld [vmem:[%s1395 + $0x18] sm:$0xff]
  %v1401 = vld [vmem:[%s1395 + $0x20] sm:$0xf]
  %v1402 = vld [vmem:[%s1395 + $0x24] sm:$0xff]
  %v1403 = vld [vmem:[%s1395 + $0x2c] sm:$0xf]
  %v1404 = vld [vmem:[%s1395 + $0x30] sm:$0xff]
  %v1405 = vld [vmem:[%s1395 + $0x38] sm:$0xf]
  %v1406 = vld [vmem:[%s1395 + $0x3c] sm:$0xff]
  %v1407 = vld [vmem:[%s1395 + $0x44] sm:$0xf]
  %v1408 = vld [vmem:[%s1395 + $0x48] sm:$0xff]
  %v1409 = vld [vmem:[%s1395 + $0x50] sm:$0xf]
  %v1410 = vld [vmem:[%s1395 + $0x54] sm:$0xff]
  %v1411 = vld [vmem:[%s1395 + $0x5c] sm:$0xf]
  %v1412 = vld [vmem:[%s1395 + $0x60] sm:$0xff]
  %v1413 = vld [vmem:[%s1395 + $0x68] sm:$0xf]
  %v1414 = vld [vmem:[%s1395 + $0x6c] sm:$0xff]
  %v1415 = vld [vmem:[%s1395 + $0x74] sm:$0xf]
  %v1416 = vld [vmem:[%s1395 + $0x78] sm:$0xff]
  %v1417 = vld [vmem:[%s1395 + $0x80] sm:$0xf]
  %v1418 = vld [vmem:[%s1395 + $0x84] sm:$0xff]
  %v1419 = vld [vmem:[%s1395 + $0x8c] sm:$0xf]
  %v1420 = vld [vmem:[%s1395 + $0x90] sm:$0xff]
  %v1421 = vld [vmem:[%s1395 + $0x98] sm:$0xf]
  %v1422 = vld [vmem:[%s1395 + $0x9c] sm:$0xff]
  %v1423 = vld [vmem:[%s1395 + $0xa4] sm:$0xf]
  %v1424 = vld [vmem:[%s1395 + $0xa8] sm:$0xff]
  %v1425 = vld [vmem:[%s1395 + $0xb0] sm:$0xf]
  %v1426 = vld [vmem:[%s1395 + $0xb4] sm:$0xff]
  %v1427 = vld [vmem:[%s1395 + $0xbc] sm:$0xf]
  %s1428 = scalar_lea.vmem %s4, 3
  %v1429 = vld [vmem:[%s1428] sm:$0x7]
  %v1431 = vlaneseq
  %v1432 = vshrl.u32 %v1431, 7
  %v1433 = vsub.s32 0, %v1432
  %v1434 = vrot.slane %v1429, %v1433
  %v1435 = vlaneseq
  %v1436 = vshrl.u32 %v1435, 7
  %v1437 = vsub.s32 1, %v1436
  %v1438 = vrot.slane %v1429, %v1437
  %v1439 = vlaneseq
  %v1440 = vshrl.u32 %v1439, 7
  %v1441 = vsub.s32 2, %v1440
  %v1442 = vrot.slane %v1429, %v1441
  %v1478 = vunpack.c.l.b16 %v1396
  %v1479 = vunpack.c.h.b16 %v1396
  %v1480 = vunpack.c.l.b16 %v1397
  %v1481 = vunpack.c.l.b16 %v1398
  %v1482 = vunpack.c.h.b16 %v1398
  %v1483 = vunpack.c.l.b16 %v1399
  %v1484 = vunpack.c.l.b16 %v1400
  %v1485 = vunpack.c.h.b16 %v1400
  %v1486 = vunpack.c.l.b16 %v1401
  %v1487 = vunpack.c.l.b16 %v1402
  %v1488 = vunpack.c.h.b16 %v1402
  %v1489 = vunpack.c.l.b16 %v1403
  %v1490 = vunpack.c.l.b16 %v1404
  %v1491 = vunpack.c.h.b16 %v1404
  %v1492 = vunpack.c.l.b16 %v1405
  %v1493 = vunpack.c.l.b16 %v1406
  %v1494 = vunpack.c.h.b16 %v1406
  %v1495 = vunpack.c.l.b16 %v1407
  %v1496 = vunpack.c.l.b16 %v1408
  %v1497 = vunpack.c.h.b16 %v1408
  %v1498 = vunpack.c.l.b16 %v1409
  %v1499 = vunpack.c.l.b16 %v1410
  %v1500 = vunpack.c.h.b16 %v1410
  %v1501 = vunpack.c.l.b16 %v1411
  %v1502 = vunpack.c.l.b16 %v1412
  %v1503 = vunpack.c.h.b16 %v1412
  %v1504 = vunpack.c.l.b16 %v1413
  %v1505 = vunpack.c.l.b16 %v1414
  %v1506 = vunpack.c.h.b16 %v1414
  %v1507 = vunpack.c.l.b16 %v1415
  %v1508 = vunpack.c.l.b16 %v1416
  %v1509 = vunpack.c.h.b16 %v1416
  %v1510 = vunpack.c.l.b16 %v1417
  %v1511 = vunpack.c.l.b16 %v1418
  %v1512 = vunpack.c.h.b16 %v1418
  %v1513 = vunpack.c.l.b16 %v1419
  %v1514 = vunpack.c.l.b16 %v1420
  %v1515 = vunpack.c.h.b16 %v1420
  %v1516 = vunpack.c.l.b16 %v1421
  %v1517 = vunpack.c.l.b16 %v1422
  %v1518 = vunpack.c.h.b16 %v1422
  %v1519 = vunpack.c.l.b16 %v1423
  %v1520 = vunpack.c.l.b16 %v1424
  %v1521 = vunpack.c.h.b16 %v1424
  %v1522 = vunpack.c.l.b16 %v1425
  %v1523 = vunpack.c.l.b16 %v1426
  %v1524 = vunpack.c.h.b16 %v1426
  %v1525 = vunpack.c.l.b16 %v1427
  %v1526 = vpack.c.b16 %v1481, %v1478
  %v1527 = vpack.c.b16 %v1482, %v1479
  %v1528 = vpack.c.b16 %v1483, %v1480
  %v1529 = vpack.c.b16 %v1487, %v1484
  %v1530 = vpack.c.b16 %v1488, %v1485
  %v1531 = vpack.c.b16 %v1489, %v1486
  %v1532 = vpack.c.b16 %v1493, %v1490
  %v1533 = vpack.c.b16 %v1494, %v1491
  %v1534 = vpack.c.b16 %v1495, %v1492
  %v1535 = vpack.c.b16 %v1499, %v1496
  %v1536 = vpack.c.b16 %v1500, %v1497
  %v1537 = vpack.c.b16 %v1501, %v1498
  %v1538 = vpack.c.b16 %v1505, %v1502
  %v1539 = vpack.c.b16 %v1506, %v1503
  %v1540 = vpack.c.b16 %v1507, %v1504
  %v1541 = vpack.c.b16 %v1511, %v1508
  %v1542 = vpack.c.b16 %v1512, %v1509
  %v1543 = vpack.c.b16 %v1513, %v1510
  %v1544 = vpack.c.b16 %v1517, %v1514
  %v1545 = vpack.c.b16 %v1518, %v1515
  %v1546 = vpack.c.b16 %v1519, %v1516
  %v1547 = vpack.c.b16 %v1523, %v1520
  %v1548 = vpack.c.b16 %v1524, %v1521
  %v1549 = vpack.c.b16 %v1525, %v1522
  %1574 = vmatprep.subr.bf16.mxu0 %v1527
  %1575 = vmatpush1.bf16.msra.mxu0 %v1526
  %1576 = vmatprep.subr.bf16.mxu0 %v1530
  %1577 = vmatpush1.bf16.msra.mxu0 %v1529
  %1578 = vmatprep.subr.bf16.mxu0 %v1533
  %1579 = vmatpush1.bf16.msra.mxu0 %v1532
  %1580 = vmatprep.subr.bf16.mxu0 %v1536
  %1581 = vmatpush1.bf16.msra.mxu0 %v1535
  %1582 = vmatprep.subr.bf16.mxu0 %v1539
  %1583 = vmatpush1.bf16.msra.mxu0 %v1538
  %1584 = vmatprep.subr.bf16.mxu0 %v1542
  %1585 = vmatpush1.bf16.msra.mxu0 %v1541
  %1586 = vmatprep.subr.bf16.mxu0 %v1545
  %1587 = vmatpush1.bf16.msra.mxu0 %v1544
  %1588 = vmatprep.subr.bf16.mxu0 %v1548
  %1589 = vmatpush1.bf16.msra.mxu0 %v1547
  %1590 = vmatprep.subr.bf16.mxu0 0
  %1591 = vmatpush1.bf16.msra.mxu0 0
  %1592 = vmatprep.subr.bf16.mxu0 0
  %1593 = vmatpush1.bf16.msra.mxu0 0
  %1594 = vmatprep.subr.bf16.mxu0 0
  %1595 = vmatpush1.bf16.msra.mxu0 0
  %1596 = vmatprep.subr.bf16.mxu0 0
  %1597 = vmatpush1.bf16.msra.mxu0 0
  %1598 = vmatprep.subr.bf16.mxu0 0
  %1599 = vmatpush1.bf16.msra.mxu0 0
  %1600 = vmatprep.subr.bf16.mxu0 0
  %1601 = vmatpush1.bf16.msra.mxu0 0
  %1602 = vmatprep.subr.bf16.mxu0 0
  %1603 = vmatpush1.bf16.msra.mxu0 0
  %1604 = vmatprep.subr.bf16.mxu0 0
  %1605 = vmatpush1.bf16.msra.mxu0 0
  %1606 = vmatprep.mubr.bf16.mxu0 0
  %1607 = vmatmul.mubr.bf16.gmra.mrb[0].mxu0 %v1393
  %v1608 = vpop.f32.mrb[0].mxu0
  %v1609 = vadd.f32 %v1434, %v1608
  %v1610 = vpop.f32.mrb[0].mxu0
  %v1611 = vadd.f32 %v1438, %v1610
  %v1612 = vpop.f32.mrb[0].mxu0
  %v1613 = vadd.f32 %v1434, %v1612
  %v1614 = vpop.f32.mrb[0].mxu0
  %v1615 = vadd.f32 %v1438, %v1614
  %1616 = vmatprep.mubr.bf16.mxu0 0
  %1617 = vmatmul.mubr.bf16.gmra.mrb[0].mxu0 %v1394
  %v1618 = vpop.f32.mrb[0].mxu0
  %v1619 = vadd.f32 %v1434, %v1618
  %v1620 = vpop.f32.mrb[0].mxu0
  %v1621 = vadd.f32 %v1438, %v1620
  %v1622 = vpop.f32.mrb[0].mxu0
  %v1623 = vadd.f32 %v1434, %v1622
  %v1624 = vpop.f32.mrb[0].mxu0
  %v1625 = vadd.f32 %v1438, %v1624
  %1626 = vdwg.mxu0
  %1627 = vmatprep.subr.bf16.mxu0 0
  %1628 = vmatpush1.bf16.msra.mxu0 %v1528
  %1629 = vmatprep.subr.bf16.mxu0 0
  %1630 = vmatpush1.bf16.msra.mxu0 %v1531
  %1631 = vmatprep.subr.bf16.mxu0 0
  %1632 = vmatpush1.bf16.msra.mxu0 %v1534
  %1633 = vmatprep.subr.bf16.mxu0 0
  %1634 = vmatpush1.bf16.msra.mxu0 %v1537
  %1635 = vmatprep.subr.bf16.mxu0 0
  %1636 = vmatpush1.bf16.msra.mxu0 %v1540
  %1637 = vmatprep.subr.bf16.mxu0 0
  %1638 = vmatpush1.bf16.msra.mxu0 %v1543
  %1639 = vmatprep.subr.bf16.mxu0 0
  %1640 = vmatpush1.bf16.msra.mxu0 %v1546
  %1641 = vmatprep.subr.bf16.mxu0 0
  %1642 = vmatpush1.bf16.msra.mxu0 %v1549
  %1643 = vmatprep.subr.bf16.mxu0 0
  %1644 = vmatpush1.bf16.msra.mxu0 0
  %1645 = vmatprep.subr.bf16.mxu0 0
  %1646 = vmatpush1.bf16.msra.mxu0 0
  %1647 = vmatprep.subr.bf16.mxu0 0
  %1648 = vmatpush1.bf16.msra.mxu0 0
  %1649 = vmatprep.subr.bf16.mxu0 0
  %1650 = vmatpush1.bf16.msra.mxu0 0
  %1651 = vmatprep.subr.bf16.mxu0 0
  %1652 = vmatpush1.bf16.msra.mxu0 0
  %1653 = vmatprep.subr.bf16.mxu0 0
  %1654 = vmatpush1.bf16.msra.mxu0 0
  %1655 = vmatprep.subr.bf16.mxu0 0
  %1656 = vmatpush1.bf16.msra.mxu0 0
  %1657 = vmatprep.subr.bf16.mxu0 0
  %1658 = vmatpush1.bf16.msra.mxu0 0
  %1659 = vmatprep.mubr.bf16.mxu0 0
  %1660 = vmatmul.mubr.bf16.gmra.mrb[0].mxu0 %v1393
  %v1661 = vpop.f32.mrb[0].mxu0
  %v1662 = vadd.f32 %v1442, %v1661
  %v1663 = vpop.f32.mrb[0].mxu0
  %v1664 = vpop.f32.mrb[0].mxu0
  %v1665 = vadd.f32 %v1442, %v1664
  %v1666 = vpop.f32.mrb[0].mxu0
  %1667 = vmatprep.mubr.bf16.mxu0 0
  %1668 = vmatmul.mubr.bf16.gmra.mrb[0].mxu0 %v1394
  %v1669 = vpop.f32.mrb[0].mxu0
  %v1670 = vadd.f32 %v1442, %v1669
  %v1671 = vpop.f32.mrb[0].mxu0
  %v1672 = vpop.f32.mrb[0].mxu0
  %v1673 = vadd.f32 %v1442, %v1672
  %v1674 = vpop.f32.mrb[0].mxu0
  %1675 = vdwg.mxu0
  %v1676 = vmul.f32 %v1609, 0.17677669
  %v1677 = vmul.f32 %v1613, 0.17677669
  %v1678 = vmul.f32 %v1619, 0.17677669
  %v1679 = vmul.f32 %v1623, 0.17677669
  %v1680 = vmul.f32 %v1611, %v47
  %v1681 = vmul.f32 %v1615, %v48
  %v1682 = vmul.f32 %v1621, %v49
  %v1683 = vmul.f32 %v1625, %v50
  %v1684 = vmul.f32 %v1611, %v51
  %v1685 = vmul.f32 %v1615, %v52
  %v1686 = vmul.f32 %v1621, %v53
  %v1687 = vmul.f32 %v1625, %v54
  %v1688 = vmul.f32 %v1611, %v55
  %v1689 = vmul.f32 %v1615, %v56
  %v1690 = vmul.f32 %v1621, %v57
  %v1691 = vmul.f32 %v1625, %v58
  %v1692 = vmul.f32 %v1611, %v59
  %v1693 = vmul.f32 %v1615, %v60
  %v1694 = vmul.f32 %v1621, %v61
  %v1695 = vmul.f32 %v1625, %v62
  %v1696 = vmul.f32 %v1662, %v47
  %v1697 = vmul.f32 %v1665, %v48
  %v1698 = vmul.f32 %v1670, %v49
  %v1699 = vmul.f32 %v1673, %v50
  %v1700 = vmul.f32 %v1662, %v51
  %v1701 = vmul.f32 %v1665, %v52
  %v1702 = vmul.f32 %v1670, %v53
  %v1703 = vmul.f32 %v1673, %v54
  %v1704 = vmul.f32 %v1662, %v55
  %v1705 = vmul.f32 %v1665, %v56
  %v1706 = vmul.f32 %v1670, %v57
  %v1707 = vmul.f32 %v1673, %v58
  %v1708 = vmul.f32 %v1662, %v59
  %v1709 = vmul.f32 %v1665, %v60
  %v1710 = vmul.f32 %v1670, %v61
  %v1711 = vmul.f32 %v1673, %v62
  %1712 = vmatprep.subr.mxu0 0.0
  %1713 = vmatpush1.xpose.msra.mxu0 %v1680
  %1714 = vmatprep.subr.mxu0 0.0
  %1715 = vmatpush1.xpose.msra.mxu0 %v1681
  %1716 = vmatprep.subr.mxu0 0.0
  %1717 = vmatpush1.xpose.msra.mxu0 %v1682
  %1718 = vmatprep.subr.mxu0 0.0
  %1719 = vmatpush1.xpose.msra.mxu0 %v1683
  %1720 = vmatprep.subr.mxu0 0.0
  %1721 = vmatpush1.xpose.msra.mxu0 %v1684
  %1722 = vmatprep.subr.mxu0 0.0
  %1723 = vmatpush1.xpose.msra.mxu0 %v1685
  %1724 = vmatprep.subr.mxu0 0.0
  %1725 = vmatpush1.xpose.msra.mxu0 %v1686
  %1726 = vmatprep.subr.mxu0 0.0
  %1727 = vmatpush1.xpose.msra.mxu0 %v1687
  %1728 = vmatprep.subr.mxu0 0.0
  %1729 = vmatpush1.xpose.msra.mxu0 %v1688
  %1730 = vmatprep.subr.mxu0 0.0
  %1731 = vmatpush1.xpose.msra.mxu0 %v1689
  %1732 = vmatprep.subr.mxu0 0.0
  %1733 = vmatpush1.xpose.msra.mxu0 %v1690
  %1734 = vmatprep.subr.mxu0 0.0
  %1735 = vmatpush1.xpose.msra.mxu0 %v1691
  %1736 = vmatprep.subr.mxu0 0.0
  %1737 = vmatpush1.xpose.msra.mxu0 %v1692
  %1738 = vmatprep.subr.mxu0 0.0
  %1739 = vmatpush1.xpose.msra.mxu0 %v1693
  %1740 = vmatprep.subr.mxu0 0.0
  %1741 = vmatpush1.xpose.msra.mxu0 %v1694
  %1742 = vmatprep.subr.mxu0 0.0
  %1743 = vmatpush1.xpose.msra.mxu0 %v1695
  %1744 = vmatprep.subr.mxu0 0.0
  %1745 = vmatpush1.xpose.msra.mxu0 0.0
  %1746 = vmatprep.subr.mxu0 0.0
  %1747 = vmatpush1.xpose.msra.mxu0 0.0
  %1748 = vmatprep.subr.mxu0 0.0
  %1749 = vmatpush1.xpose.msra.mxu0 0.0
  %1750 = vmatprep.subr.mxu0 0.0
  %1751 = vmatpush1.xpose.msra.mxu0 0.0
  %1752 = vmatprep.subr.mxu0 0.0
  %1753 = vmatpush1.xpose.msra.mxu0 0.0
  %1754 = vmatprep.subr.mxu0 0.0
  %1755 = vmatpush1.xpose.msra.mxu0 0.0
  %1756 = vmatprep.subr.mxu0 0.0
  %1757 = vmatpush1.xpose.msra.mxu0 0.0
  %1758 = vmatprep.subr.mxu0 0.0
  %1759 = vmatpush1.xpose.msra.mxu0 0.0
  %1760 = vmatprep.subr.mxu0 0.0
  %1761 = vmatpush1.xpose.msra.mxu0 0.0
  %1762 = vmatprep.subr.mxu0 0.0
  %1763 = vmatpush1.xpose.msra.mxu0 0.0
  %1764 = vmatprep.subr.mxu0 0.0
  %1765 = vmatpush1.xpose.msra.mxu0 0.0
  %1766 = vmatprep.subr.mxu0 0.0
  %1767 = vmatpush1.xpose.msra.mxu0 0.0
  %1768 = vmatprep.subr.mxu0 0.0
  %1769 = vmatpush1.xpose.msra.mxu0 0.0
  %1770 = vmatprep.subr.mxu0 0.0
  %1771 = vmatpush1.xpose.msra.mxu0 0.0
  %1772 = vmatprep.subr.mxu0 0.0
  %1773 = vmatpush1.xpose.msra.mxu0 0.0
  %1774 = vmatprep.subr.mxu0 0.0
  %1775 = vmatpush1.xpose.msra.mxu0 0.0
  %1776 = vmatprep.mubr.f32.mxu0 0.0
  %1777 = vmatmul.mubr.f32.gmra.mrb[0].mxu0 %v1676
  %v1778 = vpop.f32.mrb[0].mxu0
  %v1779 = vadd.f32 %v43, %v1778
  %v1780 = vpop.f32.mrb[0].mxu0
  %1781 = vmatprep.mubr.f32.mxu0 0.0
  %1782 = vmatmul.mubr.f32.gmra.mrb[0].mxu0 %v1677
  %v1783 = vpop.f32.mrb[0].mxu0
  %v1784 = vadd.f32 %v44, %v1783
  %v1785 = vpop.f32.mrb[0].mxu0
  %1786 = vmatprep.mubr.f32.mxu0 0.0
  %1787 = vmatmul.mubr.f32.gmra.mrb[0].mxu0 %v1678
  %v1788 = vpop.f32.mrb[0].mxu0
  %v1789 = vadd.f32 %v45, %v1788
  %v1790 = vpop.f32.mrb[0].mxu0
  %1791 = vmatprep.mubr.f32.mxu0 0.0
  %1792 = vmatmul.mubr.f32.gmra.mrb[0].mxu0 %v1679
  %v1793 = vpop.f32.mrb[0].mxu0
  %v1794 = vadd.f32 %v46, %v1793
  %v1795 = vpop.f32.mrb[0].mxu0
  %1796 = vdwg.mxu0
  %1797 = vmax.xlane.f32.xlu0 %v1779
  %v1798 = vpop.xlane.xlu0 %1797
  %1799 = vmax.xlane.f32.xlu0 %v1784
  %v1800 = vpop.xlane.xlu0 %1799
  %1801 = vmax.xlane.f32.xlu0 %v1789
  %v1802 = vpop.xlane.xlu0 %1801
  %1803 = vmax.xlane.f32.xlu0 %v1794
  %v1804 = vpop.xlane.xlu0 %1803
  %v1805 = vsub.f32 %v1779, %v1798
  %v1806 = vsub.f32 %v1784, %v1800
  %v1807 = vsub.f32 %v1789, %v1802
  %v1808 = vsub.f32 %v1794, %v1804
  %v1809 = vmul.f32 %v1805, 1.442695
  %v1810 = vpow.pop %v1809
  %v1811 = vmul.f32 %v1806, 1.442695
  %v1812 = vpow.pop %v1811
  %v1813 = vmul.f32 %v1807, 1.442695
  %v1814 = vpow.pop %v1813
  %v1815 = vmul.f32 %v1808, 1.442695
  %v1816 = vpow.pop %v1815
  %1817 = vmatprep.subr.mxu0 0.0
  %1818 = vmatpush1.msra.mxu0 %v47
  %1819 = vmatprep.subr.mxu0 0.0
  %1820 = vmatpush1.msra.mxu0 %v48
  %1821 = vmatprep.subr.mxu0 0.0
  %1822 = vmatpush1.msra.mxu0 %v49
  %1823 = vmatprep.subr.mxu0 0.0
  %1824 = vmatpush1.msra.mxu0 %v50
  %1825 = vmatprep.subr.mxu0 0.0
  %1826 = vmatpush1.msra.mxu0 %v51
  %1827 = vmatprep.subr.mxu0 0.0
  %1828 = vmatpush1.msra.mxu0 %v52
  %1829 = vmatprep.subr.mxu0 0.0
  %1830 = vmatpush1.msra.mxu0 %v53
  %1831 = vmatprep.subr.mxu0 0.0
  %1832 = vmatpush1.msra.mxu0 %v54
  %1833 = vmatprep.subr.mxu0 0.0
  %1834 = vmatpush1.msra.mxu0 %v55
  %1835 = vmatprep.subr.mxu0 0.0
  %1836 = vmatpush1.msra.mxu0 %v56
  %1837 = vmatprep.subr.mxu0 0.0
  %1838 = vmatpush1.msra.mxu0 %v57
  %1839 = vmatprep.subr.mxu0 0.0
  %1840 = vmatpush1.msra.mxu0 %v58
  %1841 = vmatprep.subr.mxu0 0.0
  %1842 = vmatpush1.msra.mxu0 %v59
  %1843 = vmatprep.subr.mxu0 0.0
  %1844 = vmatpush1.msra.mxu0 %v60
  %1845 = vmatprep.subr.mxu0 0.0
  %1846 = vmatpush1.msra.mxu0 %v61
  %1847 = vmatprep.subr.mxu0 0.0
  %1848 = vmatpush1.msra.mxu0 %v62
  %1849 = vmatprep.subr.mxu0 0.0
  %1850 = vmatpush1.msra.mxu0 0.0
  %1851 = vmatprep.subr.mxu0 0.0
  %1852 = vmatpush1.msra.mxu0 0.0
  %1853 = vmatprep.subr.mxu0 0.0
  %1854 = vmatpush1.msra.mxu0 0.0
  %1855 = vmatprep.subr.mxu0 0.0
  %1856 = vmatpush1.msra.mxu0 0.0
  %1857 = vmatprep.subr.mxu0 0.0
  %1858 = vmatpush1.msra.mxu0 0.0
  %1859 = vmatprep.subr.mxu0 0.0
  %1860 = vmatpush1.msra.mxu0 0.0
  %1861 = vmatprep.subr.mxu0 0.0
  %1862 = vmatpush1.msra.mxu0 0.0
  %1863 = vmatprep.subr.mxu0 0.0
  %1864 = vmatpush1.msra.mxu0 0.0
  %1865 = vmatprep.subr.mxu0 0.0
  %1866 = vmatpush1.msra.mxu0 0.0
  %1867 = vmatprep.subr.mxu0 0.0
  %1868 = vmatpush1.msra.mxu0 0.0
  %1869 = vmatprep.subr.mxu0 0.0
  %1870 = vmatpush1.msra.mxu0 0.0
  %1871 = vmatprep.subr.mxu0 0.0
  %1872 = vmatpush1.msra.mxu0 0.0
  %1873 = vmatprep.subr.mxu0 0.0
  %1874 = vmatpush1.msra.mxu0 0.0
  %1875 = vmatprep.subr.mxu0 0.0
  %1876 = vmatpush1.msra.mxu0 0.0
  %1877 = vmatprep.subr.mxu0 0.0
  %1878 = vmatpush1.msra.mxu0 0.0
  %1879 = vmatprep.subr.mxu0 0.0
  %1880 = vmatpush1.msra.mxu0 0.0
  %1881 = vmatprep.mubr.f32.mxu0 0.0
  %1882 = vmatmul.mubr.f32.gmra.mrb[0].mxu0 %v1810
  %v1883 = vpop.f32.mrb[0].mxu0
  %v1884 = vadd.f32 0.0, %v1883
  %v1885 = vpop.f32.mrb[0].mxu0
  %1886 = vmatprep.mubr.f32.mxu0 0.0
  %1887 = vmatmul.mubr.f32.gmra.mrb[0].mxu0 %v1812
  %v1888 = vpop.f32.mrb[0].mxu0
  %v1889 = vadd.f32 0.0, %v1888
  %v1890 = vpop.f32.mrb[0].mxu0
  %1891 = vmatprep.mubr.f32.mxu0 0.0
  %1892 = vmatmul.mubr.f32.gmra.mrb[0].mxu0 %v1814
  %v1893 = vpop.f32.mrb[0].mxu0
  %v1894 = vadd.f32 0.0, %v1893
  %v1895 = vpop.f32.mrb[0].mxu0
  %1896 = vmatprep.mubr.f32.mxu0 0.0
  %1897 = vmatmul.mubr.f32.gmra.mrb[0].mxu0 %v1816
  %v1898 = vpop.f32.mrb[0].mxu0
  %v1899 = vadd.f32 0.0, %v1898
  %v1900 = vpop.f32.mrb[0].mxu0
  %1901 = vdwg.mxu0
  %v1902 = vrcp.pop %v1884
  %v1903 = vrcp.pop %v1889
  %v1904 = vrcp.pop %v1894
  %v1905 = vrcp.pop %v1899
  %v1906 = vmul.f32 %v1810, %v1902
  %v1907 = vmul.f32 %v1812, %v1903
  %v1908 = vmul.f32 %v1814, %v1904
  %v1909 = vmul.f32 %v1816, %v1905
  %1910 = vmatprep.subr.mxu0 0.0
  %1911 = vmatpush1.msra.mxu0 %v1696
  %1912 = vmatprep.subr.mxu0 0.0
  %1913 = vmatpush1.msra.mxu0 %v1697
  %1914 = vmatprep.subr.mxu0 0.0
  %1915 = vmatpush1.msra.mxu0 %v1698
  %1916 = vmatprep.subr.mxu0 0.0
  %1917 = vmatpush1.msra.mxu0 %v1699
  %1918 = vmatprep.subr.mxu0 0.0
  %1919 = vmatpush1.msra.mxu0 %v1700
  %1920 = vmatprep.subr.mxu0 0.0
  %1921 = vmatpush1.msra.mxu0 %v1701
  %1922 = vmatprep.subr.mxu0 0.0
  %1923 = vmatpush1.msra.mxu0 %v1702
  %1924 = vmatprep.subr.mxu0 0.0
  %1925 = vmatpush1.msra.mxu0 %v1703
  %1926 = vmatprep.subr.mxu0 0.0
  %1927 = vmatpush1.msra.mxu0 %v1704
  %1928 = vmatprep.subr.mxu0 0.0
  %1929 = vmatpush1.msra.mxu0 %v1705
  %1930 = vmatprep.subr.mxu0 0.0
  %1931 = vmatpush1.msra.mxu0 %v1706
  %1932 = vmatprep.subr.mxu0 0.0
  %1933 = vmatpush1.msra.mxu0 %v1707
  %1934 = vmatprep.subr.mxu0 0.0
  %1935 = vmatpush1.msra.mxu0 %v1708
  %1936 = vmatprep.subr.mxu0 0.0
  %1937 = vmatpush1.msra.mxu0 %v1709
  %1938 = vmatprep.subr.mxu0 0.0
  %1939 = vmatpush1.msra.mxu0 %v1710
  %1940 = vmatprep.subr.mxu0 0.0
  %1941 = vmatpush1.msra.mxu0 %v1711
  %1942 = vmatprep.subr.mxu0 0.0
  %1943 = vmatpush1.msra.mxu0 0.0
  %1944 = vmatprep.subr.mxu0 0.0
  %1945 = vmatpush1.msra.mxu0 0.0
  %1946 = vmatprep.subr.mxu0 0.0
  %1947 = vmatpush1.msra.mxu0 0.0
  %1948 = vmatprep.subr.mxu0 0.0
  %1949 = vmatpush1.msra.mxu0 0.0
  %1950 = vmatprep.subr.mxu0 0.0
  %1951 = vmatpush1.msra.mxu0 0.0
  %1952 = vmatprep.subr.mxu0 0.0
  %1953 = vmatpush1.msra.mxu0 0.0
  %1954 = vmatprep.subr.mxu0 0.0
  %1955 = vmatpush1.msra.mxu0 0.0
  %1956 = vmatprep.subr.mxu0 0.0
  %1957 = vmatpush1.msra.mxu0 0.0
  %1958 = vmatprep.subr.mxu0 0.0
  %1959 = vmatpush1.msra.mxu0 0.0
  %1960 = vmatprep.subr.mxu0 0.0
  %1961 = vmatpush1.msra.mxu0 0.0
  %1962 = vmatprep.subr.mxu0 0.0
  %1963 = vmatpush1.msra.mxu0 0.0
  %1964 = vmatprep.subr.mxu0 0.0
  %1965 = vmatpush1.msra.mxu0 0.0
  %1966 = vmatprep.subr.mxu0 0.0
  %1967 = vmatpush1.msra.mxu0 0.0
  %1968 = vmatprep.subr.mxu0 0.0
  %1969 = vmatpush1.msra.mxu0 0.0
  %1970 = vmatprep.subr.mxu0 0.0
  %1971 = vmatpush1.msra.mxu0 0.0
  %1972 = vmatprep.subr.mxu0 0.0
  %1973 = vmatpush1.msra.mxu0 0.0
  %1974 = vmatprep.mubr.f32.mxu0 0.0
  %1975 = vmatmul.mubr.f32.gmra.mrb[0].mxu0 %v1906
  %v1976 = vpop.f32.mrb[0].mxu0
  %v1977 = vadd.f32 0.0, %v1976
  %v1978 = vpop.f32.mrb[0].mxu0
  %1979 = vmatprep.mubr.f32.mxu0 0.0
  %1980 = vmatmul.mubr.f32.gmra.mrb[0].mxu0 %v1907
  %v1981 = vpop.f32.mrb[0].mxu0
  %v1982 = vadd.f32 0.0, %v1981
  %v1983 = vpop.f32.mrb[0].mxu0
  %1984 = vmatprep.mubr.f32.mxu0 0.0
  %1985 = vmatmul.mubr.f32.gmra.mrb[0].mxu0 %v1908
  %v1986 = vpop.f32.mrb[0].mxu0
  %v1987 = vadd.f32 0.0, %v1986
  %v1988 = vpop.f32.mrb[0].mxu0
  %1989 = vmatprep.mubr.f32.mxu0 0.0
  %1990 = vmatmul.mubr.f32.gmra.mrb[0].mxu0 %v1909
  %v1991 = vpop.f32.mrb[0].mxu0
  %v1992 = vadd.f32 0.0, %v1991
  %v1993 = vpop.f32.mrb[0].mxu0
  %1994 = vdwg.mxu0
  %v1995 = vpack.c.bf16 %v1982, %v1977
  %v1996 = vpack.c.bf16 %v1992, %v1987
  %s1997 = scalar_lea.vmem %s7, 64
  %v1998 = vld [vmem:[%s1997] sm:$0xf]
  %v1999 = vld [vmem:[%s1997 + $0x4] sm:$0xf]
  %v2000 = vld [vmem:[%s1997 + $0x8] sm:$0xf]
  %v2001 = vld [vmem:[%s1997 + $0xc] sm:$0xf]
  %v2002 = vld [vmem:[%s1997 + $0x10] sm:$0xf]
  %v2003 = vld [vmem:[%s1997 + $0x14] sm:$0xf]
  %v2004 = vld [vmem:[%s1997 + $0x18] sm:$0xf]
  %v2005 = vld [vmem:[%s1997 + $0x1c] sm:$0xf]
  %v2006 = vld [vmem:[%s1997 + $0x20] sm:$0xf]
  %v2007 = vld [vmem:[%s1997 + $0x24] sm:$0xf]
  %v2008 = vld [vmem:[%s1997 + $0x28] sm:$0xf]
  %v2009 = vld [vmem:[%s1997 + $0x2c] sm:$0xf]
  %v2010 = vld [vmem:[%s1997 + $0x30] sm:$0xf]
  %v2011 = vld [vmem:[%s1997 + $0x34] sm:$0xf]
  %v2012 = vld [vmem:[%s1997 + $0x38] sm:$0xf]
  %v2013 = vld [vmem:[%s1997 + $0x3c] sm:$0xf]
  %v2014 = vlaneseq
  %v2015 = vshrl.u32 %v2014, 7
  %v2016 = vsub.s32 0, %v2015
  %v2017 = vrot.slane %v64, %v2016
  %v2034 = vunpack.c.l.b16 %v1998
  %v2035 = vunpack.c.l.b16 %v1999
  %v2036 = vunpack.c.l.b16 %v2000
  %v2037 = vunpack.c.l.b16 %v2001
  %v2038 = vunpack.c.l.b16 %v2002
  %v2039 = vunpack.c.l.b16 %v2003
  %v2040 = vunpack.c.l.b16 %v2004
  %v2041 = vunpack.c.l.b16 %v2005
  %v2042 = vunpack.c.l.b16 %v2006
  %v2043 = vunpack.c.l.b16 %v2007
  %v2044 = vunpack.c.l.b16 %v2008
  %v2045 = vunpack.c.l.b16 %v2009
  %v2046 = vunpack.c.l.b16 %v2010
  %v2047 = vunpack.c.l.b16 %v2011
  %v2048 = vunpack.c.l.b16 %v2012
  %v2049 = vunpack.c.l.b16 %v2013
  %v2050 = vpack.c.b16 %v2035, %v2034
  %v2051 = vpack.c.b16 %v2037, %v2036
  %v2052 = vpack.c.b16 %v2039, %v2038
  %v2053 = vpack.c.b16 %v2041, %v2040
  %v2054 = vpack.c.b16 %v2043, %v2042
  %v2055 = vpack.c.b16 %v2045, %v2044
  %v2056 = vpack.c.b16 %v2047, %v2046
  %v2057 = vpack.c.b16 %v2049, %v2048
  %2066 = vmatprep.subr.bf16.mxu0 0
  %2067 = vmatpush1.bf16.msra.mxu0 %v2050
  %2068 = vmatprep.subr.bf16.mxu0 0
  %2069 = vmatpush1.bf16.msra.mxu0 %v2051
  %2070 = vmatprep.subr.bf16.mxu0 0
  %2071 = vmatpush1.bf16.msra.mxu0 %v2052
  %2072 = vmatprep.subr.bf16.mxu0 0
  %2073 = vmatpush1.bf16.msra.mxu0 %v2053
  %2074 = vmatprep.subr.bf16.mxu0 0
  %2075 = vmatpush1.bf16.msra.mxu0 %v2054
  %2076 = vmatprep.subr.bf16.mxu0 0
  %2077 = vmatpush1.bf16.msra.mxu0 %v2055
  %2078 = vmatprep.subr.bf16.mxu0 0
  %2079 = vmatpush1.bf16.msra.mxu0 %v2056
  %2080 = vmatprep.subr.bf16.mxu0 0
  %2081 = vmatpush1.bf16.msra.mxu0 %v2057
  %2082 = vmatprep.subr.bf16.mxu0 0
  %2083 = vmatpush1.bf16.msra.mxu0 0
  %2084 = vmatprep.subr.bf16.mxu0 0
  %2085 = vmatpush1.bf16.msra.mxu0 0
  %2086 = vmatprep.subr.bf16.mxu0 0
  %2087 = vmatpush1.bf16.msra.mxu0 0
  %2088 = vmatprep.subr.bf16.mxu0 0
  %2089 = vmatpush1.bf16.msra.mxu0 0
  %2090 = vmatprep.subr.bf16.mxu0 0
  %2091 = vmatpush1.bf16.msra.mxu0 0
  %2092 = vmatprep.subr.bf16.mxu0 0
  %2093 = vmatpush1.bf16.msra.mxu0 0
  %2094 = vmatprep.subr.bf16.mxu0 0
  %2095 = vmatpush1.bf16.msra.mxu0 0
  %2096 = vmatprep.subr.bf16.mxu0 0
  %2097 = vmatpush1.bf16.msra.mxu0 0
  %2098 = vmatprep.mubr.bf16.mxu0 0
  %2099 = vmatmul.mubr.bf16.gmra.mrb[0].mxu0 %v1995
  %v2100 = vpop.f32.mrb[0].mxu0
  %v2101 = vadd.f32 %v2017, %v2100
  %v2102 = vpop.f32.mrb[0].mxu0
  %v2103 = vpop.f32.mrb[0].mxu0
  %v2104 = vadd.f32 %v2017, %v2103
  %v2105 = vpop.f32.mrb[0].mxu0
  %2106 = vmatprep.mubr.bf16.mxu0 0
  %2107 = vmatmul.mubr.bf16.gmra.mrb[0].mxu0 %v1996
  %v2108 = vpop.f32.mrb[0].mxu0
  %v2109 = vadd.f32 %v2017, %v2108
  %v2110 = vpop.f32.mrb[0].mxu0
  %v2111 = vpop.f32.mrb[0].mxu0
  %v2112 = vadd.f32 %v2017, %v2111
  %v2113 = vpop.f32.mrb[0].mxu0
  %2114 = vdwg.mxu0
  %v2115 = vadd.f32 %v2101, %v1389
  %v2116 = vadd.f32 %v2104, %v1390
  %v2117 = vadd.f32 %v2109, %v1391
  %v2118 = vadd.f32 %v2112, %v1392
  %2119 = vadd.xlane.f32.xlu0 %v2115
  %v2120 = vpop.xlane.xlu0 %2119
  %2121 = vadd.xlane.f32.xlu0 %v2116
  %v2122 = vpop.xlane.xlu0 %2121
  %2123 = vadd.xlane.f32.xlu0 %v2117
  %v2124 = vpop.xlane.xlu0 %2123
  %2125 = vadd.xlane.f32.xlu0 %v2118
  %v2126 = vpop.xlane.xlu0 %2125
  %v2127 = vmul.f32 %v2120, %v73
  %v2128 = vmul.f32 %v2122, %v73
  %v2129 = vmul.f32 %v2124, %v73
  %v2130 = vmul.f32 %v2126, %v73
  %v2131 = vsub.f32 %v2115, %v2127
  %v2132 = vsub.f32 %v2116, %v2128
  %v2133 = vsub.f32 %v2117, %v2129
  %v2134 = vsub.f32 %v2118, %v2130
  %v2135 = vmul.f32 %v2131, %v2131
  %v2136 = vmul.f32 %v2132, %v2132
  %v2137 = vmul.f32 %v2133, %v2133
  %v2138 = vmul.f32 %v2134, %v2134
  %2139 = vadd.xlane.f32.xlu0 %v2135
  %v2140 = vpop.xlane.xlu0 %2139
  %2141 = vadd.xlane.f32.xlu0 %v2136
  %v2142 = vpop.xlane.xlu0 %2141
  %2143 = vadd.xlane.f32.xlu0 %v2137
  %v2144 = vpop.xlane.xlu0 %2143
  %2145 = vadd.xlane.f32.xlu0 %v2138
  %v2146 = vpop.xlane.xlu0 %2145
  %v2147 = vmul.f32 %v2140, %v73
  %v2148 = vmul.f32 %v2142, %v73
  %v2149 = vmul.f32 %v2144, %v73
  %v2150 = vmul.f32 %v2146, %v73
  %v2151 = vadd.f32 %v2147, 1e-12
  %v2152 = vadd.f32 %v2148, 1e-12
  %v2153 = vadd.f32 %v2149, 1e-12
  %v2154 = vadd.f32 %v2150, 1e-12
  %v2155 = vrsqrt.pop %v2151
  %v2156 = vrsqrt.pop %v2152
  %v2157 = vrsqrt.pop %v2153
  %v2158 = vrsqrt.pop %v2154
  %v2159 = vmul.f32 %v2131, %v2155
  %v2160 = vmul.f32 %v2132, %v2156
  %v2161 = vmul.f32 %v2133, %v2157
  %v2162 = vmul.f32 %v2134, %v2158
  %v2163 = vlaneseq
  %v2164 = vshrl.u32 %v2163, 7
  %v2165 = vsub.s32 1, %v2164
  %v2166 = vrot.slane %v64, %v2165
  %v2167 = vmul.f32 %v2159, %v2166
  %v2168 = vmul.f32 %v2160, %v2166
  %v2169 = vmul.f32 %v2161, %v2166
  %v2170 = vmul.f32 %v2162, %v2166
  %v2171 = vlaneseq
  %v2172 = vshrl.u32 %v2171, 7
  %v2173 = vsub.s32 2, %v2172
  %v2174 = vrot.slane %v64, %v2173
  %v2175 = vadd.f32 %v2167, %v2174
  %v2176 = vadd.f32 %v2168, %v2174
  %v2177 = vadd.f32 %v2169, %v2174
  %v2178 = vadd.f32 %v2170, %v2174
  %v2179 = vpack.c.bf16 %v2176, %v2175
  %v2180 = vpack.c.bf16 %v2178, %v2177
  %s2181 = scalar_lea.vmem %s8, 128
  %v2182 = vld [vmem:[%s2181] sm:$0xff]
  %v2183 = vld [vmem:[%s2181 + $0x8] sm:$0xff]
  %v2184 = vld [vmem:[%s2181 + $0x10] sm:$0xff]
  %v2185 = vld [vmem:[%s2181 + $0x18] sm:$0xff]
  %v2186 = vld [vmem:[%s2181 + $0x20] sm:$0xff]
  %v2187 = vld [vmem:[%s2181 + $0x28] sm:$0xff]
  %v2188 = vld [vmem:[%s2181 + $0x30] sm:$0xff]
  %v2189 = vld [vmem:[%s2181 + $0x38] sm:$0xff]
  %v2190 = vld [vmem:[%s2181 + $0x40] sm:$0xff]
  %v2191 = vld [vmem:[%s2181 + $0x48] sm:$0xff]
  %v2192 = vld [vmem:[%s2181 + $0x50] sm:$0xff]
  %v2193 = vld [vmem:[%s2181 + $0x58] sm:$0xff]
  %v2194 = vld [vmem:[%s2181 + $0x60] sm:$0xff]
  %v2195 = vld [vmem:[%s2181 + $0x68] sm:$0xff]
  %v2196 = vld [vmem:[%s2181 + $0x70] sm:$0xff]
  %v2197 = vld [vmem:[%s2181 + $0x78] sm:$0xff]
  %s2198 = scalar_lea.vmem %s5, 2
  %v2199 = vld [vmem:[%s2198] sm:$0x3]
  %v2201 = vlaneseq
  %v2202 = vshrl.u32 %v2201, 7
  %v2203 = vsub.s32 0, %v2202
  %v2204 = vrot.slane %v2199, %v2203
  %v2205 = vlaneseq
  %v2206 = vshrl.u32 %v2205, 7
  %v2207 = vsub.s32 1, %v2206
  %v2208 = vrot.slane %v2199, %v2207
  %v2227 = vunpack.c.l.b16 %v2182
  %v2228 = vunpack.c.h.b16 %v2182
  %v2229 = vunpack.c.l.b16 %v2183
  %v2230 = vunpack.c.h.b16 %v2183
  %v2231 = vunpack.c.l.b16 %v2184
  %v2232 = vunpack.c.h.b16 %v2184
  %v2233 = vunpack.c.l.b16 %v2185
  %v2234 = vunpack.c.h.b16 %v2185
  %v2235 = vunpack.c.l.b16 %v2186
  %v2236 = vunpack.c.h.b16 %v2186
  %v2237 = vunpack.c.l.b16 %v2187
  %v2238 = vunpack.c.h.b16 %v2187
  %v2239 = vunpack.c.l.b16 %v2188
  %v2240 = vunpack.c.h.b16 %v2188
  %v2241 = vunpack.c.l.b16 %v2189
  %v2242 = vunpack.c.h.b16 %v2189
  %v2243 = vunpack.c.l.b16 %v2190
  %v2244 = vunpack.c.h.b16 %v2190
  %v2245 = vunpack.c.l.b16 %v2191
  %v2246 = vunpack.c.h.b16 %v2191
  %v2247 = vunpack.c.l.b16 %v2192
  %v2248 = vunpack.c.h.b16 %v2192
  %v2249 = vunpack.c.l.b16 %v2193
  %v2250 = vunpack.c.h.b16 %v2193
  %v2251 = vunpack.c.l.b16 %v2194
  %v2252 = vunpack.c.h.b16 %v2194
  %v2253 = vunpack.c.l.b16 %v2195
  %v2254 = vunpack.c.h.b16 %v2195
  %v2255 = vunpack.c.l.b16 %v2196
  %v2256 = vunpack.c.h.b16 %v2196
  %v2257 = vunpack.c.l.b16 %v2197
  %v2258 = vunpack.c.h.b16 %v2197
  %v2259 = vpack.c.b16 %v2229, %v2227
  %v2260 = vpack.c.b16 %v2230, %v2228
  %v2261 = vpack.c.b16 %v2233, %v2231
  %v2262 = vpack.c.b16 %v2234, %v2232
  %v2263 = vpack.c.b16 %v2237, %v2235
  %v2264 = vpack.c.b16 %v2238, %v2236
  %v2265 = vpack.c.b16 %v2241, %v2239
  %v2266 = vpack.c.b16 %v2242, %v2240
  %v2267 = vpack.c.b16 %v2245, %v2243
  %v2268 = vpack.c.b16 %v2246, %v2244
  %v2269 = vpack.c.b16 %v2249, %v2247
  %v2270 = vpack.c.b16 %v2250, %v2248
  %v2271 = vpack.c.b16 %v2253, %v2251
  %v2272 = vpack.c.b16 %v2254, %v2252
  %v2273 = vpack.c.b16 %v2257, %v2255
  %v2274 = vpack.c.b16 %v2258, %v2256
  %2291 = vmatprep.subr.bf16.mxu0 %v2260
  %2292 = vmatpush1.bf16.msra.mxu0 %v2259
  %2293 = vmatprep.subr.bf16.mxu0 %v2262
  %2294 = vmatpush1.bf16.msra.mxu0 %v2261
  %2295 = vmatprep.subr.bf16.mxu0 %v2264
  %2296 = vmatpush1.bf16.msra.mxu0 %v2263
  %2297 = vmatprep.subr.bf16.mxu0 %v2266
  %2298 = vmatpush1.bf16.msra.mxu0 %v2265
  %2299 = vmatprep.subr.bf16.mxu0 %v2268
  %2300 = vmatpush1.bf16.msra.mxu0 %v2267
  %2301 = vmatprep.subr.bf16.mxu0 %v2270
  %2302 = vmatpush1.bf16.msra.mxu0 %v2269
  %2303 = vmatprep.subr.bf16.mxu0 %v2272
  %2304 = vmatpush1.bf16.msra.mxu0 %v2271
  %2305 = vmatprep.subr.bf16.mxu0 %v2274
  %2306 = vmatpush1.bf16.msra.mxu0 %v2273
  %2307 = vmatprep.subr.bf16.mxu0 0
  %2308 = vmatpush1.bf16.msra.mxu0 0
  %2309 = vmatprep.subr.bf16.mxu0 0
  %2310 = vmatpush1.bf16.msra.mxu0 0
  %2311 = vmatprep.subr.bf16.mxu0 0
  %2312 = vmatpush1.bf16.msra.mxu0 0
  %2313 = vmatprep.subr.bf16.mxu0 0
  %2314 = vmatpush1.bf16.msra.mxu0 0
  %2315 = vmatprep.subr.bf16.mxu0 0
  %2316 = vmatpush1.bf16.msra.mxu0 0
  %2317 = vmatprep.subr.bf16.mxu0 0
  %2318 = vmatpush1.bf16.msra.mxu0 0
  %2319 = vmatprep.subr.bf16.mxu0 0
  %2320 = vmatpush1.bf16.msra.mxu0 0
  %2321 = vmatprep.subr.bf16.mxu0 0
  %2322 = vmatpush1.bf16.msra.mxu0 0
  %2323 = vmatprep.mubr.bf16.mxu0 0
  %2324 = vmatmul.mubr.bf16.gmra.mrb[0].mxu0 %v2179
  %v2325 = vpop.f32.mrb[0].mxu0
  %v2326 = vadd.f32 %v2204, %v2325
  %v2327 = vpop.f32.mrb[0].mxu0
  %v2328 = vadd.f32 %v2208, %v2327
  %v2329 = vpop.f32.mrb[0].mxu0
  %v2330 = vadd.f32 %v2204, %v2329
  %v2331 = vpop.f32.mrb[0].mxu0
  %v2332 = vadd.f32 %v2208, %v2331
  %2333 = vmatprep.mubr.bf16.mxu0 0
  %2334 = vmatmul.mubr.bf16.gmra.mrb[0].mxu0 %v2180
  %v2335 = vpop.f32.mrb[0].mxu0
  %v2336 = vadd.f32 %v2204, %v2335
  %v2337 = vpop.f32.mrb[0].mxu0
  %v2338 = vadd.f32 %v2208, %v2337
  %v2339 = vpop.f32.mrb[0].mxu0
  %v2340 = vadd.f32 %v2204, %v2339
  %v2341 = vpop.f32.mrb[0].mxu0
  %v2342 = vadd.f32 %v2208, %v2341
  %2343 = vdwg.mxu0
  %v2344 = vmul.f32 %v2326, 0.5
  %v2345 = vmul.f32 %v2328, 0.5
  %v2346 = vmul.f32 %v2330, 0.5
  %v2347 = vmul.f32 %v2332, 0.5
  %v2348 = vmul.f32 %v2336, 0.5
  %v2349 = vmul.f32 %v2338, 0.5
  %v2350 = vmul.f32 %v2340, 0.5
  %v2351 = vmul.f32 %v2342, 0.5
  %v2352 = vmul.f32 %v2326, 0.044715
  %v2353 = vmul.f32 %v2328, 0.044715
  %v2354 = vmul.f32 %v2330, 0.044715
  %v2355 = vmul.f32 %v2332, 0.044715
  %v2356 = vmul.f32 %v2336, 0.044715
  %v2357 = vmul.f32 %v2338, 0.044715
  %v2358 = vmul.f32 %v2340, 0.044715
  %v2359 = vmul.f32 %v2342, 0.044715
  %v2360 = vmul.f32 %v2352, %v2326
  %v2361 = vmul.f32 %v2353, %v2328
  %v2362 = vmul.f32 %v2354, %v2330
  %v2363 = vmul.f32 %v2355, %v2332
  %v2364 = vmul.f32 %v2356, %v2336
  %v2365 = vmul.f32 %v2357, %v2338
  %v2366 = vmul.f32 %v2358, %v2340
  %v2367 = vmul.f32 %v2359, %v2342
  %v2368 = vmul.f32 %v2360, %v2326
  %v2369 = vmul.f32 %v2361, %v2328
  %v2370 = vmul.f32 %v2362, %v2330
  %v2371 = vmul.f32 %v2363, %v2332
  %v2372 = vmul.f32 %v2364, %v2336
  %v2373 = vmul.f32 %v2365, %v2338
  %v2374 = vmul.f32 %v2366, %v2340
  %v2375 = vmul.f32 %v2367, %v2342
  %v2376 = vadd.f32 %v2326, %v2368
  %v2377 = vadd.f32 %v2328, %v2369
  %v2378 = vadd.f32 %v2330, %v2370
  %v2379 = vadd.f32 %v2332, %v2371
  %v2380 = vadd.f32 %v2336, %v2372
  %v2381 = vadd.f32 %v2338, %v2373
  %v2382 = vadd.f32 %v2340, %v2374
  %v2383 = vadd.f32 %v2342, %v2375
  %v2384 = vmul.f32 %v2376, 0.7978846
  %v2385 = vmul.f32 %v2377, 0.7978846
  %v2386 = vmul.f32 %v2378, 0.7978846
  %v2387 = vmul.f32 %v2379, 0.7978846
  %v2388 = vmul.f32 %v2380, 0.7978846
  %v2389 = vmul.f32 %v2381, 0.7978846
  %v2390 = vmul.f32 %v2382, 0.7978846
  %v2391 = vmul.f32 %v2383, 0.7978846
  %v2392 = vtanh.pop %v2384
  %v2393 = vtanh.pop %v2385
  %v2394 = vtanh.pop %v2386
  %v2395 = vtanh.pop %v2387
  %v2396 = vtanh.pop %v2388
  %v2397 = vtanh.pop %v2389
  %v2398 = vtanh.pop %v2390
  %v2399 = vtanh.pop %v2391
  %v2400 = vadd.f32 %v2392, 1.0
  %v2401 = vadd.f32 %v2393, 1.0
  %v2402 = vadd.f32 %v2394, 1.0
  %v2403 = vadd.f32 %v2395, 1.0
  %v2404 = vadd.f32 %v2396, 1.0
  %v2405 = vadd.f32 %v2397, 1.0
  %v2406 = vadd.f32 %v2398, 1.0
  %v2407 = vadd.f32 %v2399, 1.0
  %v2408 = vmul.f32 %v2344, %v2400
  %v2409 = vmul.f32 %v2345, %v2401
  %v2410 = vmul.f32 %v2346, %v2402
  %v2411 = vmul.f32 %v2347, %v2403
  %v2412 = vmul.f32 %v2348, %v2404
  %v2413 = vmul.f32 %v2349, %v2405
  %v2414 = vmul.f32 %v2350, %v2406
  %v2415 = vmul.f32 %v2351, %v2407
  %v2416 = vpack.c.bf16 %v2410, %v2408
  %v2417 = vpack.c.bf16 %v2411, %v2409
  %v2418 = vpack.c.bf16 %v2414, %v2412
  %v2419 = vpack.c.bf16 %v2415, %v2413
  %s2420 = scalar_lea.vmem %s9, 128
  %v2421 = vld [vmem:[%s2420] sm:$0xf]
  %v2422 = vld [vmem:[%s2420 + $0x4] sm:$0xf]
  %v2423 = vld [vmem:[%s2420 + $0x8] sm:$0xf]
  %v2424 = vld [vmem:[%s2420 + $0xc] sm:$0xf]
  %v2425 = vld [vmem:[%s2420 + $0x10] sm:$0xf]
  %v2426 = vld [vmem:[%s2420 + $0x14] sm:$0xf]
  %v2427 = vld [vmem:[%s2420 + $0x18] sm:$0xf]
  %v2428 = vld [vmem:[%s2420 + $0x1c] sm:$0xf]
  %v2429 = vld [vmem:[%s2420 + $0x20] sm:$0xf]
  %v2430 = vld [vmem:[%s2420 + $0x24] sm:$0xf]
  %v2431 = vld [vmem:[%s2420 + $0x28] sm:$0xf]
  %v2432 = vld [vmem:[%s2420 + $0x2c] sm:$0xf]
  %v2433 = vld [vmem:[%s2420 + $0x30] sm:$0xf]
  %v2434 = vld [vmem:[%s2420 + $0x34] sm:$0xf]
  %v2435 = vld [vmem:[%s2420 + $0x38] sm:$0xf]
  %v2436 = vld [vmem:[%s2420 + $0x3c] sm:$0xf]
  %v2437 = vld [vmem:[%s2420 + $0x40] sm:$0xf]
  %v2438 = vld [vmem:[%s2420 + $0x44] sm:$0xf]
  %v2439 = vld [vmem:[%s2420 + $0x48] sm:$0xf]
  %v2440 = vld [vmem:[%s2420 + $0x4c] sm:$0xf]
  %v2441 = vld [vmem:[%s2420 + $0x50] sm:$0xf]
  %v2442 = vld [vmem:[%s2420 + $0x54] sm:$0xf]
  %v2443 = vld [vmem:[%s2420 + $0x58] sm:$0xf]
  %v2444 = vld [vmem:[%s2420 + $0x5c] sm:$0xf]
  %v2445 = vld [vmem:[%s2420 + $0x60] sm:$0xf]
  %v2446 = vld [vmem:[%s2420 + $0x64] sm:$0xf]
  %v2447 = vld [vmem:[%s2420 + $0x68] sm:$0xf]
  %v2448 = vld [vmem:[%s2420 + $0x6c] sm:$0xf]
  %v2449 = vld [vmem:[%s2420 + $0x70] sm:$0xf]
  %v2450 = vld [vmem:[%s2420 + $0x74] sm:$0xf]
  %v2451 = vld [vmem:[%s2420 + $0x78] sm:$0xf]
  %v2452 = vld [vmem:[%s2420 + $0x7c] sm:$0xf]
  %v2453 = vlaneseq
  %v2454 = vshrl.u32 %v2453, 7
  %v2455 = vsub.s32 3, %v2454
  %v2456 = vrot.slane %v64, %v2455
  %v2489 = vunpack.c.l.b16 %v2421
  %v2490 = vunpack.c.l.b16 %v2422
  %v2491 = vunpack.c.l.b16 %v2423
  %v2492 = vunpack.c.l.b16 %v2424
  %v2493 = vunpack.c.l.b16 %v2425
  %v2494 = vunpack.c.l.b16 %v2426
  %v2495 = vunpack.c.l.b16 %v2427
  %v2496 = vunpack.c.l.b16 %v2428
  %v2497 = vunpack.c.l.b16 %v2429
  %v2498 = vunpack.c.l.b16 %v2430
  %v2499 = vunpack.c.l.b16 %v2431
  %v2500 = vunpack.c.l.b16 %v2432
  %v2501 = vunpack.c.l.b16 %v2433
  %v2502 = vunpack.c.l.b16 %v2434
  %v2503 = vunpack.c.l.b16 %v2435
  %v2504 = vunpack.c.l.b16 %v2436
  %v2505 = vunpack.c.l.b16 %v2437
  %v2506 = vunpack.c.l.b16 %v2438
  %v2507 = vunpack.c.l.b16 %v2439
  %v2508 = vunpack.c.l.b16 %v2440
  %v2509 = vunpack.c.l.b16 %v2441
  %v2510 = vunpack.c.l.b16 %v2442
  %v2511 = vunpack.c.l.b16 %v2443
  %v2512 = vunpack.c.l.b16 %v2444
  %v2513 = vunpack.c.l.b16 %v2445
  %v2514 = vunpack.c.l.b16 %v2446
  %v2515 = vunpack.c.l.b16 %v2447
  %v2516 = vunpack.c.l.b16 %v2448
  %v2517 = vunpack.c.l.b16 %v2449
  %v2518 = vunpack.c.l.b16 %v2450
  %v2519 = vunpack.c.l.b16 %v2451
  %v2520 = vunpack.c.l.b16 %v2452
  %v2521 = vpack.c.b16 %v2490, %v2489
  %v2522 = vpack.c.b16 %v2492, %v2491
  %v2523 = vpack.c.b16 %v2494, %v2493
  %v2524 = vpack.c.b16 %v2496, %v2495
  %v2525 = vpack.c.b16 %v2498, %v2497
  %v2526 = vpack.c.b16 %v2500, %v2499
  %v2527 = vpack.c.b16 %v2502, %v2501
  %v2528 = vpack.c.b16 %v2504, %v2503
  %v2529 = vpack.c.b16 %v2506, %v2505
  %v2530 = vpack.c.b16 %v2508, %v2507
  %v2531 = vpack.c.b16 %v2510, %v2509
  %v2532 = vpack.c.b16 %v2512, %v2511
  %v2533 = vpack.c.b16 %v2514, %v2513
  %v2534 = vpack.c.b16 %v2516, %v2515
  %v2535 = vpack.c.b16 %v2518, %v2517
  %v2536 = vpack.c.b16 %v2520, %v2519
  %2553 = vmatprep.subr.bf16.mxu0 0
  %2554 = vmatpush1.bf16.msra.mxu0 %v2521
  %2555 = vmatprep.subr.bf16.mxu0 0
  %2556 = vmatpush1.bf16.msra.mxu0 %v2522
  %2557 = vmatprep.subr.bf16.mxu0 0
  %2558 = vmatpush1.bf16.msra.mxu0 %v2523
  %2559 = vmatprep.subr.bf16.mxu0 0
  %2560 = vmatpush1.bf16.msra.mxu0 %v2524
  %2561 = vmatprep.subr.bf16.mxu0 0
  %2562 = vmatpush1.bf16.msra.mxu0 %v2525
  %2563 = vmatprep.subr.bf16.mxu0 0
  %2564 = vmatpush1.bf16.msra.mxu0 %v2526
  %2565 = vmatprep.subr.bf16.mxu0 0
  %2566 = vmatpush1.bf16.msra.mxu0 %v2527
  %2567 = vmatprep.subr.bf16.mxu0 0
  %2568 = vmatpush1.bf16.msra.mxu0 %v2528
  %2569 = vmatprep.subr.bf16.mxu0 0
  %2570 = vmatpush1.bf16.msra.mxu0 %v2529
  %2571 = vmatprep.subr.bf16.mxu0 0
  %2572 = vmatpush1.bf16.msra.mxu0 %v2530
  %2573 = vmatprep.subr.bf16.mxu0 0
  %2574 = vmatpush1.bf16.msra.mxu0 %v2531
  %2575 = vmatprep.subr.bf16.mxu0 0
  %2576 = vmatpush1.bf16.msra.mxu0 %v2532
  %2577 = vmatprep.subr.bf16.mxu0 0
  %2578 = vmatpush1.bf16.msra.mxu0 %v2533
  %2579 = vmatprep.subr.bf16.mxu0 0
  %2580 = vmatpush1.bf16.msra.mxu0 %v2534
  %2581 = vmatprep.subr.bf16.mxu0 0
  %2582 = vmatpush1.bf16.msra.mxu0 %v2535
  %2583 = vmatprep.subr.bf16.mxu0 0
  %2584 = vmatpush1.bf16.msra.mxu0 %v2536
  %2585 = vmatprep.mubr.bf16.mxu0 %v2417
  %2586 = vmatmul.mubr.bf16.gmra.mrb[0].mxu0 %v2416
  %v2587 = vpop.f32.mrb[0].mxu0
  %v2588 = vadd.f32 %v2456, %v2587
  %v2589 = vpop.f32.mrb[0].mxu0
  %v2590 = vpop.f32.mrb[0].mxu0
  %v2591 = vadd.f32 %v2456, %v2590
  %v2592 = vpop.f32.mrb[0].mxu0
  %2593 = vmatprep.mubr.bf16.mxu0 %v2419
  %2594 = vmatmul.mubr.bf16.gmra.mrb[0].mxu0 %v2418
  %v2595 = vpop.f32.mrb[0].mxu0
  %v2596 = vadd.f32 %v2456, %v2595
  %v2597 = vpop.f32.mrb[0].mxu0
  %v2598 = vpop.f32.mrb[0].mxu0
  %v2599 = vadd.f32 %v2456, %v2598
  %v2600 = vpop.f32.mrb[0].mxu0
  %2601 = vdwg.mxu0
  %v2602 = vadd.f32 %v2588, %v2175
  %v2603 = vadd.f32 %v2591, %v2176
  %v2604 = vadd.f32 %v2596, %v2177
  %v2605 = vadd.f32 %v2599, %v2178
  %2606 = vadd.xlane.f32.xlu0 %v2602
  %v2607 = vpop.xlane.xlu0 %2606
  %2608 = vadd.xlane.f32.xlu0 %v2603
  %v2609 = vpop.xlane.xlu0 %2608
  %2610 = vadd.xlane.f32.xlu0 %v2604
  %v2611 = vpop.xlane.xlu0 %2610
  %2612 = vadd.xlane.f32.xlu0 %v2605
  %v2613 = vpop.xlane.xlu0 %2612
  %v2614 = vmul.f32 %v2607, %v73
  %v2615 = vmul.f32 %v2609, %v73
  %v2616 = vmul.f32 %v2611, %v73
  %v2617 = vmul.f32 %v2613, %v73
  %v2618 = vsub.f32 %v2602, %v2614
  %v2619 = vsub.f32 %v2603, %v2615
  %v2620 = vsub.f32 %v2604, %v2616
  %v2621 = vsub.f32 %v2605, %v2617
  %v2622 = vmul.f32 %v2618, %v2618
  %v2623 = vmul.f32 %v2619, %v2619
  %v2624 = vmul.f32 %v2620, %v2620
  %v2625 = vmul.f32 %v2621, %v2621
  %2626 = vadd.xlane.f32.xlu0 %v2622
  %v2627 = vpop.xlane.xlu0 %2626
  %2628 = vadd.xlane.f32.xlu0 %v2623
  %v2629 = vpop.xlane.xlu0 %2628
  %2630 = vadd.xlane.f32.xlu0 %v2624
  %v2631 = vpop.xlane.xlu0 %2630
  %2632 = vadd.xlane.f32.xlu0 %v2625
  %v2633 = vpop.xlane.xlu0 %2632
  %v2634 = vmul.f32 %v2627, %v73
  %v2635 = vmul.f32 %v2629, %v73
  %v2636 = vmul.f32 %v2631, %v73
  %v2637 = vmul.f32 %v2633, %v73
  %v2638 = vadd.f32 %v2634, 1e-12
  %v2639 = vadd.f32 %v2635, 1e-12
  %v2640 = vadd.f32 %v2636, 1e-12
  %v2641 = vadd.f32 %v2637, 1e-12
  %v2642 = vrsqrt.pop %v2638
  %v2643 = vrsqrt.pop %v2639
  %v2644 = vrsqrt.pop %v2640
  %v2645 = vrsqrt.pop %v2641
  %v2646 = vmul.f32 %v2618, %v2642
  %v2647 = vmul.f32 %v2619, %v2643
  %v2648 = vmul.f32 %v2620, %v2644
  %v2649 = vmul.f32 %v2621, %v2645
  %v2650 = vlaneseq
  %v2651 = vshrl.u32 %v2650, 7
  %v2652 = vsub.s32 4, %v2651
  %v2653 = vrot.slane %v64, %v2652
  %v2654 = vmul.f32 %v2646, %v2653
  %v2655 = vmul.f32 %v2647, %v2653
  %v2656 = vmul.f32 %v2648, %v2653
  %v2657 = vmul.f32 %v2649, %v2653
  %v2658 = vlaneseq
  %v2659 = vshrl.u32 %v2658, 7
  %v2660 = vsub.s32 5, %v2659
  %v2661 = vrot.slane %v64, %v2660
  %v2662 = vadd.f32 %v2654, %v2661
  %v2663 = vadd.f32 %v2655, %v2661
  %v2664 = vadd.f32 %v2656, %v2661
  %v2665 = vadd.f32 %v2657, %v2661
  %v2666 = vpack.c.bf16 %v2663, %v2662
  %v2667 = vpack.c.bf16 %v2665, %v2664
  %v2668 = vld [vmem:[%s10] sm:$0xf]
  %v2669 = vld [vmem:[%s10 + $0x4] sm:$0xf]
  %v2670 = vld [vmem:[%s10 + $0x8] sm:$0xf]
  %v2671 = vld [vmem:[%s10 + $0xc] sm:$0xf]
  %v2672 = vld [vmem:[%s10 + $0x10] sm:$0xf]
  %v2673 = vld [vmem:[%s10 + $0x14] sm:$0xf]
  %v2674 = vld [vmem:[%s10 + $0x18] sm:$0xf]
  %v2675 = vld [vmem:[%s10 + $0x1c] sm:$0xf]
  %v2676 = vld [vmem:[%s10 + $0x20] sm:$0xf]
  %v2677 = vld [vmem:[%s10 + $0x24] sm:$0xf]
  %v2678 = vld [vmem:[%s10 + $0x28] sm:$0xf]
  %v2679 = vld [vmem:[%s10 + $0x2c] sm:$0xf]
  %v2680 = vld [vmem:[%s10 + $0x30] sm:$0xf]
  %v2681 = vld [vmem:[%s10 + $0x34] sm:$0xf]
  %v2682 = vld [vmem:[%s10 + $0x38] sm:$0xf]
  %v2683 = vld [vmem:[%s10 + $0x3c] sm:$0xf]
  %v2684 = vlaneseq
  %v2685 = vshrl.u32 %v2684, 7
  %v2686 = vsub.s32 6, %v2685
  %v2687 = vrot.slane %v64, %v2686
  %v2704 = vunpack.c.l.b16 %v2668
  %v2705 = vunpack.c.l.b16 %v2669
  %v2706 = vunpack.c.l.b16 %v2670
  %v2707 = vunpack.c.l.b16 %v2671
  %v2708 = vunpack.c.l.b16 %v2672
  %v2709 = vunpack.c.l.b16 %v2673
  %v2710 = vunpack.c.l.b16 %v2674
  %v2711 = vunpack.c.l.b16 %v2675
  %v2712 = vunpack.c.l.b16 %v2676
  %v2713 = vunpack.c.l.b16 %v2677
  %v2714 = vunpack.c.l.b16 %v2678
  %v2715 = vunpack.c.l.b16 %v2679
  %v2716 = vunpack.c.l.b16 %v2680
  %v2717 = vunpack.c.l.b16 %v2681
  %v2718 = vunpack.c.l.b16 %v2682
  %v2719 = vunpack.c.l.b16 %v2683
  %v2720 = vpack.c.b16 %v2705, %v2704
  %v2721 = vpack.c.b16 %v2707, %v2706
  %v2722 = vpack.c.b16 %v2709, %v2708
  %v2723 = vpack.c.b16 %v2711, %v2710
  %v2724 = vpack.c.b16 %v2713, %v2712
  %v2725 = vpack.c.b16 %v2715, %v2714
  %v2726 = vpack.c.b16 %v2717, %v2716
  %v2727 = vpack.c.b16 %v2719, %v2718
  %2736 = vmatprep.subr.bf16.mxu0 0
  %2737 = vmatpush1.bf16.msra.mxu0 %v2720
  %2738 = vmatprep.subr.bf16.mxu0 0
  %2739 = vmatpush1.bf16.msra.mxu0 %v2721
  %2740 = vmatprep.subr.bf16.mxu0 0
  %2741 = vmatpush1.bf16.msra.mxu0 %v2722
  %2742 = vmatprep.subr.bf16.mxu0 0
  %2743 = vmatpush1.bf16.msra.mxu0 %v2723
  %2744 = vmatprep.subr.bf16.mxu0 0
  %2745 = vmatpush1.bf16.msra.mxu0 %v2724
  %2746 = vmatprep.subr.bf16.mxu0 0
  %2747 = vmatpush1.bf16.msra.mxu0 %v2725
  %2748 = vmatprep.subr.bf16.mxu0 0
  %2749 = vmatpush1.bf16.msra.mxu0 %v2726
  %2750 = vmatprep.subr.bf16.mxu0 0
  %2751 = vmatpush1.bf16.msra.mxu0 %v2727
  %2752 = vmatprep.subr.bf16.mxu0 0
  %2753 = vmatpush1.bf16.msra.mxu0 0
  %2754 = vmatprep.subr.bf16.mxu0 0
  %2755 = vmatpush1.bf16.msra.mxu0 0
  %2756 = vmatprep.subr.bf16.mxu0 0
  %2757 = vmatpush1.bf16.msra.mxu0 0
  %2758 = vmatprep.subr.bf16.mxu0 0
  %2759 = vmatpush1.bf16.msra.mxu0 0
  %2760 = vmatprep.subr.bf16.mxu0 0
  %2761 = vmatpush1.bf16.msra.mxu0 0
  %2762 = vmatprep.subr.bf16.mxu0 0
  %2763 = vmatpush1.bf16.msra.mxu0 0
  %2764 = vmatprep.subr.bf16.mxu0 0
  %2765 = vmatpush1.bf16.msra.mxu0 0
  %2766 = vmatprep.subr.bf16.mxu0 0
  %2767 = vmatpush1.bf16.msra.mxu0 0
  %2768 = vmatprep.mubr.bf16.mxu0 0
  %2769 = vmatmul.mubr.bf16.gmra.mrb[0].mxu0 %v2666
  %v2770 = vpop.f32.mrb[0].mxu0
  %v2771 = vadd.f32 %v2687, %v2770
  %v2772 = vpop.f32.mrb[0].mxu0
  %v2773 = vpop.f32.mrb[0].mxu0
  %v2774 = vadd.f32 %v2687, %v2773
  %v2775 = vpop.f32.mrb[0].mxu0
  %2776 = vmatprep.mubr.bf16.mxu0 0
  %2777 = vmatmul.mubr.bf16.gmra.mrb[0].mxu0 %v2667
  %v2778 = vpop.f32.mrb[0].mxu0
  %v2779 = vadd.f32 %v2687, %v2778
  %v2780 = vpop.f32.mrb[0].mxu0
  %v2781 = vpop.f32.mrb[0].mxu0
  %v2782 = vadd.f32 %v2687, %v2781
  %v2783 = vpop.f32.mrb[0].mxu0
  %2784 = vdwg.mxu0
  %2785 = vst [vmem:[%s11] sm:$0xff] %v2771
  %2786 = vst [vmem:[%s11 + $0x8] sm:$0xff] %v2774
  %2787 = vst [vmem:[%s11 + $0x10] sm:$0xff] %v2779
  %2788 = vst [vmem:[%s11 + $0x18] sm:$0xff] %v2782
  // Predicated region
  $region46: #{theseus_forward.1} parent=0 // pred_check
    _
  $region47: #{theseus_forward.1} parent=0 // pred_check_branch
    %2790 = sbr.rel (0) target = $region49
  $region48: #{theseus_forward.1} parent=0 // pred_region
    _
  $region49: #{theseus_forward.1} parent=0 // pred_fallthru
    _
  // Predicated region
  $region50: #{theseus_forward.1} parent=0 // pred_check
    _
  $region51: #{theseus_forward.1} parent=0 // pred_check_branch
    %2792 = sbr.rel (0) target = $region53
  $region52: #{theseus_forward.1} parent=0 // pred_region
    _
  $region53: #{theseus_forward.1} parent=0 // pred_fallthru
    _

</llo_original>
